<compile_context>
chip_gen: v6e
topology: v6e:2x2x1
jax: 0.10.0
libtpu: 0.0.40
codegen_flags: <defaults>
</compile_context>

<pallas_src>
import functools

import jax
import jax.numpy as jnp
from jax.experimental import pallas as pl
from jax.experimental.pallas import tpu as pltpu

EPS = 1e-5
_W_OFF = 8  # sublane-aligned column offset of out1 inside the VMEM halo buffer


# ------------------------------- Pallas kernel ------------------------------ #

def _basic_block_kernel(xph_ref, w1_ref, b1_ref, w2_ref, shift2_ref, *rest,
                        stride, Ho, Wo, Hph, Cin, planes, has_projection):
    """Fused BasicBlock for one image (one grid step along the batch axis)."""
    if has_projection:
        wsc_ref, out_ref, out1_buf = rest
    else:
        out_ref, out1_buf = rest
    s = stride
    M = Ho * Wo

    def in_tap(dh, dw):
        # (dh, dw) tap of the stride-s / pad-1 3x3 conv over the original
        # input, read as a contiguous slab of the phase-decomposed input.
        p = (dh % s) * s + (dw % s)
        r0 = p * Hph + dh // s
        c0 = dw // s
        return xph_ref[0, r0:r0 + Ho, c0:c0 + Wo, :]          # (Ho, Wo, Cin)

    # ---- conv1 (3x3, stride s) + folded BN1 + ReLU: tap accumulation ------- #
    acc1 = jnp.zeros((M, planes), jnp.float32)
    for dh in range(3):
        for dw in range(3):
            acc1 = acc1 + jnp.dot(in_tap(dh, dw).reshape(M, Cin),
                                  w1_ref[dh * 3 + dw],
                                  preferred_element_type=jnp.float32)
    out1 = jnp.maximum(acc1 + b1_ref[...], 0.0)               # (M, planes)

    # ---- stage out1 in VMEM with a zero halo for conv2 (no HBM round-trip) - #
    out1_buf[...] = jnp.zeros_like(out1_buf)
    out1_buf[1:Ho + 1, _W_OFF:_W_OFF + Wo, :] = out1.reshape(Ho, Wo, planes)

    # ---- conv2 (3x3, stride 1) + folded BN2: tap accumulation -------------- #
    acc2 = jnp.zeros((M, planes), jnp.float32)
    for dh in range(3):
        for dw in range(3):
            c0 = _W_OFF - 1 + dw
            slab = out1_buf[dh:dh + Ho, c0:c0 + Wo, :]        # (Ho, Wo, planes)
            acc2 = acc2 + jnp.dot(slab.reshape(M, planes),
                                  w2_ref[dh * 3 + dw],
                                  preferred_element_type=jnp.float32)

    # ---- shortcut: the (1,1) tap slab IS the stride-subsampled input x ----- #
    sc_in = in_tap(1, 1).reshape(M, Cin)
    if has_projection:
        acc2 = acc2 + jnp.dot(sc_in, wsc_ref[...],
                              preferred_element_type=jnp.float32)
    else:
        acc2 = acc2 + sc_in   # identity shortcut: Cin == planes

    out_ref[0] = jnp.maximum(acc2 + shift2_ref[...], 0.0).astype(out_ref.dtype)


# ------------------------------ JAX glue code ------------------------------- #

def _phase_decompose(x_nhwc, stride):
    """Zero-pad spatially by 1 and split into stride^2 row/col phases.

    Returns (xph, Ho, Wo, Hph) where xph has shape (N, s*s*Hph, Wph, C) and the
    (dh, dw) tap slab of a 3x3/stride-s/pad-1 conv is the contiguous slice
        xph[n, p*Hph + dh//s : p*Hph + dh//s + Ho, dw//s : dw//s + Wo, :]
    with p = (dh % s) * s + (dw % s).  Total footprint is ~1x the input
    (vs. 9x for host-side im2col).
    """
    N, H, W, C = x_nhwc.shape
    s = stride
    xp = jnp.pad(x_nhwc, ((0, 0), (1, 1), (1, 1), (0, 0)))    # (N, H+2, W+2, C)
    Ho = (H - 1) // s + 1
    Wo = (W - 1) // s + 1
    if s == 1:
        return xp, Ho, Wo, H + 2
    Hp, Wp = H + 2, W + 2
    Hph = -(-Hp // s)
    Wph = -(-Wp // s)
    phases = []
    for ph in range(s):
        for pw in range(s):
            sub = xp[:, ph::s, pw::s, :]
            sub = jnp.pad(sub, ((0, 0), (0, Hph - sub.shape[1]),
                                (0, Wph - sub.shape[2]), (0, 0)))
            phases.append(sub)
    return jnp.concatenate(phases, axis=1), Ho, Wo, Hph        # (N, s*s*Hph, Wph, C)


def bn_affine(bn_params):
    """Fold eval-mode BN into per-channel (scale, shift)."""
    gamma, beta, mean, var = bn_params
    scale = gamma / jnp.sqrt(var + EPS)
    shift = beta - mean * scale
    return scale, shift.reshape(1, -1)


@functools.partial(jax.jit, static_argnames=("stride",))
def basic_block_forward(x_nchw, params, stride):
    x = jnp.transpose(x_nchw, (0, 2, 3, 1))                   # NCHW -> NHWC
    N, H, W, Cin = x.shape
    planes = params["conv1_w"].shape[0]
    has_projection = (stride != 1) or (Cin != planes)

    scale1, b1 = bn_affine(params["bn1"])
    scale2, b2 = bn_affine(params["bn2"])
    # Fold BN scale into conv weights; layout (tap=dh*3+dw, Cin, Cout).
    w1 = jnp.transpose(params["conv1_w"], (2, 3, 1, 0)).reshape(9, Cin, planes) * scale1
    w2 = jnp.transpose(params["conv2_w"], (2, 3, 1, 0)).reshape(9, planes, planes) * scale2

    xph, Ho, Wo, Hph = _phase_decompose(x, stride)
    M = Ho * Wo

    args = [xph, w1, b1, w2]
    in_specs = [
        pl.BlockSpec((1,) + xph.shape[1:], lambda n: (n, 0, 0, 0)),
        pl.BlockSpec(w1.shape, lambda n: (0, 0, 0)),
        pl.BlockSpec(b1.shape, lambda n: (0, 0)),
        pl.BlockSpec(w2.shape, lambda n: (0, 0, 0)),
    ]
    if has_projection:
        scale_sc, b_sc = bn_affine(params["bn_sc"])
        wsc = params["sc_w"][:, :, 0, 0].T * scale_sc          # (Cin, planes)
        shift2 = b2 + b_sc
        args += [shift2, wsc]
        in_specs += [pl.BlockSpec(shift2.shape, lambda n: (0, 0)),
                     pl.BlockSpec(wsc.shape, lambda n: (0, 0))]
        sc_flops = 2 * M * Cin * planes
    else:
        assert Cin == planes
        shift2 = b2
        args += [shift2]
        in_specs += [pl.BlockSpec(shift2.shape, lambda n: (0, 0))]
        sc_flops = 0

    kernel = functools.partial(
        _basic_block_kernel, stride=stride, Ho=Ho, Wo=Wo, Hph=Hph,
        Cin=Cin, planes=planes, has_projection=has_projection)

    flops = N * (18 * M * Cin * planes + 18 * M * planes * planes + sc_flops)
    # x / out streamed once per image; small weight/shift tensors re-fetched
    # per batch grid step (advisory estimate only).
    weight_bytes = 4 * sum(int(a.size) for a in args[1:])
    bytes_accessed = int(4 * (xph.size + N * M * planes) + N * weight_bytes)

    out = pl.pallas_call(
        kernel,
        out_shape=jax.ShapeDtypeStruct((N, M, planes), jnp.float32),
        grid=(N,),
        in_specs=in_specs,
        out_specs=pl.BlockSpec((1, M, planes), lambda n: (n, 0, 0)),
        scratch_shapes=[
            # out1 halo buffer: 1-row halo in H, sublane-aligned column offset
            # (_W_OFF) so the interior store is unmasked.
            pltpu.VMEM((Ho + 2, _W_OFF + Wo + 8, planes), jnp.float32),
        ],
        compiler_params=pltpu.CompilerParams(
            dimension_semantics=("parallel",),
            # Well under the 48 MiB guideline for v7x (64 MiB physical) while
            # raising v5e's 16 MiB scoped default; actual use here is << 2 MiB.
            vmem_limit_bytes=32 * 1024 * 1024,
        ),
        cost_estimate=pl.CostEstimate(
            flops=flops, transcendentals=0, bytes_accessed=bytes_accessed),
    )(*args)

    out = out.reshape(N, Ho, Wo, planes)
    return jnp.transpose(out, (0, 3, 1, 2))                   # NHWC -> NCHW


# ----------------------------- Pure-JAX reference --------------------------- #

def ref_forward(x_nchw, params, stride):
    def conv(x, w, s, pad):
        return jax.lax.conv_general_dilated(
            x, w, (s, s), [(pad, pad), (pad, pad)],
            dimension_numbers=("NCHW", "OIHW", "NCHW"))

    def bn(x, p):
        g, b, m, v = p
        return ((x - m[None, :, None, None])
                / jnp.sqrt(v[None, :, None, None] + EPS)
                * g[None, :, None, None] + b[None, :, None, None])

    out = jax.nn.relu(bn(conv(x_nchw, params["conv1_w"], stride, 1), params["bn1"]))
    out = bn(conv(out, params["conv2_w"], 1, 1), params["bn2"])
    if stride != 1 or x_nchw.shape[1] != params["conv1_w"].shape[0]:
        sc = bn(conv(x_nchw, params["sc_w"], stride, 0), params["bn_sc"])
    else:
        sc = x_nchw
    return jax.nn.relu(out + sc)


# ----------------------------------- main ------------------------------------ #

def init_params(key, in_planes, planes, stride):
    ks = jax.random.split(key, 16)

    def bn_init(k):
        k1, k2, k3 = jax.random.split(k, 3)
        gamma = 1.0 + 0.1 * jax.random.normal(k1, (planes,), jnp.float32)
        beta = 0.1 * jax.random.normal(k2, (planes,), jnp.float32)
        mean = 0.1 * jax.random.normal(k3, (planes,), jnp.float32)
        var = jnp.ones((planes,), jnp.float32) * 0.9
        return (gamma, beta, mean, var)

    params = {
        "conv1_w": 0.2 * jax.random.normal(ks[0], (planes, in_planes, 3, 3), jnp.float32),
        "conv2_w": 0.2 * jax.random.normal(ks[1], (planes, planes, 3, 3), jnp.float32),
        "bn1": bn_init(ks[2]),
        "bn2": bn_init(ks[3]),
    }
    if stride != 1 or in_planes != planes:
        params["sc_w"] = 0.2 * jax.random.normal(ks[4], (planes, in_planes, 1, 1), jnp.float32)
        params["bn_sc"] = bn_init(ks[5])
    return params


if __name__ == "__main__":
    key = jax.random.PRNGKey(0)

    # (batch, in_planes, planes, stride, H, W)
    configs = [
        (2, 4, 8, 2, 16, 16),   # projection shortcut (1x1 conv + BN), fused in-kernel
        (2, 8, 8, 1, 16, 16),   # identity shortcut, residual added in-kernel
    ]

    for cfg_i, (batch, in_planes, planes, stride, H, W) in enumerate(configs):
        kx, kp = jax.random.split(jax.random.fold_in(key, cfg_i))
        x = jax.random.normal(kx, (batch, in_planes, H, W), jnp.float32)  # NCHW
        params = init_params(kp, in_planes, planes, stride)

        out = jax.block_until_ready(basic_block_forward(x, params, stride))
        ref = jax.block_until_ready(ref_forward(x, params, stride))

        assert out.shape == ref.shape, (out.shape, ref.shape)
        err = float(jnp.max(jnp.abs(out - ref)))
        assert jnp.allclose(out, ref, atol=2e-4, rtol=2e-4), err

    print("KERNEL_OK")
</pallas_src>

<mosaic_0001>
module attributes {stable_mosaic.version = 11 : i64} {
  func.func @_basic_block_kernel(%arg0: i32, %arg1: memref<1x36x9x4xf32, #tpu.memory_space<vmem>>, %arg2: memref<9x4x8xf32, #tpu.memory_space<vmem>>, %arg3: memref<1x8xf32, #tpu.memory_space<vmem>>, %arg4: memref<9x8x8xf32, #tpu.memory_space<vmem>>, %arg5: memref<1x8xf32, #tpu.memory_space<vmem>>, %arg6: memref<4x8xf32, #tpu.memory_space<vmem>>, %arg7: memref<1x64x8xf32, #tpu.memory_space<vmem>>, %arg8: memref<10x24x8xf32, #tpu.memory_space<vmem>>) attributes {dimension_semantics = [#tpu.dimension_semantics<parallel>], iteration_bounds = array<i64: 2>, scalar_prefetch = 0 : i64, scratch_operands = 1 : i64, tpu.core_type = #tpu.core_type<tc>, window_params = [{transform_indices = @transform_0, window_bounds = array<i64: 1, 36, 9, 4>}, {pipeline_mode = #tpu.pipeline_mode<synchronous>, transform_indices = @transform_1, window_bounds = array<i64: 9, 4, 8>}, {pipeline_mode = #tpu.pipeline_mode<synchronous>, transform_indices = @transform_2, window_bounds = array<i64: 1, 8>}, {pipeline_mode = #tpu.pipeline_mode<synchronous>, transform_indices = @transform_3, window_bounds = array<i64: 9, 8, 8>}, {pipeline_mode = #tpu.pipeline_mode<synchronous>, transform_indices = @transform_4, window_bounds = array<i64: 1, 8>}, {pipeline_mode = #tpu.pipeline_mode<synchronous>, transform_indices = @transform_5, window_bounds = array<i64: 4, 8>}, {transform_indices = @transform_6, window_bounds = array<i64: 1, 64, 8>}]} {
    %cst = arith.constant 0.000000e+00 : f32
    %0 = vector.broadcast %cst : f32 to vector<64x8xf32>
    %c0 = arith.constant 0 : index
    %c0_0 = arith.constant 0 : index
    %c0_1 = arith.constant 0 : index
    %c0_2 = arith.constant 0 : index
    %1 = vector.load %arg1[%c0, %c0_0, %c0_1, %c0_2] : memref<1x36x9x4xf32, #tpu.memory_space<vmem>>, vector<1x8x8x4xf32>
    %2 = vector.shape_cast %1 : vector<1x8x8x4xf32> to vector<8x8x4xf32>
    %3 = vector.shape_cast %2 : vector<8x8x4xf32> to vector<64x4xf32>
    %c0_3 = arith.constant 0 : index
    %c0_4 = arith.constant 0 : index
    %c0_5 = arith.constant 0 : index
    %4 = vector.load %arg2[%c0_3, %c0_4, %c0_5] : memref<9x4x8xf32, #tpu.memory_space<vmem>>, vector<1x4x8xf32>
    %5 = vector.shape_cast %4 : vector<1x4x8xf32> to vector<4x8xf32>
    %cst_6 = arith.constant dense<0.000000e+00> : vector<64x8xf32>
    %6 = tpu.matmul %3, %5, %cst_6 {dimension_numbers = #tpu.dot_dimension_numbers<[1], [0], [0], [1], [0, 0, 1, 1], [], []>} : vector<64x4xf32>, vector<4x8xf32>, vector<64x8xf32> -> vector<64x8xf32>
    %7 = arith.addf %0, %6 : vector<64x8xf32>
    %c0_7 = arith.constant 0 : index
    %c9 = arith.constant 9 : index
    %c0_8 = arith.constant 0 : index
    %c0_9 = arith.constant 0 : index
    %8 = vector.load %arg1[%c0_7, %c9, %c0_8, %c0_9] : memref<1x36x9x4xf32, #tpu.memory_space<vmem>>, vector<1x8x8x4xf32>
    %9 = vector.shape_cast %8 : vector<1x8x8x4xf32> to vector<8x8x4xf32>
    %10 = vector.shape_cast %9 : vector<8x8x4xf32> to vector<64x4xf32>
    %c1 = arith.constant 1 : index
    %c0_10 = arith.constant 0 : index
    %c0_11 = arith.constant 0 : index
    %11 = vector.load %arg2[%c1, %c0_10, %c0_11] : memref<9x4x8xf32, #tpu.memory_space<vmem>>, vector<1x4x8xf32>
    %12 = vector.shape_cast %11 : vector<1x4x8xf32> to vector<4x8xf32>
    %cst_12 = arith.constant dense<0.000000e+00> : vector<64x8xf32>
    %13 = tpu.matmul %10, %12, %cst_12 {dimension_numbers = #tpu.dot_dimension_numbers<[1], [0], [0], [1], [0, 0, 1, 1], [], []>} : vector<64x4xf32>, vector<4x8xf32>, vector<64x8xf32> -> vector<64x8xf32>
    %14 = arith.addf %7, %13 : vector<64x8xf32>
    %c0_13 = arith.constant 0 : index
    %c0_14 = arith.constant 0 : index
    %c1_15 = arith.constant 1 : index
    %c0_16 = arith.constant 0 : index
    %15 = vector.load %arg1[%c0_13, %c0_14, %c1_15, %c0_16] : memref<1x36x9x4xf32, #tpu.memory_space<vmem>>, vector<1x8x8x4xf32>
    %16 = vector.shape_cast %15 : vector<1x8x8x4xf32> to vector<8x8x4xf32>
    %17 = vector.shape_cast %16 : vector<8x8x4xf32> to vector<64x4xf32>
    %c2 = arith.constant 2 : index
    %c0_17 = arith.constant 0 : index
    %c0_18 = arith.constant 0 : index
    %18 = vector.load %arg2[%c2, %c0_17, %c0_18] : memref<9x4x8xf32, #tpu.memory_space<vmem>>, vector<1x4x8xf32>
    %19 = vector.shape_cast %18 : vector<1x4x8xf32> to vector<4x8xf32>
    %cst_19 = arith.constant dense<0.000000e+00> : vector<64x8xf32>
    %20 = tpu.matmul %17, %19, %cst_19 {dimension_numbers = #tpu.dot_dimension_numbers<[1], [0], [0], [1], [0, 0, 1, 1], [], []>} : vector<64x4xf32>, vector<4x8xf32>, vector<64x8xf32> -> vector<64x8xf32>
    %21 = arith.addf %14, %20 : vector<64x8xf32>
    %c0_20 = arith.constant 0 : index
    %c18 = arith.constant 18 : index
    %c0_21 = arith.constant 0 : index
    %c0_22 = arith.constant 0 : index
    %22 = vector.load %arg1[%c0_20, %c18, %c0_21, %c0_22] : memref<1x36x9x4xf32, #tpu.memory_space<vmem>>, vector<1x8x8x4xf32>
    %23 = vector.shape_cast %22 : vector<1x8x8x4xf32> to vector<8x8x4xf32>
    %24 = vector.shape_cast %23 : vector<8x8x4xf32> to vector<64x4xf32>
    %c3 = arith.constant 3 : index
    %c0_23 = arith.constant 0 : index
    %c0_24 = arith.constant 0 : index
    %25 = vector.load %arg2[%c3, %c0_23, %c0_24] : memref<9x4x8xf32, #tpu.memory_space<vmem>>, vector<1x4x8xf32>
    %26 = vector.shape_cast %25 : vector<1x4x8xf32> to vector<4x8xf32>
    %cst_25 = arith.constant dense<0.000000e+00> : vector<64x8xf32>
    %27 = tpu.matmul %24, %26, %cst_25 {dimension_numbers = #tpu.dot_dimension_numbers<[1], [0], [0], [1], [0, 0, 1, 1], [], []>} : vector<64x4xf32>, vector<4x8xf32>, vector<64x8xf32> -> vector<64x8xf32>
    %28 = arith.addf %21, %27 : vector<64x8xf32>
    %c0_26 = arith.constant 0 : index
    %c27 = arith.constant 27 : index
    %c0_27 = arith.constant 0 : index
    %c0_28 = arith.constant 0 : index
    %29 = vector.load %arg1[%c0_26, %c27, %c0_27, %c0_28] : memref<1x36x9x4xf32, #tpu.memory_space<vmem>>, vector<1x8x8x4xf32>
    %30 = vector.shape_cast %29 : vector<1x8x8x4xf32> to vector<8x8x4xf32>
    %31 = vector.shape_cast %30 : vector<8x8x4xf32> to vector<64x4xf32>
    %c4 = arith.constant 4 : index
    %c0_29 = arith.constant 0 : index
    %c0_30 = arith.constant 0 : index
    %32 = vector.load %arg2[%c4, %c0_29, %c0_30] : memref<9x4x8xf32, #tpu.memory_space<vmem>>, vector<1x4x8xf32>
    %33 = vector.shape_cast %32 : vector<1x4x8xf32> to vector<4x8xf32>
    %cst_31 = arith.constant dense<0.000000e+00> : vector<64x8xf32>
    %34 = tpu.matmul %31, %33, %cst_31 {dimension_numbers = #tpu.dot_dimension_numbers<[1], [0], [0], [1], [0, 0, 1, 1], [], []>} : vector<64x4xf32>, vector<4x8xf32>, vector<64x8xf32> -> vector<64x8xf32>
    %35 = arith.addf %28, %34 : vector<64x8xf32>
    %c0_32 = arith.constant 0 : index
    %c18_33 = arith.constant 18 : index
    %c1_34 = arith.constant 1 : index
    %c0_35 = arith.constant 0 : index
    %36 = vector.load %arg1[%c0_32, %c18_33, %c1_34, %c0_35] : memref<1x36x9x4xf32, #tpu.memory_space<vmem>>, vector<1x8x8x4xf32>
    %37 = vector.shape_cast %36 : vector<1x8x8x4xf32> to vector<8x8x4xf32>
    %38 = vector.shape_cast %37 : vector<8x8x4xf32> to vector<64x4xf32>
    %c5 = arith.constant 5 : index
    %c0_36 = arith.constant 0 : index
    %c0_37 = arith.constant 0 : index
    %39 = vector.load %arg2[%c5, %c0_36, %c0_37] : memref<9x4x8xf32, #tpu.memory_space<vmem>>, vector<1x4x8xf32>
    %40 = vector.shape_cast %39 : vector<1x4x8xf32> to vector<4x8xf32>
    %cst_38 = arith.constant dense<0.000000e+00> : vector<64x8xf32>
    %41 = tpu.matmul %38, %40, %cst_38 {dimension_numbers = #tpu.dot_dimension_numbers<[1], [0], [0], [1], [0, 0, 1, 1], [], []>} : vector<64x4xf32>, vector<4x8xf32>, vector<64x8xf32> -> vector<64x8xf32>
    %42 = arith.addf %35, %41 : vector<64x8xf32>
    %c0_39 = arith.constant 0 : index
    %c1_40 = arith.constant 1 : index
    %c0_41 = arith.constant 0 : index
    %c0_42 = arith.constant 0 : index
    %43 = vector.load %arg1[%c0_39, %c1_40, %c0_41, %c0_42] : memref<1x36x9x4xf32, #tpu.memory_space<vmem>>, vector<1x8x8x4xf32>
    %44 = vector.shape_cast %43 : vector<1x8x8x4xf32> to vector<8x8x4xf32>
    %45 = vector.shape_cast %44 : vector<8x8x4xf32> to vector<64x4xf32>
    %c6 = arith.constant 6 : index
    %c0_43 = arith.constant 0 : index
    %c0_44 = arith.constant 0 : index
    %46 = vector.load %arg2[%c6, %c0_43, %c0_44] : memref<9x4x8xf32, #tpu.memory_space<vmem>>, vector<1x4x8xf32>
    %47 = vector.shape_cast %46 : vector<1x4x8xf32> to vector<4x8xf32>
    %cst_45 = arith.constant dense<0.000000e+00> : vector<64x8xf32>
    %48 = tpu.matmul %45, %47, %cst_45 {dimension_numbers = #tpu.dot_dimension_numbers<[1], [0], [0], [1], [0, 0, 1, 1], [], []>} : vector<64x4xf32>, vector<4x8xf32>, vector<64x8xf32> -> vector<64x8xf32>
    %49 = arith.addf %42, %48 : vector<64x8xf32>
    %c0_46 = arith.constant 0 : index
    %c10 = arith.constant 10 : index
    %c0_47 = arith.constant 0 : index
    %c0_48 = arith.constant 0 : index
    %50 = vector.load %arg1[%c0_46, %c10, %c0_47, %c0_48] : memref<1x36x9x4xf32, #tpu.memory_space<vmem>>, vector<1x8x8x4xf32>
    %51 = vector.shape_cast %50 : vector<1x8x8x4xf32> to vector<8x8x4xf32>
    %52 = vector.shape_cast %51 : vector<8x8x4xf32> to vector<64x4xf32>
    %c7 = arith.constant 7 : index
    %c0_49 = arith.constant 0 : index
    %c0_50 = arith.constant 0 : index
    %53 = vector.load %arg2[%c7, %c0_49, %c0_50] : memref<9x4x8xf32, #tpu.memory_space<vmem>>, vector<1x4x8xf32>
    %54 = vector.shape_cast %53 : vector<1x4x8xf32> to vector<4x8xf32>
    %cst_51 = arith.constant dense<0.000000e+00> : vector<64x8xf32>
    %55 = tpu.matmul %52, %54, %cst_51 {dimension_numbers = #tpu.dot_dimension_numbers<[1], [0], [0], [1], [0, 0, 1, 1], [], []>} : vector<64x4xf32>, vector<4x8xf32>, vector<64x8xf32> -> vector<64x8xf32>
    %56 = arith.addf %49, %55 : vector<64x8xf32>
    %c0_52 = arith.constant 0 : index
    %c1_53 = arith.constant 1 : index
    %c1_54 = arith.constant 1 : index
    %c0_55 = arith.constant 0 : index
    %57 = vector.load %arg1[%c0_52, %c1_53, %c1_54, %c0_55] : memref<1x36x9x4xf32, #tpu.memory_space<vmem>>, vector<1x8x8x4xf32>
    %58 = vector.shape_cast %57 : vector<1x8x8x4xf32> to vector<8x8x4xf32>
    %59 = vector.shape_cast %58 : vector<8x8x4xf32> to vector<64x4xf32>
    %c8 = arith.constant 8 : index
    %c0_56 = arith.constant 0 : index
    %c0_57 = arith.constant 0 : index
    %60 = vector.load %arg2[%c8, %c0_56, %c0_57] : memref<9x4x8xf32, #tpu.memory_space<vmem>>, vector<1x4x8xf32>
    %61 = vector.shape_cast %60 : vector<1x4x8xf32> to vector<4x8xf32>
    %cst_58 = arith.constant dense<0.000000e+00> : vector<64x8xf32>
    %62 = tpu.matmul %59, %61, %cst_58 {dimension_numbers = #tpu.dot_dimension_numbers<[1], [0], [0], [1], [0, 0, 1, 1], [], []>} : vector<64x4xf32>, vector<4x8xf32>, vector<64x8xf32> -> vector<64x8xf32>
    %63 = arith.addf %56, %62 : vector<64x8xf32>
    %c0_59 = arith.constant 0 : index
    %c0_60 = arith.constant 0 : index
    %64 = vector.load %arg3[%c0_59, %c0_60] : memref<1x8xf32, #tpu.memory_space<vmem>>, vector<1x8xf32>
    %65 = vector.broadcast %64 : vector<1x8xf32> to vector<64x8xf32>
    %66 = arith.addf %63, %65 : vector<64x8xf32>
    %cst_61 = arith.constant 0.000000e+00 : f32
    %67 = vector.broadcast %cst_61 : f32 to vector<64x8xf32>
    %68 = arith.maximumf %66, %67 : vector<64x8xf32>
    %cst_62 = arith.constant 0.000000e+00 : f32
    %69 = vector.broadcast %cst_62 : f32 to vector<10x24x8xf32>
    %c0_63 = arith.constant 0 : index
    %c0_64 = arith.constant 0 : index
    %c0_65 = arith.constant 0 : index
    %70 = vector.load %arg8[%c0_63, %c0_64, %c0_65] : memref<10x24x8xf32, #tpu.memory_space<vmem>>, vector<10x24x8xf32>
    tpu.vector_store %arg8[%c0_63, %c0_64, %c0_65], %69 {strides = array<i32>} : memref<10x24x8xf32, #tpu.memory_space<vmem>>, vector<10x24x8xf32>,
    %71 = vector.shape_cast %68 : vector<64x8xf32> to vector<8x8x8xf32>
    %c1_66 = arith.constant 1 : index
    %c8_67 = arith.constant 8 : index
    %c0_68 = arith.constant 0 : index
    %72 = vector.load %arg8[%c1_66, %c8_67, %c0_68] : memref<10x24x8xf32, #tpu.memory_space<vmem>>, vector<8x8x8xf32>
    tpu.vector_store %arg8[%c1_66, %c8_67, %c0_68], %71 {strides = array<i32>} : memref<10x24x8xf32, #tpu.memory_space<vmem>>, vector<8x8x8xf32>,
    %cst_69 = arith.constant 0.000000e+00 : f32
    %73 = vector.broadcast %cst_69 : f32 to vector<64x8xf32>
    %c0_70 = arith.constant 0 : index
    %c7_71 = arith.constant 7 : index
    %c0_72 = arith.constant 0 : index
    %74 = vector.load %arg8[%c0_70, %c7_71, %c0_72] : memref<10x24x8xf32, #tpu.memory_space<vmem>>, vector<8x8x8xf32>
    %75 = vector.shape_cast %74 : vector<8x8x8xf32> to vector<64x8xf32>
    %c0_73 = arith.constant 0 : index
    %c0_74 = arith.constant 0 : index
    %c0_75 = arith.constant 0 : index
    %76 = vector.load %arg4[%c0_73, %c0_74, %c0_75] : memref<9x8x8xf32, #tpu.memory_space<vmem>>, vector<1x8x8xf32>
    %77 = vector.shape_cast %76 : vector<1x8x8xf32> to vector<8x8xf32>
    %cst_76 = arith.constant dense<0.000000e+00> : vector<64x8xf32>
    %78 = tpu.matmul %75, %77, %cst_76 {dimension_numbers = #tpu.dot_dimension_numbers<[1], [0], [0], [1], [0, 0, 1, 1], [], []>} : vector<64x8xf32>, vector<8x8xf32>, vector<64x8xf32> -> vector<64x8xf32>
    %79 = arith.addf %73, %78 : vector<64x8xf32>
    %c0_77 = arith.constant 0 : index
    %c8_78 = arith.constant 8 : index
    %c0_79 = arith.constant 0 : index
    %80 = vector.load %arg8[%c0_77, %c8_78, %c0_79] : memref<10x24x8xf32, #tpu.memory_space<vmem>>, vector<8x8x8xf32>
    %81 = vector.shape_cast %80 : vector<8x8x8xf32> to vector<64x8xf32>
    %c1_80 = arith.constant 1 : index
    %c0_81 = arith.constant 0 : index
    %c0_82 = arith.constant 0 : index
    %82 = vector.load %arg4[%c1_80, %c0_81, %c0_82] : memref<9x8x8xf32, #tpu.memory_space<vmem>>, vector<1x8x8xf32>
    %83 = vector.shape_cast %82 : vector<1x8x8xf32> to vector<8x8xf32>
    %cst_83 = arith.constant dense<0.000000e+00> : vector<64x8xf32>
    %84 = tpu.matmul %81, %83, %cst_83 {dimension_numbers = #tpu.dot_dimension_numbers<[1], [0], [0], [1], [0, 0, 1, 1], [], []>} : vector<64x8xf32>, vector<8x8xf32>, vector<64x8xf32> -> vector<64x8xf32>
    %85 = arith.addf %79, %84 : vector<64x8xf32>
    %c0_84 = arith.constant 0 : index
    %c9_85 = arith.constant 9 : index
    %c0_86 = arith.constant 0 : index
    %86 = vector.load %arg8[%c0_84, %c9_85, %c0_86] : memref<10x24x8xf32, #tpu.memory_space<vmem>>, vector<8x8x8xf32>
    %87 = vector.shape_cast %86 : vector<8x8x8xf32> to vector<64x8xf32>
    %c2_87 = arith.constant 2 : index
    %c0_88 = arith.constant 0 : index
    %c0_89 = arith.constant 0 : index
    %88 = vector.load %arg4[%c2_87, %c0_88, %c0_89] : memref<9x8x8xf32, #tpu.memory_space<vmem>>, vector<1x8x8xf32>
    %89 = vector.shape_cast %88 : vector<1x8x8xf32> to vector<8x8xf32>
    %cst_90 = arith.constant dense<0.000000e+00> : vector<64x8xf32>
    %90 = tpu.matmul %87, %89, %cst_90 {dimension_numbers = #tpu.dot_dimension_numbers<[1], [0], [0], [1], [0, 0, 1, 1], [], []>} : vector<64x8xf32>, vector<8x8xf32>, vector<64x8xf32> -> vector<64x8xf32>
    %91 = arith.addf %85, %90 : vector<64x8xf32>
    %c1_91 = arith.constant 1 : index
    %c7_92 = arith.constant 7 : index
    %c0_93 = arith.constant 0 : index
    %92 = vector.load %arg8[%c1_91, %c7_92, %c0_93] : memref<10x24x8xf32, #tpu.memory_space<vmem>>, vector<8x8x8xf32>
    %93 = vector.shape_cast %92 : vector<8x8x8xf32> to vector<64x8xf32>
    %c3_94 = arith.constant 3 : index
    %c0_95 = arith.constant 0 : index
    %c0_96 = arith.constant 0 : index
    %94 = vector.load %arg4[%c3_94, %c0_95, %c0_96] : memref<9x8x8xf32, #tpu.memory_space<vmem>>, vector<1x8x8xf32>
    %95 = vector.shape_cast %94 : vector<1x8x8xf32> to vector<8x8xf32>
    %cst_97 = arith.constant dense<0.000000e+00> : vector<64x8xf32>
    %96 = tpu.matmul %93, %95, %cst_97 {dimension_numbers = #tpu.dot_dimension_numbers<[1], [0], [0], [1], [0, 0, 1, 1], [], []>} : vector<64x8xf32>, vector<8x8xf32>, vector<64x8xf32> -> vector<64x8xf32>
    %97 = arith.addf %91, %96 : vector<64x8xf32>
    %c1_98 = arith.constant 1 : index
    %c8_99 = arith.constant 8 : index
    %c0_100 = arith.constant 0 : index
    %98 = vector.load %arg8[%c1_98, %c8_99, %c0_100] : memref<10x24x8xf32, #tpu.memory_space<vmem>>, vector<8x8x8xf32>
    %99 = vector.shape_cast %98 : vector<8x8x8xf32> to vector<64x8xf32>
    %c4_101 = arith.constant 4 : index
    %c0_102 = arith.constant 0 : index
    %c0_103 = arith.constant 0 : index
    %100 = vector.load %arg4[%c4_101, %c0_102, %c0_103] : memref<9x8x8xf32, #tpu.memory_space<vmem>>, vector<1x8x8xf32>
    %101 = vector.shape_cast %100 : vector<1x8x8xf32> to vector<8x8xf32>
    %cst_104 = arith.constant dense<0.000000e+00> : vector<64x8xf32>
    %102 = tpu.matmul %99, %101, %cst_104 {dimension_numbers = #tpu.dot_dimension_numbers<[1], [0], [0], [1], [0, 0, 1, 1], [], []>} : vector<64x8xf32>, vector<8x8xf32>, vector<64x8xf32> -> vector<64x8xf32>
    %103 = arith.addf %97, %102 : vector<64x8xf32>
    %c1_105 = arith.constant 1 : index
    %c9_106 = arith.constant 9 : index
    %c0_107 = arith.constant 0 : index
    %104 = vector.load %arg8[%c1_105, %c9_106, %c0_107] : memref<10x24x8xf32, #tpu.memory_space<vmem>>, vector<8x8x8xf32>
    %105 = vector.shape_cast %104 : vector<8x8x8xf32> to vector<64x8xf32>
    %c5_108 = arith.constant 5 : index
    %c0_109 = arith.constant 0 : index
    %c0_110 = arith.constant 0 : index
    %106 = vector.load %arg4[%c5_108, %c0_109, %c0_110] : memref<9x8x8xf32, #tpu.memory_space<vmem>>, vector<1x8x8xf32>
    %107 = vector.shape_cast %106 : vector<1x8x8xf32> to vector<8x8xf32>
    %cst_111 = arith.constant dense<0.000000e+00> : vector<64x8xf32>
    %108 = tpu.matmul %105, %107, %cst_111 {dimension_numbers = #tpu.dot_dimension_numbers<[1], [0], [0], [1], [0, 0, 1, 1], [], []>} : vector<64x8xf32>, vector<8x8xf32>, vector<64x8xf32> -> vector<64x8xf32>
    %109 = arith.addf %103, %108 : vector<64x8xf32>
    %c2_112 = arith.constant 2 : index
    %c7_113 = arith.constant 7 : index
    %c0_114 = arith.constant 0 : index
    %110 = vector.load %arg8[%c2_112, %c7_113, %c0_114] : memref<10x24x8xf32, #tpu.memory_space<vmem>>, vector<8x8x8xf32>
    %111 = vector.shape_cast %110 : vector<8x8x8xf32> to vector<64x8xf32>
    %c6_115 = arith.constant 6 : index
    %c0_116 = arith.constant 0 : index
    %c0_117 = arith.constant 0 : index
    %112 = vector.load %arg4[%c6_115, %c0_116, %c0_117] : memref<9x8x8xf32, #tpu.memory_space<vmem>>, vector<1x8x8xf32>
    %113 = vector.shape_cast %112 : vector<1x8x8xf32> to vector<8x8xf32>
    %cst_118 = arith.constant dense<0.000000e+00> : vector<64x8xf32>
    %114 = tpu.matmul %111, %113, %cst_118 {dimension_numbers = #tpu.dot_dimension_numbers<[1], [0], [0], [1], [0, 0, 1, 1], [], []>} : vector<64x8xf32>, vector<8x8xf32>, vector<64x8xf32> -> vector<64x8xf32>
    %115 = arith.addf %109, %114 : vector<64x8xf32>
    %c2_119 = arith.constant 2 : index
    %c8_120 = arith.constant 8 : index
    %c0_121 = arith.constant 0 : index
    %116 = vector.load %arg8[%c2_119, %c8_120, %c0_121] : memref<10x24x8xf32, #tpu.memory_space<vmem>>, vector<8x8x8xf32>
    %117 = vector.shape_cast %116 : vector<8x8x8xf32> to vector<64x8xf32>
    %c7_122 = arith.constant 7 : index
    %c0_123 = arith.constant 0 : index
    %c0_124 = arith.constant 0 : index
    %118 = vector.load %arg4[%c7_122, %c0_123, %c0_124] : memref<9x8x8xf32, #tpu.memory_space<vmem>>, vector<1x8x8xf32>
    %119 = vector.shape_cast %118 : vector<1x8x8xf32> to vector<8x8xf32>
    %cst_125 = arith.constant dense<0.000000e+00> : vector<64x8xf32>
    %120 = tpu.matmul %117, %119, %cst_125 {dimension_numbers = #tpu.dot_dimension_numbers<[1], [0], [0], [1], [0, 0, 1, 1], [], []>} : vector<64x8xf32>, vector<8x8xf32>, vector<64x8xf32> -> vector<64x8xf32>
    %121 = arith.addf %115, %120 : vector<64x8xf32>
    %c2_126 = arith.constant 2 : index
    %c9_127 = arith.constant 9 : index
    %c0_128 = arith.constant 0 : index
    %122 = vector.load %arg8[%c2_126, %c9_127, %c0_128] : memref<10x24x8xf32, #tpu.memory_space<vmem>>, vector<8x8x8xf32>
    %123 = vector.shape_cast %122 : vector<8x8x8xf32> to vector<64x8xf32>
    %c8_129 = arith.constant 8 : index
    %c0_130 = arith.constant 0 : index
    %c0_131 = arith.constant 0 : index
    %124 = vector.load %arg4[%c8_129, %c0_130, %c0_131] : memref<9x8x8xf32, #tpu.memory_space<vmem>>, vector<1x8x8xf32>
    %125 = vector.shape_cast %124 : vector<1x8x8xf32> to vector<8x8xf32>
    %cst_132 = arith.constant dense<0.000000e+00> : vector<64x8xf32>
    %126 = tpu.matmul %123, %125, %cst_132 {dimension_numbers = #tpu.dot_dimension_numbers<[1], [0], [0], [1], [0, 0, 1, 1], [], []>} : vector<64x8xf32>, vector<8x8xf32>, vector<64x8xf32> -> vector<64x8xf32>
    %127 = arith.addf %121, %126 : vector<64x8xf32>
    %c0_133 = arith.constant 0 : index
    %c27_134 = arith.constant 27 : index
    %c0_135 = arith.constant 0 : index
    %c0_136 = arith.constant 0 : index
    %128 = vector.load %arg1[%c0_133, %c27_134, %c0_135, %c0_136] : memref<1x36x9x4xf32, #tpu.memory_space<vmem>>, vector<1x8x8x4xf32>
    %129 = vector.shape_cast %128 : vector<1x8x8x4xf32> to vector<8x8x4xf32>
    %130 = vector.shape_cast %129 : vector<8x8x4xf32> to vector<64x4xf32>
    %c0_137 = arith.constant 0 : index
    %c0_138 = arith.constant 0 : index
    %131 = vector.load %arg6[%c0_137, %c0_138] : memref<4x8xf32, #tpu.memory_space<vmem>>, vector<4x8xf32>
    %cst_139 = arith.constant dense<0.000000e+00> : vector<64x8xf32>
    %132 = tpu.matmul %130, %131, %cst_139 {dimension_numbers = #tpu.dot_dimension_numbers<[1], [0], [0], [1], [0, 0, 1, 1], [], []>} : vector<64x4xf32>, vector<4x8xf32>, vector<64x8xf32> -> vector<64x8xf32>
    %133 = arith.addf %127, %132 : vector<64x8xf32>
    %c0_140 = arith.constant 0 : index
    %c0_141 = arith.constant 0 : index
    %134 = vector.load %arg5[%c0_140, %c0_141] : memref<1x8xf32, #tpu.memory_space<vmem>>, vector<1x8xf32>
    %135 = vector.broadcast %134 : vector<1x8xf32> to vector<64x8xf32>
    %136 = arith.addf %133, %135 : vector<64x8xf32>
    %cst_142 = arith.constant 0.000000e+00 : f32
    %137 = vector.broadcast %cst_142 : f32 to vector<64x8xf32>
    %138 = arith.maximumf %136, %137 : vector<64x8xf32>
    %c0_143 = arith.constant 0 : index
    %c0_144 = arith.constant 0 : index
    %c0_145 = arith.constant 0 : index
    %139 = vector.load %arg7[%c0_143, %c0_144, %c0_145] : memref<1x64x8xf32, #tpu.memory_space<vmem>>, vector<1x64x8xf32>
    %140 = vector.shape_cast %139 : vector<1x64x8xf32> to vector<64x8xf32>
    %141 = vector.shape_cast %138 : vector<64x8xf32> to vector<1x64x8xf32>
    tpu.vector_store %arg7[%c0_143, %c0_144, %c0_145], %141 {strides = array<i32>} : memref<1x64x8xf32, #tpu.memory_space<vmem>>, vector<1x64x8xf32>,
    return
  }
  func.func @transform_0(%arg0: i32) -> (i32, i32, i32, i32) {
    %c0_i32 = arith.constant 0 : i32
    %c0_i32_0 = arith.constant 0 : i32
    %c0_i32_1 = arith.constant 0 : i32
    %c0_i32_2 = arith.constant 0 : i32
    return %arg0, %c0_i32, %c0_i32_0, %c0_i32_1 : i32, i32, i32, i32
  }
  func.func @transform_1(%arg0: i32) -> (i32, i32, i32) {
    %c0_i32 = arith.constant 0 : i32
    %c0_i32_0 = arith.constant 0 : i32
    %c0_i32_1 = arith.constant 0 : i32
    %c0_i32_2 = arith.constant 0 : i32
    return %c0_i32, %c0_i32_0, %c0_i32_1 : i32, i32, i32
  }
  func.func @transform_2(%arg0: i32) -> (i32, i32) {
    %c0_i32 = arith.constant 0 : i32
    %c0_i32_0 = arith.constant 0 : i32
    %c0_i32_1 = arith.constant 0 : i32
    return %c0_i32, %c0_i32_0 : i32, i32
  }
  func.func @transform_3(%arg0: i32) -> (i32, i32, i32) {
    %c0_i32 = arith.constant 0 : i32
    %c0_i32_0 = arith.constant 0 : i32
    %c0_i32_1 = arith.constant 0 : i32
    %c0_i32_2 = arith.constant 0 : i32
    return %c0_i32, %c0_i32_0, %c0_i32_1 : i32, i32, i32
  }
  func.func @transform_4(%arg0: i32) -> (i32, i32) {
    %c0_i32 = arith.constant 0 : i32
    %c0_i32_0 = arith.constant 0 : i32
    %c0_i32_1 = arith.constant 0 : i32
    return %c0_i32, %c0_i32_0 : i32, i32
  }
  func.func @transform_5(%arg0: i32) -> (i32, i32) {
    %c0_i32 = arith.constant 0 : i32
    %c0_i32_0 = arith.constant 0 : i32
    %c0_i32_1 = arith.constant 0 : i32
    return %c0_i32, %c0_i32_0 : i32, i32
  }
  func.func @transform_6(%arg0: i32) -> (i32, i32, i32) {
    %c0_i32 = arith.constant 0 : i32
    %c0_i32_0 = arith.constant 0 : i32
    %c0_i32_1 = arith.constant 0 : i32
    return %arg0, %c0_i32, %c0_i32_0 : i32, i32, i32
  }
}

</mosaic_0001>

<llo_original>
// kernel: basic_block_forward.1
$region0: #{basic_block_forward.1}
  #allocation0 [shape = 'u32[]', space=smem, size = 0x4, offset = 0x4, fixed_abs, tag = 'smem constant byte address 0x4 - core index']
  #allocation1 [shape = 'u32[144,128]{1,0:T(1,128)}', space=vmem, size = 0x12000, scoped, tag = 'internal scratch']
  #allocation2 [shape = 'f32[10,24,8]{2,1,0:T(8,128)}', space=vmem, size = 0x1e000, scoped, tag = 'scratch operand']
  %s0 = inlined_call_operand.vmem [shape: f32[2,36,9,4], index: 0, kind: input, shape index: {}]
  %s1 = inlined_call_operand.vmem [shape: f32[9,4,8], index: 1, kind: input, shape index: {}]
  %s2 = inlined_call_operand.vmem [shape: f32[1,8], index: 2, kind: input, shape index: {}]
  %s3 = inlined_call_operand.vmem [shape: f32[9,8,8], index: 3, kind: input, shape index: {}]
  %s4 = inlined_call_operand.vmem [shape: f32[1,8], index: 4, kind: input, shape index: {}]
  %s5 = inlined_call_operand.vmem [shape: f32[4,8], index: 5, kind: input, shape index: {}]
  %s6 = inlined_call_operand.vmem [shape: f32[2,64,8], index: 6, kind: output, shape index: {}]
  %s7 = sld [smem:[#allocation0]]
  $region57: #{basic_block_forward.1} parent=0
    _
  %s9 = ssub.s32 1, %s7
  %s10 = scalar_select 0, %s9, %s7
  loop: start=0, step=1, limit=4
  $region2: #{basic_block_forward.1} parent=0 // loop_pre_header
    _
  $region3: #{basic_block_forward.1} parent=0 // loop_header
    %s12 = sphi 0, %s16
    %p13 = scmp.ge.s32.totalorder %s12, 4
    %s22 = sphi 0, %s24
    %s25 = sphi 0, %s22
    %s26 = sphi 0, %s25
    %s42 = sphi 0, %s26
    %s46 = sphi 0, %s46
    %s48 = sphi 0, %s46
    %s49 = sphi 0, %s48
    %s63 = sphi 0, %s49
    %s67 = sphi 0, %s67
    %s69 = sphi 0, %s67
    %s70 = sphi 0, %s69
    %s84 = sphi 0, %s70
    %s88 = sphi 0, %s88
    %s90 = sphi 0, %s88
    %s91 = sphi 0, %s90
    %s105 = sphi 0, %s91
    %s109 = sphi 0, %s109
    %s111 = sphi 0, %s109
    %s112 = sphi 0, %s111
    %s126 = sphi 0, %s112
    %s130 = sphi 0, %s130
    %s132 = sphi 0, %s130
    %s133 = sphi 0, %s132
    %s147 = sphi 0, %s133
    %s153 = sphi 0, %s155
    %s156 = sphi 0, %s153
    %s157 = sphi 0, %s156
    %s173 = sphi 0, %s157
  $region4: #{basic_block_forward.1} parent=0 // loop_header_branch
    %15 = sbr.rel (%p13) target = $region8
  $region5: #{basic_block_forward.1} parent=0 // loop_body
    %s17 = ssub.s32 %s12, 1
    %s18 = ssub.s32 %s12, 2
    %s19 = sadd.s32 %s12, 1
    %s20 = ssub.s32 %s12, %s19
    %p21 = scmp.eq.s32.totalorder %s20, 0
    %s23 = sadd.s32 %s22, 1
    %s24 = scalar_select %p21, %s22, %s23
    %p27 = pneg %p21
    %p28 = scmp.eq.s32.totalorder %s12, 1
    %p29 = por %p27, %p28
    %p30 = scmp.ne.s32.totalorder %s22, %s25
    %p31 = scmp.eq.s32.totalorder %s12, 0
    %p32 = por %p30, %p31
    %p33 = scmp.ne.s32.totalorder %s22, %s25
    %p34 = scmp.eq.s32.totalorder %s17, 1
    %p35 = por %p33, %p34
    %p36 = scmp.ne.s32.totalorder %s25, %s26
    %p37 = scmp.eq.s32.totalorder %s17, 0
    %p38 = por %p36, %p37
    %p39 = scmp.ne.s32.totalorder %s25, %s26
    %p40 = scmp.eq.s32.totalorder %s18, 1
    %p41 = por %p39, %p40
    %p43 = scmp.ne.s32.totalorder %s26, %s42
    %p44 = scmp.eq.s32.totalorder %s18, 0
    %p45 = por %p43, %p44
    %s47 = sadd.s32 %s46, 1
    %p50 = scmp.eq.s32.totalorder %s12, 1
    %p51 = scmp.ne.s32.totalorder %s46, %s48
    %p52 = scmp.eq.s32.totalorder %s12, 0
    %p53 = por %p51, %p52
    %p54 = scmp.ne.s32.totalorder %s46, %s48
    %p55 = scmp.eq.s32.totalorder %s17, 1
    %p56 = por %p54, %p55
    %p57 = scmp.ne.s32.totalorder %s48, %s49
    %p58 = scmp.eq.s32.totalorder %s17, 0
    %p59 = por %p57, %p58
    %p60 = scmp.ne.s32.totalorder %s48, %s49
    %p61 = scmp.eq.s32.totalorder %s18, 1
    %p62 = por %p60, %p61
    %p64 = scmp.ne.s32.totalorder %s49, %s63
    %p65 = scmp.eq.s32.totalorder %s18, 0
    %p66 = por %p64, %p65
    %s68 = sadd.s32 %s67, 1
    %p71 = scmp.eq.s32.totalorder %s12, 1
    %p72 = scmp.ne.s32.totalorder %s67, %s69
    %p73 = scmp.eq.s32.totalorder %s12, 0
    %p74 = por %p72, %p73
    %p75 = scmp.ne.s32.totalorder %s67, %s69
    %p76 = scmp.eq.s32.totalorder %s17, 1
    %p77 = por %p75, %p76
    %p78 = scmp.ne.s32.totalorder %s69, %s70
    %p79 = scmp.eq.s32.totalorder %s17, 0
    %p80 = por %p78, %p79
    %p81 = scmp.ne.s32.totalorder %s69, %s70
    %p82 = scmp.eq.s32.totalorder %s18, 1
    %p83 = por %p81, %p82
    %p85 = scmp.ne.s32.totalorder %s70, %s84
    %p86 = scmp.eq.s32.totalorder %s18, 0
    %p87 = por %p85, %p86
    %s89 = sadd.s32 %s88, 1
    %p92 = scmp.eq.s32.totalorder %s12, 1
    %p93 = scmp.ne.s32.totalorder %s88, %s90
    %p94 = scmp.eq.s32.totalorder %s12, 0
    %p95 = por %p93, %p94
    %p96 = scmp.ne.s32.totalorder %s88, %s90
    %p97 = scmp.eq.s32.totalorder %s17, 1
    %p98 = por %p96, %p97
    %p99 = scmp.ne.s32.totalorder %s90, %s91
    %p100 = scmp.eq.s32.totalorder %s17, 0
    %p101 = por %p99, %p100
    %p102 = scmp.ne.s32.totalorder %s90, %s91
    %p103 = scmp.eq.s32.totalorder %s18, 1
    %p104 = por %p102, %p103
    %p106 = scmp.ne.s32.totalorder %s91, %s105
    %p107 = scmp.eq.s32.totalorder %s18, 0
    %p108 = por %p106, %p107
    %s110 = sadd.s32 %s109, 1
    %p113 = scmp.eq.s32.totalorder %s12, 1
    %p114 = scmp.ne.s32.totalorder %s109, %s111
    %p115 = scmp.eq.s32.totalorder %s12, 0
    %p116 = por %p114, %p115
    %p117 = scmp.ne.s32.totalorder %s109, %s111
    %p118 = scmp.eq.s32.totalorder %s17, 1
    %p119 = por %p117, %p118
    %p120 = scmp.ne.s32.totalorder %s111, %s112
    %p121 = scmp.eq.s32.totalorder %s17, 0
    %p122 = por %p120, %p121
    %p123 = scmp.ne.s32.totalorder %s111, %s112
    %p124 = scmp.eq.s32.totalorder %s18, 1
    %p125 = por %p123, %p124
    %p127 = scmp.ne.s32.totalorder %s112, %s126
    %p128 = scmp.eq.s32.totalorder %s18, 0
    %p129 = por %p127, %p128
    %s131 = sadd.s32 %s130, 1
    %p134 = scmp.eq.s32.totalorder %s12, 1
    %p135 = scmp.ne.s32.totalorder %s130, %s132
    %p136 = scmp.eq.s32.totalorder %s12, 0
    %p137 = por %p135, %p136
    %p138 = scmp.ne.s32.totalorder %s130, %s132
    %p139 = scmp.eq.s32.totalorder %s17, 1
    %p140 = por %p138, %p139
    %p141 = scmp.ne.s32.totalorder %s132, %s133
    %p142 = scmp.eq.s32.totalorder %s17, 0
    %p143 = por %p141, %p142
    %p144 = scmp.ne.s32.totalorder %s132, %s133
    %p145 = scmp.eq.s32.totalorder %s18, 1
    %p146 = por %p144, %p145
    %p148 = scmp.ne.s32.totalorder %s133, %s147
    %p149 = scmp.eq.s32.totalorder %s18, 0
    %p150 = por %p148, %p149
    %s151 = ssub.s32 %s12, %s19
    %p152 = scmp.eq.s32.totalorder %s151, 0
    %s154 = sadd.s32 %s153, 1
    %s155 = scalar_select %p152, %s153, %s154
    %p158 = pneg %p152
    %p159 = scmp.eq.s32.totalorder %s12, 1
    %p160 = por %p158, %p159
    %p161 = scmp.ne.s32.totalorder %s153, %s156
    %p162 = scmp.eq.s32.totalorder %s12, 0
    %p163 = por %p161, %p162
    %p164 = scmp.ne.s32.totalorder %s153, %s156
    %p165 = scmp.eq.s32.totalorder %s17, 1
    %p166 = por %p164, %p165
    %p167 = scmp.ne.s32.totalorder %s156, %s157
    %p168 = scmp.eq.s32.totalorder %s17, 0
    %p169 = por %p167, %p168
    %p170 = scmp.ne.s32.totalorder %s156, %s157
    %p171 = scmp.eq.s32.totalorder %s18, 1
    %p172 = por %p170, %p171
    %p174 = scmp.ne.s32.totalorder %s157, %s173
    %p175 = scmp.eq.s32.totalorder %s18, 0
    %p176 = por %p174, %p175
    %p177 = scmp.le.s32.totalorder 1, %s12
    %p178 = scmp.lt.s32.totalorder %s12, 3
    %p179 = pnand %p177, %p178
    %p180 = pneg %p179
    // Predicated region
    $region9: #{basic_block_forward.1} parent=5 // pred_check
      _
    $region10: #{basic_block_forward.1} parent=5 // pred_check_branch
      %182 = sbr.rel (%p179) target = $region12
    $region11: #{basic_block_forward.1} parent=5 // pred_region
      %s183 = ssub.s32 %s12, 1
      // Predicated region
      $region13: #{basic_block_forward.1} parent=11 // pred_check
        %p184 = pneg %p59
      $region14: #{basic_block_forward.1} parent=11 // pred_check_branch
        %186 = sbr.rel (%p184) target = $region16
      $region15: #{basic_block_forward.1} parent=11 // pred_region
        _
      $region16: #{basic_block_forward.1} parent=11 // pred_fallthru
        _
      // Predicated region
      $region17: #{basic_block_forward.1} parent=11 // pred_check
        %p187 = pneg %p80
      $region18: #{basic_block_forward.1} parent=11 // pred_check_branch
        %189 = sbr.rel (%p187) target = $region20
      $region19: #{basic_block_forward.1} parent=11 // pred_region
        _
      $region20: #{basic_block_forward.1} parent=11 // pred_fallthru
        _
      // Predicated region
      $region21: #{basic_block_forward.1} parent=11 // pred_check
        %p190 = pneg %p101
      $region22: #{basic_block_forward.1} parent=11 // pred_check_branch
        %192 = sbr.rel (%p190) target = $region24
      $region23: #{basic_block_forward.1} parent=11 // pred_region
        _
      $region24: #{basic_block_forward.1} parent=11 // pred_fallthru
        _
      // Predicated region
      $region25: #{basic_block_forward.1} parent=11 // pred_check
        %p193 = pneg %p122
      $region26: #{basic_block_forward.1} parent=11 // pred_check_branch
        %195 = sbr.rel (%p193) target = $region28
      $region27: #{basic_block_forward.1} parent=11 // pred_region
        _
      $region28: #{basic_block_forward.1} parent=11 // pred_fallthru
        _
      // Predicated region
      $region29: #{basic_block_forward.1} parent=11 // pred_check
        %p196 = pneg %p143
      $region30: #{basic_block_forward.1} parent=11 // pred_check_branch
        %198 = sbr.rel (%p196) target = $region32
      $region31: #{basic_block_forward.1} parent=11 // pred_region
        _
      $region32: #{basic_block_forward.1} parent=11 // pred_fallthru
        _
    $region12: #{basic_block_forward.1} parent=5 // pred_fallthru
      _
    %p199 = scmp.lt.s32.totalorder %s12, 2
    // Predicated region
    $region33: #{basic_block_forward.1} parent=5 // pred_check
      %p200 = pneg %p199
    $region34: #{basic_block_forward.1} parent=5 // pred_check_branch
      %202 = sbr.rel (%p200) target = $region36
    $region35: #{basic_block_forward.1} parent=5 // pred_region
      // Predicated region
      $region37: #{basic_block_forward.1} parent=35 // pred_check
        %p203 = pneg %p32
      $region38: #{basic_block_forward.1} parent=35 // pred_check_branch
        %205 = sbr.rel (%p203) target = $region40
      $region39: #{basic_block_forward.1} parent=35 // pred_region
        %p206 = scmp.lt.s32.totalorder %s12, 1
        %s207 = scalar_select %p206, %s12, 1
        %s208 = smul.addr %s207, 72
        %s209 = smul.addr %s208, 8
        %s210 = scalar_lea.vmem %s0, %s209
      $region40: #{basic_block_forward.1} parent=35 // pred_fallthru
        _
    $region36: #{basic_block_forward.1} parent=5 // pred_fallthru
      _
    %p211 = scmp.le.s32.totalorder 1, %s12
    %p212 = scmp.lt.s32.totalorder %s12, 3
    %p213 = pnand %p211, %p212
    %p214 = pneg %p213
    // Predicated region
    $region41: #{basic_block_forward.1} parent=5 // pred_check
      _
    $region42: #{basic_block_forward.1} parent=5 // pred_check_branch
      %216 = sbr.rel (%p213) target = $region44
    $region43: #{basic_block_forward.1} parent=5 // pred_region
      %s217 = ssub.s32 %s12, 1
      %p218 = scmp.lt.s32.totalorder %s17, 1
      %s219 = scalar_select %p218, %s17, 1
      %s220 = smul.addr %s219, 72
      %s221 = smul.addr %s220, 8
      %s222 = scalar_lea.vmem %s0, %s221
      %p223 = pneg %p38
      %p224 = pneg %p35
      %p225 = pneg %p59
      %p226 = pneg %p56
      %p227 = pneg %p80
      %p228 = pneg %p77
      %p229 = pneg %p101
      %p230 = pneg %p98
      %p231 = pneg %p122
      %p232 = pneg %p119
      %p233 = pneg %p143
      %p234 = pneg %p140
      %p235 = pneg %p169
      %p236 = pneg %p166
      %p237 = scmp.lt.s32.totalorder %s17, 1
      %s238 = scalar_select %p237, %s17, 1
      %s239 = smul.addr %s238, 8
      %s240 = smul.addr %s239, 8
      %s241 = scalar_lea.vmem %s6, %s240
      %p242 = scmp.lt.s32.totalorder %s17, 1
      %s243 = scalar_select %p242, %s17, 1
      %s244 = smul.addr %s243, 72
      %s245 = smul.addr %s244, 8
      %s246 = scalar_lea.vmem %s0, %s245
      %p247 = scmp.lt.s32.totalorder %s17, 1
      %s248 = scalar_select %p247, %s17, 1
      %s249 = smul.addr %s248, 8
      %s250 = smul.addr %s249, 8
      %s251 = scalar_lea.vmem %s6, %s250
      %v252 = vld [vmem:[%s246] sm:$0xff]
      %v253 = vld [vmem:[%s246 + $0x10] sm:$0xff]
      %v254 = vld [vmem:[%s246 + $0x20] sm:$0xff]
      %v255 = vld [vmem:[%s246 + $0x30] sm:$0xff]
      %v256 = vld [vmem:[%s246 + $0x40] sm:$0xff]
      %v257 = vld [vmem:[%s246 + $0x50] sm:$0xff]
      %v258 = vld [vmem:[%s246 + $0x60] sm:$0xff]
      %v259 = vld [vmem:[%s246 + $0x70] sm:$0xff]
      %v260 = vld [vmem:[%s1] sm:$0xf]
      %s261 = scalar_lea.vmem %s246, 144
      %v262 = vld [vmem:[%s261] sm:$0xff]
      %v263 = vld [vmem:[%s261 + $0x10] sm:$0xff]
      %v264 = vld [vmem:[%s261 + $0x20] sm:$0xff]
      %v265 = vld [vmem:[%s261 + $0x30] sm:$0xff]
      %v266 = vld [vmem:[%s261 + $0x40] sm:$0xff]
      %v267 = vld [vmem:[%s261 + $0x50] sm:$0xff]
      %v268 = vld [vmem:[%s261 + $0x60] sm:$0xff]
      %v269 = vld [vmem:[%s261 + $0x70] sm:$0xff]
      %s270 = scalar_lea.vmem %s1, 4
      %v271 = vld [vmem:[%s270] sm:$0xf]
      %vm272 = vcmask 31744
      %v274 = vsel %vm272, %v262, 0
      %v277 = vsel %vm272, %v263, 0
      %v280 = vsel %vm272, %v264, 0
      %v283 = vsel %vm272, %v265, 0
      %v286 = vsel %vm272, %v266, 0
      %v289 = vsel %vm272, %v267, 0
      %v292 = vsel %vm272, %v268, 0
      %v295 = vsel %vm272, %v269, 0
      %vm297 = vcmask 1043456
      %v299 = vsel %vm297, %v271, 0
      %301 = vmatprep.subr.mxu0 0.0
      %302 = vmatpush1.msra.mxu0 0.0
      %303 = vmatprep.subr.mxu0 0.0
      %304 = vmatpush1.msra.mxu0 0.0
      %305 = vmatprep.subr.mxu0 0.0
      %306 = vmatpush1.msra.mxu0 0.0
      %307 = vmatprep.subr.mxu0 0.0
      %308 = vmatpush1.msra.mxu0 0.0
      %309 = vmatprep.subr.mxu0 0.0
      %310 = vmatpush1.msra.mxu0 0.0
      %311 = vmatprep.subr.mxu0 0.0
      %312 = vmatpush1.msra.mxu0 0.0
      %313 = vmatprep.subr.mxu0 0.0
      %314 = vmatpush1.msra.mxu0 0.0
      %315 = vmatprep.subr.mxu0 0.0
      %316 = vmatpush1.msra.mxu0 0.0
      %317 = vmatprep.subr.mxu0 0.0
      %318 = vmatpush1.msra.mxu0 0.0
      %319 = vmatprep.subr.mxu0 0.0
      %320 = vmatpush1.msra.mxu0 0.0
      %321 = vmatprep.subr.mxu0 0.0
      %322 = vmatpush1.msra.mxu0 0.0
      %323 = vmatprep.subr.mxu0 0.0
      %324 = vmatpush1.msra.mxu0 0.0
      %325 = vmatprep.subr.mxu0 0.0
      %326 = vmatpush1.msra.mxu0 0.0
      %327 = vmatprep.subr.mxu0 0.0
      %328 = vmatpush1.msra.mxu0 0.0
      %329 = vmatprep.subr.mxu0 0.0
      %330 = vmatpush1.msra.mxu0 0.0
      %331 = vmatprep.subr.mxu0 0.0
      %332 = vmatpush1.msra.mxu0 %v299
      %333 = vmatprep.subr.mxu0 0.0
      %334 = vmatpush2.msra.mxu0 0.0
      %335 = vmatprep.subr.mxu0 0.0
      %336 = vmatpush2.msra.mxu0 0.0
      %337 = vmatprep.subr.mxu0 0.0
      %338 = vmatpush2.msra.mxu0 0.0
      %339 = vmatprep.subr.mxu0 0.0
      %340 = vmatpush2.msra.mxu0 0.0
      %341 = vmatprep.subr.mxu0 0.0
      %342 = vmatpush2.msra.mxu0 0.0
      %343 = vmatprep.subr.mxu0 0.0
      %344 = vmatpush2.msra.mxu0 0.0
      %345 = vmatprep.subr.mxu0 0.0
      %346 = vmatpush2.msra.mxu0 0.0
      %347 = vmatprep.subr.mxu0 0.0
      %348 = vmatpush2.msra.mxu0 0.0
      %349 = vmatprep.subr.mxu0 0.0
      %350 = vmatpush2.msra.mxu0 0.0
      %351 = vmatprep.subr.mxu0 0.0
      %352 = vmatpush2.msra.mxu0 0.0
      %353 = vmatprep.subr.mxu0 0.0
      %354 = vmatpush2.msra.mxu0 0.0
      %355 = vmatprep.subr.mxu0 0.0
      %356 = vmatpush2.msra.mxu0 0.0
      %357 = vmatprep.subr.mxu0 0.0
      %358 = vmatpush2.msra.mxu0 0.0
      %359 = vmatprep.subr.mxu0 0.0
      %360 = vmatpush2.msra.mxu0 0.0
      %361 = vmatprep.subr.mxu0 0.0
      %362 = vmatpush2.msra.mxu0 0.0
      %363 = vmatprep.subr.mxu0 0.0
      %364 = vmatpush2.msra.mxu0 0.0
      %365 = vmatprep.mubr.f32.mxu0 0.0
      %366 = vmatmul.mubr.f32.gmra.mxu0 %v274
      %v367 = vpop.f32.mrf.mxu0
      %v368 = vadd.f32 0.0, %v367
      %v369 = vpop.f32.mrf.mxu0
      %370 = vmatprep.mubr.f32.mxu0 0.0
      %371 = vmatmul.mubr.f32.gmra.mxu0 %v277
      %v372 = vpop.f32.mrf.mxu0
      %v373 = vadd.f32 0.0, %v372
      %v374 = vpop.f32.mrf.mxu0
      %375 = vmatprep.mubr.f32.mxu0 0.0
      %376 = vmatmul.mubr.f32.gmra.mxu0 %v280
      %v377 = vpop.f32.mrf.mxu0
      %v378 = vadd.f32 0.0, %v377
      %v379 = vpop.f32.mrf.mxu0
      %380 = vmatprep.mubr.f32.mxu0 0.0
      %381 = vmatmul.mubr.f32.gmra.mxu0 %v283
      %v382 = vpop.f32.mrf.mxu0
      %v383 = vadd.f32 0.0, %v382
      %v384 = vpop.f32.mrf.mxu0
      %385 = vmatprep.mubr.f32.mxu0 0.0
      %386 = vmatmul.mubr.f32.gmra.mxu0 %v286
      %v387 = vpop.f32.mrf.mxu0
      %v388 = vadd.f32 0.0, %v387
      %v389 = vpop.f32.mrf.mxu0
      %390 = vmatprep.mubr.f32.mxu0 0.0
      %391 = vmatmul.mubr.f32.gmra.mxu0 %v289
      %v392 = vpop.f32.mrf.mxu0
      %v393 = vadd.f32 0.0, %v392
      %v394 = vpop.f32.mrf.mxu0
      %395 = vmatprep.mubr.f32.mxu0 0.0
      %396 = vmatmul.mubr.f32.gmra.mxu0 %v292
      %v397 = vpop.f32.mrf.mxu0
      %v398 = vadd.f32 0.0, %v397
      %v399 = vpop.f32.mrf.mxu0
      %400 = vmatprep.mubr.f32.mxu0 0.0
      %401 = vmatmul.mubr.f32.gmra.mxu0 %v295
      %v402 = vpop.f32.mrf.mxu0
      %v403 = vadd.f32 0.0, %v402
      %v404 = vpop.f32.mrf.mxu0
      %405 = vdwg.mxu0
      %v407 = vsel %vm272, %v252, 0
      %v410 = vsel %vm272, %v253, 0
      %v413 = vsel %vm272, %v254, 0
      %v416 = vsel %vm272, %v255, 0
      %v419 = vsel %vm272, %v256, 0
      %v422 = vsel %vm272, %v257, 0
      %v425 = vsel %vm272, %v258, 0
      %v428 = vsel %vm272, %v259, 0
      %v431 = vsel %vm297, %v260, 0
      %433 = vmatprep.subr.mxu0 0.0
      %434 = vmatpush1.msra.mxu0 0.0
      %435 = vmatprep.subr.mxu0 0.0
      %436 = vmatpush1.msra.mxu0 0.0
      %437 = vmatprep.subr.mxu0 0.0
      %438 = vmatpush1.msra.mxu0 0.0
      %439 = vmatprep.subr.mxu0 0.0
      %440 = vmatpush1.msra.mxu0 0.0
      %441 = vmatprep.subr.mxu0 0.0
      %442 = vmatpush1.msra.mxu0 0.0
      %443 = vmatprep.subr.mxu0 0.0
      %444 = vmatpush1.msra.mxu0 0.0
      %445 = vmatprep.subr.mxu0 0.0
      %446 = vmatpush1.msra.mxu0 0.0
      %447 = vmatprep.subr.mxu0 0.0
      %448 = vmatpush1.msra.mxu0 0.0
      %449 = vmatprep.subr.mxu0 0.0
      %450 = vmatpush1.msra.mxu0 0.0
      %451 = vmatprep.subr.mxu0 0.0
      %452 = vmatpush1.msra.mxu0 0.0
      %453 = vmatprep.subr.mxu0 0.0
      %454 = vmatpush1.msra.mxu0 0.0
      %455 = vmatprep.subr.mxu0 0.0
      %456 = vmatpush1.msra.mxu0 0.0
      %457 = vmatprep.subr.mxu0 0.0
      %458 = vmatpush1.msra.mxu0 0.0
      %459 = vmatprep.subr.mxu0 0.0
      %460 = vmatpush1.msra.mxu0 0.0
      %461 = vmatprep.subr.mxu0 0.0
      %462 = vmatpush1.msra.mxu0 0.0
      %463 = vmatprep.subr.mxu0 0.0
      %464 = vmatpush1.msra.mxu0 %v431
      %465 = vmatprep.subr.mxu0 0.0
      %466 = vmatpush2.msra.mxu0 0.0
      %467 = vmatprep.subr.mxu0 0.0
      %468 = vmatpush2.msra.mxu0 0.0
      %469 = vmatprep.subr.mxu0 0.0
      %470 = vmatpush2.msra.mxu0 0.0
      %471 = vmatprep.subr.mxu0 0.0
      %472 = vmatpush2.msra.mxu0 0.0
      %473 = vmatprep.subr.mxu0 0.0
      %474 = vmatpush2.msra.mxu0 0.0
      %475 = vmatprep.subr.mxu0 0.0
      %476 = vmatpush2.msra.mxu0 0.0
      %477 = vmatprep.subr.mxu0 0.0
      %478 = vmatpush2.msra.mxu0 0.0
      %479 = vmatprep.subr.mxu0 0.0
      %480 = vmatpush2.msra.mxu0 0.0
      %481 = vmatprep.subr.mxu0 0.0
      %482 = vmatpush2.msra.mxu0 0.0
      %483 = vmatprep.subr.mxu0 0.0
      %484 = vmatpush2.msra.mxu0 0.0
      %485 = vmatprep.subr.mxu0 0.0
      %486 = vmatpush2.msra.mxu0 0.0
      %487 = vmatprep.subr.mxu0 0.0
      %488 = vmatpush2.msra.mxu0 0.0
      %489 = vmatprep.subr.mxu0 0.0
      %490 = vmatpush2.msra.mxu0 0.0
      %491 = vmatprep.subr.mxu0 0.0
      %492 = vmatpush2.msra.mxu0 0.0
      %493 = vmatprep.subr.mxu0 0.0
      %494 = vmatpush2.msra.mxu0 0.0
      %495 = vmatprep.subr.mxu0 0.0
      %496 = vmatpush2.msra.mxu0 0.0
      %497 = vmatprep.mubr.f32.mxu0 0.0
      %498 = vmatmul.mubr.f32.gmra.mxu0 %v407
      %v499 = vpop.f32.mrf.mxu0
      %v500 = vadd.f32 %v368, %v499
      %v501 = vpop.f32.mrf.mxu0
      %502 = vmatprep.mubr.f32.mxu0 0.0
      %503 = vmatmul.mubr.f32.gmra.mxu0 %v410
      %v504 = vpop.f32.mrf.mxu0
      %v505 = vadd.f32 %v373, %v504
      %v506 = vpop.f32.mrf.mxu0
      %507 = vmatprep.mubr.f32.mxu0 0.0
      %508 = vmatmul.mubr.f32.gmra.mxu0 %v413
      %v509 = vpop.f32.mrf.mxu0
      %v510 = vadd.f32 %v378, %v509
      %v511 = vpop.f32.mrf.mxu0
      %512 = vmatprep.mubr.f32.mxu0 0.0
      %513 = vmatmul.mubr.f32.gmra.mxu0 %v416
      %v514 = vpop.f32.mrf.mxu0
      %v515 = vadd.f32 %v383, %v514
      %v516 = vpop.f32.mrf.mxu0
      %517 = vmatprep.mubr.f32.mxu0 0.0
      %518 = vmatmul.mubr.f32.gmra.mxu0 %v419
      %v519 = vpop.f32.mrf.mxu0
      %v520 = vadd.f32 %v388, %v519
      %v521 = vpop.f32.mrf.mxu0
      %522 = vmatprep.mubr.f32.mxu0 0.0
      %523 = vmatmul.mubr.f32.gmra.mxu0 %v422
      %v524 = vpop.f32.mrf.mxu0
      %v525 = vadd.f32 %v393, %v524
      %v526 = vpop.f32.mrf.mxu0
      %527 = vmatprep.mubr.f32.mxu0 0.0
      %528 = vmatmul.mubr.f32.gmra.mxu0 %v425
      %v529 = vpop.f32.mrf.mxu0
      %v530 = vadd.f32 %v398, %v529
      %v531 = vpop.f32.mrf.mxu0
      %532 = vmatprep.mubr.f32.mxu0 0.0
      %533 = vmatmul.mubr.f32.gmra.mxu0 %v428
      %v534 = vpop.f32.mrf.mxu0
      %v535 = vadd.f32 %v403, %v534
      %v536 = vpop.f32.mrf.mxu0
      %537 = vdwg.mxu0
      %v538 = vld [vmem:[%s246 + $0x1] sm:$0xff]
      %v539 = vld [vmem:[%s246 + $0x11] sm:$0xff]
      %v540 = vld [vmem:[%s246 + $0x21] sm:$0xff]
      %v541 = vld [vmem:[%s246 + $0x31] sm:$0xff]
      %v542 = vld [vmem:[%s246 + $0x41] sm:$0xff]
      %v543 = vld [vmem:[%s246 + $0x51] sm:$0xff]
      %v544 = vld [vmem:[%s246 + $0x61] sm:$0xff]
      %v545 = vld [vmem:[%s246 + $0x71] sm:$0xff]
      %s546 = scalar_lea.vmem %s1, 8
      %v547 = vld [vmem:[%s546] sm:$0xf]
      %v549 = vsel %vm272, %v538, 0
      %v552 = vsel %vm272, %v539, 0
      %v555 = vsel %vm272, %v540, 0
      %v558 = vsel %vm272, %v541, 0
      %v561 = vsel %vm272, %v542, 0
      %v564 = vsel %vm272, %v543, 0
      %v567 = vsel %vm272, %v544, 0
      %v570 = vsel %vm272, %v545, 0
      %v573 = vsel %vm297, %v547, 0
      %575 = vmatprep.subr.mxu0 0.0
      %576 = vmatpush1.msra.mxu0 0.0
      %577 = vmatprep.subr.mxu0 0.0
      %578 = vmatpush1.msra.mxu0 0.0
      %579 = vmatprep.subr.mxu0 0.0
      %580 = vmatpush1.msra.mxu0 0.0
      %581 = vmatprep.subr.mxu0 0.0
      %582 = vmatpush1.msra.mxu0 0.0
      %583 = vmatprep.subr.mxu0 0.0
      %584 = vmatpush1.msra.mxu0 0.0
      %585 = vmatprep.subr.mxu0 0.0
      %586 = vmatpush1.msra.mxu0 0.0
      %587 = vmatprep.subr.mxu0 0.0
      %588 = vmatpush1.msra.mxu0 0.0
      %589 = vmatprep.subr.mxu0 0.0
      %590 = vmatpush1.msra.mxu0 0.0
      %591 = vmatprep.subr.mxu0 0.0
      %592 = vmatpush1.msra.mxu0 0.0
      %593 = vmatprep.subr.mxu0 0.0
      %594 = vmatpush1.msra.mxu0 0.0
      %595 = vmatprep.subr.mxu0 0.0
      %596 = vmatpush1.msra.mxu0 0.0
      %597 = vmatprep.subr.mxu0 0.0
      %598 = vmatpush1.msra.mxu0 0.0
      %599 = vmatprep.subr.mxu0 0.0
      %600 = vmatpush1.msra.mxu0 0.0
      %601 = vmatprep.subr.mxu0 0.0
      %602 = vmatpush1.msra.mxu0 0.0
      %603 = vmatprep.subr.mxu0 0.0
      %604 = vmatpush1.msra.mxu0 0.0
      %605 = vmatprep.subr.mxu0 0.0
      %606 = vmatpush1.msra.mxu0 %v573
      %607 = vmatprep.subr.mxu0 0.0
      %608 = vmatpush2.msra.mxu0 0.0
      %609 = vmatprep.subr.mxu0 0.0
      %610 = vmatpush2.msra.mxu0 0.0
      %611 = vmatprep.subr.mxu0 0.0
      %612 = vmatpush2.msra.mxu0 0.0
      %613 = vmatprep.subr.mxu0 0.0
      %614 = vmatpush2.msra.mxu0 0.0
      %615 = vmatprep.subr.mxu0 0.0
      %616 = vmatpush2.msra.mxu0 0.0
      %617 = vmatprep.subr.mxu0 0.0
      %618 = vmatpush2.msra.mxu0 0.0
      %619 = vmatprep.subr.mxu0 0.0
      %620 = vmatpush2.msra.mxu0 0.0
      %621 = vmatprep.subr.mxu0 0.0
      %622 = vmatpush2.msra.mxu0 0.0
      %623 = vmatprep.subr.mxu0 0.0
      %624 = vmatpush2.msra.mxu0 0.0
      %625 = vmatprep.subr.mxu0 0.0
      %626 = vmatpush2.msra.mxu0 0.0
      %627 = vmatprep.subr.mxu0 0.0
      %628 = vmatpush2.msra.mxu0 0.0
      %629 = vmatprep.subr.mxu0 0.0
      %630 = vmatpush2.msra.mxu0 0.0
      %631 = vmatprep.subr.mxu0 0.0
      %632 = vmatpush2.msra.mxu0 0.0
      %633 = vmatprep.subr.mxu0 0.0
      %634 = vmatpush2.msra.mxu0 0.0
      %635 = vmatprep.subr.mxu0 0.0
      %636 = vmatpush2.msra.mxu0 0.0
      %637 = vmatprep.subr.mxu0 0.0
      %638 = vmatpush2.msra.mxu0 0.0
      %639 = vmatprep.mubr.f32.mxu0 0.0
      %640 = vmatmul.mubr.f32.gmra.mxu0 %v549
      %v641 = vpop.f32.mrf.mxu0
      %v642 = vadd.f32 0.0, %v641
      %v643 = vpop.f32.mrf.mxu0
      %644 = vmatprep.mubr.f32.mxu0 0.0
      %645 = vmatmul.mubr.f32.gmra.mxu0 %v552
      %v646 = vpop.f32.mrf.mxu0
      %v647 = vadd.f32 0.0, %v646
      %v648 = vpop.f32.mrf.mxu0
      %649 = vmatprep.mubr.f32.mxu0 0.0
      %650 = vmatmul.mubr.f32.gmra.mxu0 %v555
      %v651 = vpop.f32.mrf.mxu0
      %v652 = vadd.f32 0.0, %v651
      %v653 = vpop.f32.mrf.mxu0
      %654 = vmatprep.mubr.f32.mxu0 0.0
      %655 = vmatmul.mubr.f32.gmra.mxu0 %v558
      %v656 = vpop.f32.mrf.mxu0
      %v657 = vadd.f32 0.0, %v656
      %v658 = vpop.f32.mrf.mxu0
      %659 = vmatprep.mubr.f32.mxu0 0.0
      %660 = vmatmul.mubr.f32.gmra.mxu0 %v561
      %v661 = vpop.f32.mrf.mxu0
      %v662 = vadd.f32 0.0, %v661
      %v663 = vpop.f32.mrf.mxu0
      %664 = vmatprep.mubr.f32.mxu0 0.0
      %665 = vmatmul.mubr.f32.gmra.mxu0 %v564
      %v666 = vpop.f32.mrf.mxu0
      %v667 = vadd.f32 0.0, %v666
      %v668 = vpop.f32.mrf.mxu0
      %669 = vmatprep.mubr.f32.mxu0 0.0
      %670 = vmatmul.mubr.f32.gmra.mxu0 %v567
      %v671 = vpop.f32.mrf.mxu0
      %v672 = vadd.f32 0.0, %v671
      %v673 = vpop.f32.mrf.mxu0
      %674 = vmatprep.mubr.f32.mxu0 0.0
      %675 = vmatmul.mubr.f32.gmra.mxu0 %v570
      %v676 = vpop.f32.mrf.mxu0
      %v677 = vadd.f32 0.0, %v676
      %v678 = vpop.f32.mrf.mxu0
      %679 = vdwg.mxu0
      %v680 = vadd.f32 %v500, %v642
      %v681 = vadd.f32 %v505, %v647
      %v682 = vadd.f32 %v510, %v652
      %v683 = vadd.f32 %v515, %v657
      %v684 = vadd.f32 %v520, %v662
      %v685 = vadd.f32 %v525, %v667
      %v686 = vadd.f32 %v530, %v672
      %v687 = vadd.f32 %v535, %v677
      %s688 = scalar_lea.vmem %s246, 288
      %v689 = vld [vmem:[%s688] sm:$0xff]
      %v690 = vld [vmem:[%s688 + $0x10] sm:$0xff]
      %v691 = vld [vmem:[%s688 + $0x20] sm:$0xff]
      %v692 = vld [vmem:[%s688 + $0x30] sm:$0xff]
      %v693 = vld [vmem:[%s688 + $0x40] sm:$0xff]
      %v694 = vld [vmem:[%s688 + $0x50] sm:$0xff]
      %v695 = vld [vmem:[%s688 + $0x60] sm:$0xff]
      %v696 = vld [vmem:[%s688 + $0x70] sm:$0xff]
      %s697 = scalar_lea.vmem %s1, 12
      %v698 = vld [vmem:[%s697] sm:$0xf]
      %v700 = vsel %vm272, %v689, 0
      %v703 = vsel %vm272, %v690, 0
      %v706 = vsel %vm272, %v691, 0
      %v709 = vsel %vm272, %v692, 0
      %v712 = vsel %vm272, %v693, 0
      %v715 = vsel %vm272, %v694, 0
      %v718 = vsel %vm272, %v695, 0
      %v721 = vsel %vm272, %v696, 0
      %v724 = vsel %vm297, %v698, 0
      %726 = vmatprep.subr.mxu0 0.0
      %727 = vmatpush1.msra.mxu0 0.0
      %728 = vmatprep.subr.mxu0 0.0
      %729 = vmatpush1.msra.mxu0 0.0
      %730 = vmatprep.subr.mxu0 0.0
      %731 = vmatpush1.msra.mxu0 0.0
      %732 = vmatprep.subr.mxu0 0.0
      %733 = vmatpush1.msra.mxu0 0.0
      %734 = vmatprep.subr.mxu0 0.0
      %735 = vmatpush1.msra.mxu0 0.0
      %736 = vmatprep.subr.mxu0 0.0
      %737 = vmatpush1.msra.mxu0 0.0
      %738 = vmatprep.subr.mxu0 0.0
      %739 = vmatpush1.msra.mxu0 0.0
      %740 = vmatprep.subr.mxu0 0.0
      %741 = vmatpush1.msra.mxu0 0.0
      %742 = vmatprep.subr.mxu0 0.0
      %743 = vmatpush1.msra.mxu0 0.0
      %744 = vmatprep.subr.mxu0 0.0
      %745 = vmatpush1.msra.mxu0 0.0
      %746 = vmatprep.subr.mxu0 0.0
      %747 = vmatpush1.msra.mxu0 0.0
      %748 = vmatprep.subr.mxu0 0.0
      %749 = vmatpush1.msra.mxu0 0.0
      %750 = vmatprep.subr.mxu0 0.0
      %751 = vmatpush1.msra.mxu0 0.0
      %752 = vmatprep.subr.mxu0 0.0
      %753 = vmatpush1.msra.mxu0 0.0
      %754 = vmatprep.subr.mxu0 0.0
      %755 = vmatpush1.msra.mxu0 0.0
      %756 = vmatprep.subr.mxu0 0.0
      %757 = vmatpush1.msra.mxu0 %v724
      %758 = vmatprep.subr.mxu0 0.0
      %759 = vmatpush2.msra.mxu0 0.0
      %760 = vmatprep.subr.mxu0 0.0
      %761 = vmatpush2.msra.mxu0 0.0
      %762 = vmatprep.subr.mxu0 0.0
      %763 = vmatpush2.msra.mxu0 0.0
      %764 = vmatprep.subr.mxu0 0.0
      %765 = vmatpush2.msra.mxu0 0.0
      %766 = vmatprep.subr.mxu0 0.0
      %767 = vmatpush2.msra.mxu0 0.0
      %768 = vmatprep.subr.mxu0 0.0
      %769 = vmatpush2.msra.mxu0 0.0
      %770 = vmatprep.subr.mxu0 0.0
      %771 = vmatpush2.msra.mxu0 0.0
      %772 = vmatprep.subr.mxu0 0.0
      %773 = vmatpush2.msra.mxu0 0.0
      %774 = vmatprep.subr.mxu0 0.0
      %775 = vmatpush2.msra.mxu0 0.0
      %776 = vmatprep.subr.mxu0 0.0
      %777 = vmatpush2.msra.mxu0 0.0
      %778 = vmatprep.subr.mxu0 0.0
      %779 = vmatpush2.msra.mxu0 0.0
      %780 = vmatprep.subr.mxu0 0.0
      %781 = vmatpush2.msra.mxu0 0.0
      %782 = vmatprep.subr.mxu0 0.0
      %783 = vmatpush2.msra.mxu0 0.0
      %784 = vmatprep.subr.mxu0 0.0
      %785 = vmatpush2.msra.mxu0 0.0
      %786 = vmatprep.subr.mxu0 0.0
      %787 = vmatpush2.msra.mxu0 0.0
      %788 = vmatprep.subr.mxu0 0.0
      %789 = vmatpush2.msra.mxu0 0.0
      %790 = vmatprep.mubr.f32.mxu0 0.0
      %791 = vmatmul.mubr.f32.gmra.mxu0 %v700
      %v792 = vpop.f32.mrf.mxu0
      %v793 = vadd.f32 0.0, %v792
      %v794 = vpop.f32.mrf.mxu0
      %795 = vmatprep.mubr.f32.mxu0 0.0
      %796 = vmatmul.mubr.f32.gmra.mxu0 %v703
      %v797 = vpop.f32.mrf.mxu0
      %v798 = vadd.f32 0.0, %v797
      %v799 = vpop.f32.mrf.mxu0
      %800 = vmatprep.mubr.f32.mxu0 0.0
      %801 = vmatmul.mubr.f32.gmra.mxu0 %v706
      %v802 = vpop.f32.mrf.mxu0
      %v803 = vadd.f32 0.0, %v802
      %v804 = vpop.f32.mrf.mxu0
      %805 = vmatprep.mubr.f32.mxu0 0.0
      %806 = vmatmul.mubr.f32.gmra.mxu0 %v709
      %v807 = vpop.f32.mrf.mxu0
      %v808 = vadd.f32 0.0, %v807
      %v809 = vpop.f32.mrf.mxu0
      %810 = vmatprep.mubr.f32.mxu0 0.0
      %811 = vmatmul.mubr.f32.gmra.mxu0 %v712
      %v812 = vpop.f32.mrf.mxu0
      %v813 = vadd.f32 0.0, %v812
      %v814 = vpop.f32.mrf.mxu0
      %815 = vmatprep.mubr.f32.mxu0 0.0
      %816 = vmatmul.mubr.f32.gmra.mxu0 %v715
      %v817 = vpop.f32.mrf.mxu0
      %v818 = vadd.f32 0.0, %v817
      %v819 = vpop.f32.mrf.mxu0
      %820 = vmatprep.mubr.f32.mxu0 0.0
      %821 = vmatmul.mubr.f32.gmra.mxu0 %v718
      %v822 = vpop.f32.mrf.mxu0
      %v823 = vadd.f32 0.0, %v822
      %v824 = vpop.f32.mrf.mxu0
      %825 = vmatprep.mubr.f32.mxu0 0.0
      %826 = vmatmul.mubr.f32.gmra.mxu0 %v721
      %v827 = vpop.f32.mrf.mxu0
      %v828 = vadd.f32 0.0, %v827
      %v829 = vpop.f32.mrf.mxu0
      %830 = vdwg.mxu0
      %v831 = vadd.f32 %v680, %v793
      %v832 = vadd.f32 %v681, %v798
      %v833 = vadd.f32 %v682, %v803
      %v834 = vadd.f32 %v683, %v808
      %v835 = vadd.f32 %v684, %v813
      %v836 = vadd.f32 %v685, %v818
      %v837 = vadd.f32 %v686, %v823
      %v838 = vadd.f32 %v687, %v828
      %s839 = scalar_lea.vmem %s246, 432
      %v840 = vld [vmem:[%s839] sm:$0xff]
      %v841 = vld [vmem:[%s839 + $0x10] sm:$0xff]
      %v842 = vld [vmem:[%s839 + $0x20] sm:$0xff]
      %v843 = vld [vmem:[%s839 + $0x30] sm:$0xff]
      %v844 = vld [vmem:[%s839 + $0x40] sm:$0xff]
      %v845 = vld [vmem:[%s839 + $0x50] sm:$0xff]
      %v846 = vld [vmem:[%s839 + $0x60] sm:$0xff]
      %v847 = vld [vmem:[%s839 + $0x70] sm:$0xff]
      %s848 = scalar_lea.vmem %s1, 16
      %v849 = vld [vmem:[%s848] sm:$0xf]
      %v851 = vsel %vm272, %v840, 0
      %v854 = vsel %vm272, %v841, 0
      %v857 = vsel %vm272, %v842, 0
      %v860 = vsel %vm272, %v843, 0
      %v863 = vsel %vm272, %v844, 0
      %v866 = vsel %vm272, %v845, 0
      %v869 = vsel %vm272, %v846, 0
      %v872 = vsel %vm272, %v847, 0
      %v875 = vsel %vm297, %v849, 0
      %877 = vmatprep.subr.mxu0 0.0
      %878 = vmatpush1.msra.mxu0 0.0
      %879 = vmatprep.subr.mxu0 0.0
      %880 = vmatpush1.msra.mxu0 0.0
      %881 = vmatprep.subr.mxu0 0.0
      %882 = vmatpush1.msra.mxu0 0.0
      %883 = vmatprep.subr.mxu0 0.0
      %884 = vmatpush1.msra.mxu0 0.0
      %885 = vmatprep.subr.mxu0 0.0
      %886 = vmatpush1.msra.mxu0 0.0
      %887 = vmatprep.subr.mxu0 0.0
      %888 = vmatpush1.msra.mxu0 0.0
      %889 = vmatprep.subr.mxu0 0.0
      %890 = vmatpush1.msra.mxu0 0.0
      %891 = vmatprep.subr.mxu0 0.0
      %892 = vmatpush1.msra.mxu0 0.0
      %893 = vmatprep.subr.mxu0 0.0
      %894 = vmatpush1.msra.mxu0 0.0
      %895 = vmatprep.subr.mxu0 0.0
      %896 = vmatpush1.msra.mxu0 0.0
      %897 = vmatprep.subr.mxu0 0.0
      %898 = vmatpush1.msra.mxu0 0.0
      %899 = vmatprep.subr.mxu0 0.0
      %900 = vmatpush1.msra.mxu0 0.0
      %901 = vmatprep.subr.mxu0 0.0
      %902 = vmatpush1.msra.mxu0 0.0
      %903 = vmatprep.subr.mxu0 0.0
      %904 = vmatpush1.msra.mxu0 0.0
      %905 = vmatprep.subr.mxu0 0.0
      %906 = vmatpush1.msra.mxu0 0.0
      %907 = vmatprep.subr.mxu0 0.0
      %908 = vmatpush1.msra.mxu0 %v875
      %909 = vmatprep.subr.mxu0 0.0
      %910 = vmatpush2.msra.mxu0 0.0
      %911 = vmatprep.subr.mxu0 0.0
      %912 = vmatpush2.msra.mxu0 0.0
      %913 = vmatprep.subr.mxu0 0.0
      %914 = vmatpush2.msra.mxu0 0.0
      %915 = vmatprep.subr.mxu0 0.0
      %916 = vmatpush2.msra.mxu0 0.0
      %917 = vmatprep.subr.mxu0 0.0
      %918 = vmatpush2.msra.mxu0 0.0
      %919 = vmatprep.subr.mxu0 0.0
      %920 = vmatpush2.msra.mxu0 0.0
      %921 = vmatprep.subr.mxu0 0.0
      %922 = vmatpush2.msra.mxu0 0.0
      %923 = vmatprep.subr.mxu0 0.0
      %924 = vmatpush2.msra.mxu0 0.0
      %925 = vmatprep.subr.mxu0 0.0
      %926 = vmatpush2.msra.mxu0 0.0
      %927 = vmatprep.subr.mxu0 0.0
      %928 = vmatpush2.msra.mxu0 0.0
      %929 = vmatprep.subr.mxu0 0.0
      %930 = vmatpush2.msra.mxu0 0.0
      %931 = vmatprep.subr.mxu0 0.0
      %932 = vmatpush2.msra.mxu0 0.0
      %933 = vmatprep.subr.mxu0 0.0
      %934 = vmatpush2.msra.mxu0 0.0
      %935 = vmatprep.subr.mxu0 0.0
      %936 = vmatpush2.msra.mxu0 0.0
      %937 = vmatprep.subr.mxu0 0.0
      %938 = vmatpush2.msra.mxu0 0.0
      %939 = vmatprep.subr.mxu0 0.0
      %940 = vmatpush2.msra.mxu0 0.0
      %941 = vmatprep.mubr.f32.mxu0 0.0
      %942 = vmatmul.mubr.f32.gmra.mxu0 %v851
      %v943 = vpop.f32.mrf.mxu0
      %v944 = vadd.f32 0.0, %v943
      %v945 = vpop.f32.mrf.mxu0
      %946 = vmatprep.mubr.f32.mxu0 0.0
      %947 = vmatmul.mubr.f32.gmra.mxu0 %v854
      %v948 = vpop.f32.mrf.mxu0
      %v949 = vadd.f32 0.0, %v948
      %v950 = vpop.f32.mrf.mxu0
      %951 = vmatprep.mubr.f32.mxu0 0.0
      %952 = vmatmul.mubr.f32.gmra.mxu0 %v857
      %v953 = vpop.f32.mrf.mxu0
      %v954 = vadd.f32 0.0, %v953
      %v955 = vpop.f32.mrf.mxu0
      %956 = vmatprep.mubr.f32.mxu0 0.0
      %957 = vmatmul.mubr.f32.gmra.mxu0 %v860
      %v958 = vpop.f32.mrf.mxu0
      %v959 = vadd.f32 0.0, %v958
      %v960 = vpop.f32.mrf.mxu0
      %961 = vmatprep.mubr.f32.mxu0 0.0
      %962 = vmatmul.mubr.f32.gmra.mxu0 %v863
      %v963 = vpop.f32.mrf.mxu0
      %v964 = vadd.f32 0.0, %v963
      %v965 = vpop.f32.mrf.mxu0
      %966 = vmatprep.mubr.f32.mxu0 0.0
      %967 = vmatmul.mubr.f32.gmra.mxu0 %v866
      %v968 = vpop.f32.mrf.mxu0
      %v969 = vadd.f32 0.0, %v968
      %v970 = vpop.f32.mrf.mxu0
      %971 = vmatprep.mubr.f32.mxu0 0.0
      %972 = vmatmul.mubr.f32.gmra.mxu0 %v869
      %v973 = vpop.f32.mrf.mxu0
      %v974 = vadd.f32 0.0, %v973
      %v975 = vpop.f32.mrf.mxu0
      %976 = vmatprep.mubr.f32.mxu0 0.0
      %977 = vmatmul.mubr.f32.gmra.mxu0 %v872
      %v978 = vpop.f32.mrf.mxu0
      %v979 = vadd.f32 0.0, %v978
      %v980 = vpop.f32.mrf.mxu0
      %981 = vdwg.mxu0
      %v982 = vadd.f32 %v831, %v944
      %v983 = vadd.f32 %v832, %v949
      %v984 = vadd.f32 %v833, %v954
      %v985 = vadd.f32 %v834, %v959
      %v986 = vadd.f32 %v835, %v964
      %v987 = vadd.f32 %v836, %v969
      %v988 = vadd.f32 %v837, %v974
      %v989 = vadd.f32 %v838, %v979
      %v990 = vld [vmem:[%s688 + $0x1] sm:$0xff]
      %v991 = vld [vmem:[%s688 + $0x11] sm:$0xff]
      %v992 = vld [vmem:[%s688 + $0x21] sm:$0xff]
      %v993 = vld [vmem:[%s688 + $0x31] sm:$0xff]
      %v994 = vld [vmem:[%s688 + $0x41] sm:$0xff]
      %v995 = vld [vmem:[%s688 + $0x51] sm:$0xff]
      %v996 = vld [vmem:[%s688 + $0x61] sm:$0xff]
      %v997 = vld [vmem:[%s688 + $0x71] sm:$0xff]
      %s998 = scalar_lea.vmem %s1, 20
      %v999 = vld [vmem:[%s998] sm:$0xf]
      %v1001 = vsel %vm272, %v990, 0
      %v1004 = vsel %vm272, %v991, 0
      %v1007 = vsel %vm272, %v992, 0
      %v1010 = vsel %vm272, %v993, 0
      %v1013 = vsel %vm272, %v994, 0
      %v1016 = vsel %vm272, %v995, 0
      %v1019 = vsel %vm272, %v996, 0
      %v1022 = vsel %vm272, %v997, 0
      %v1025 = vsel %vm297, %v999, 0
      %1027 = vmatprep.subr.mxu0 0.0
      %1028 = vmatpush1.msra.mxu0 0.0
      %1029 = vmatprep.subr.mxu0 0.0
      %1030 = vmatpush1.msra.mxu0 0.0
      %1031 = vmatprep.subr.mxu0 0.0
      %1032 = vmatpush1.msra.mxu0 0.0
      %1033 = vmatprep.subr.mxu0 0.0
      %1034 = vmatpush1.msra.mxu0 0.0
      %1035 = vmatprep.subr.mxu0 0.0
      %1036 = vmatpush1.msra.mxu0 0.0
      %1037 = vmatprep.subr.mxu0 0.0
      %1038 = vmatpush1.msra.mxu0 0.0
      %1039 = vmatprep.subr.mxu0 0.0
      %1040 = vmatpush1.msra.mxu0 0.0
      %1041 = vmatprep.subr.mxu0 0.0
      %1042 = vmatpush1.msra.mxu0 0.0
      %1043 = vmatprep.subr.mxu0 0.0
      %1044 = vmatpush1.msra.mxu0 0.0
      %1045 = vmatprep.subr.mxu0 0.0
      %1046 = vmatpush1.msra.mxu0 0.0
      %1047 = vmatprep.subr.mxu0 0.0
      %1048 = vmatpush1.msra.mxu0 0.0
      %1049 = vmatprep.subr.mxu0 0.0
      %1050 = vmatpush1.msra.mxu0 0.0
      %1051 = vmatprep.subr.mxu0 0.0
      %1052 = vmatpush1.msra.mxu0 0.0
      %1053 = vmatprep.subr.mxu0 0.0
      %1054 = vmatpush1.msra.mxu0 0.0
      %1055 = vmatprep.subr.mxu0 0.0
      %1056 = vmatpush1.msra.mxu0 0.0
      %1057 = vmatprep.subr.mxu0 0.0
      %1058 = vmatpush1.msra.mxu0 %v1025
      %1059 = vmatprep.subr.mxu0 0.0
      %1060 = vmatpush2.msra.mxu0 0.0
      %1061 = vmatprep.subr.mxu0 0.0
      %1062 = vmatpush2.msra.mxu0 0.0
      %1063 = vmatprep.subr.mxu0 0.0
      %1064 = vmatpush2.msra.mxu0 0.0
      %1065 = vmatprep.subr.mxu0 0.0
      %1066 = vmatpush2.msra.mxu0 0.0
      %1067 = vmatprep.subr.mxu0 0.0
      %1068 = vmatpush2.msra.mxu0 0.0
      %1069 = vmatprep.subr.mxu0 0.0
      %1070 = vmatpush2.msra.mxu0 0.0
      %1071 = vmatprep.subr.mxu0 0.0
      %1072 = vmatpush2.msra.mxu0 0.0
      %1073 = vmatprep.subr.mxu0 0.0
      %1074 = vmatpush2.msra.mxu0 0.0
      %1075 = vmatprep.subr.mxu0 0.0
      %1076 = vmatpush2.msra.mxu0 0.0
      %1077 = vmatprep.subr.mxu0 0.0
      %1078 = vmatpush2.msra.mxu0 0.0
      %1079 = vmatprep.subr.mxu0 0.0
      %1080 = vmatpush2.msra.mxu0 0.0
      %1081 = vmatprep.subr.mxu0 0.0
      %1082 = vmatpush2.msra.mxu0 0.0
      %1083 = vmatprep.subr.mxu0 0.0
      %1084 = vmatpush2.msra.mxu0 0.0
      %1085 = vmatprep.subr.mxu0 0.0
      %1086 = vmatpush2.msra.mxu0 0.0
      %1087 = vmatprep.subr.mxu0 0.0
      %1088 = vmatpush2.msra.mxu0 0.0
      %1089 = vmatprep.subr.mxu0 0.0
      %1090 = vmatpush2.msra.mxu0 0.0
      %1091 = vmatprep.mubr.f32.mxu0 0.0
      %1092 = vmatmul.mubr.f32.gmra.mxu0 %v1001
      %v1093 = vpop.f32.mrf.mxu0
      %v1094 = vadd.f32 0.0, %v1093
      %v1095 = vpop.f32.mrf.mxu0
      %1096 = vmatprep.mubr.f32.mxu0 0.0
      %1097 = vmatmul.mubr.f32.gmra.mxu0 %v1004
      %v1098 = vpop.f32.mrf.mxu0
      %v1099 = vadd.f32 0.0, %v1098
      %v1100 = vpop.f32.mrf.mxu0
      %1101 = vmatprep.mubr.f32.mxu0 0.0
      %1102 = vmatmul.mubr.f32.gmra.mxu0 %v1007
      %v1103 = vpop.f32.mrf.mxu0
      %v1104 = vadd.f32 0.0, %v1103
      %v1105 = vpop.f32.mrf.mxu0
      %1106 = vmatprep.mubr.f32.mxu0 0.0
      %1107 = vmatmul.mubr.f32.gmra.mxu0 %v1010
      %v1108 = vpop.f32.mrf.mxu0
      %v1109 = vadd.f32 0.0, %v1108
      %v1110 = vpop.f32.mrf.mxu0
      %1111 = vmatprep.mubr.f32.mxu0 0.0
      %1112 = vmatmul.mubr.f32.gmra.mxu0 %v1013
      %v1113 = vpop.f32.mrf.mxu0
      %v1114 = vadd.f32 0.0, %v1113
      %v1115 = vpop.f32.mrf.mxu0
      %1116 = vmatprep.mubr.f32.mxu0 0.0
      %1117 = vmatmul.mubr.f32.gmra.mxu0 %v1016
      %v1118 = vpop.f32.mrf.mxu0
      %v1119 = vadd.f32 0.0, %v1118
      %v1120 = vpop.f32.mrf.mxu0
      %1121 = vmatprep.mubr.f32.mxu0 0.0
      %1122 = vmatmul.mubr.f32.gmra.mxu0 %v1019
      %v1123 = vpop.f32.mrf.mxu0
      %v1124 = vadd.f32 0.0, %v1123
      %v1125 = vpop.f32.mrf.mxu0
      %1126 = vmatprep.mubr.f32.mxu0 0.0
      %1127 = vmatmul.mubr.f32.gmra.mxu0 %v1022
      %v1128 = vpop.f32.mrf.mxu0
      %v1129 = vadd.f32 0.0, %v1128
      %v1130 = vpop.f32.mrf.mxu0
      %1131 = vdwg.mxu0
      %v1132 = vadd.f32 %v982, %v1094
      %v1133 = vadd.f32 %v983, %v1099
      %v1134 = vadd.f32 %v984, %v1104
      %v1135 = vadd.f32 %v985, %v1109
      %v1136 = vadd.f32 %v986, %v1114
      %v1137 = vadd.f32 %v987, %v1119
      %v1138 = vadd.f32 %v988, %v1124
      %v1139 = vadd.f32 %v989, %v1129
      %s1140 = scalar_lea.vmem %s246, 16
      %v1141 = vld [vmem:[%s1140] sm:$0xff]
      %v1142 = vld [vmem:[%s1140 + $0x10] sm:$0xff]
      %v1143 = vld [vmem:[%s1140 + $0x20] sm:$0xff]
      %v1144 = vld [vmem:[%s1140 + $0x30] sm:$0xff]
      %v1145 = vld [vmem:[%s1140 + $0x40] sm:$0xff]
      %v1146 = vld [vmem:[%s1140 + $0x50] sm:$0xff]
      %v1147 = vld [vmem:[%s1140 + $0x60] sm:$0xff]
      %v1148 = vld [vmem:[%s1140 + $0x70] sm:$0xff]
      %s1149 = scalar_lea.vmem %s1, 24
      %v1150 = vld [vmem:[%s1149] sm:$0xf]
      %v1152 = vsel %vm272, %v1141, 0
      %v1155 = vsel %vm272, %v1142, 0
      %v1158 = vsel %vm272, %v1143, 0
      %v1161 = vsel %vm272, %v1144, 0
      %v1164 = vsel %vm272, %v1145, 0
      %v1167 = vsel %vm272, %v1146, 0
      %v1170 = vsel %vm272, %v1147, 0
      %v1173 = vsel %vm272, %v1148, 0
      %v1176 = vsel %vm297, %v1150, 0
      %1178 = vmatprep.subr.mxu0 0.0
      %1179 = vmatpush1.msra.mxu0 0.0
      %1180 = vmatprep.subr.mxu0 0.0
      %1181 = vmatpush1.msra.mxu0 0.0
      %1182 = vmatprep.subr.mxu0 0.0
      %1183 = vmatpush1.msra.mxu0 0.0
      %1184 = vmatprep.subr.mxu0 0.0
      %1185 = vmatpush1.msra.mxu0 0.0
      %1186 = vmatprep.subr.mxu0 0.0
      %1187 = vmatpush1.msra.mxu0 0.0
      %1188 = vmatprep.subr.mxu0 0.0
      %1189 = vmatpush1.msra.mxu0 0.0
      %1190 = vmatprep.subr.mxu0 0.0
      %1191 = vmatpush1.msra.mxu0 0.0
      %1192 = vmatprep.subr.mxu0 0.0
      %1193 = vmatpush1.msra.mxu0 0.0
      %1194 = vmatprep.subr.mxu0 0.0
      %1195 = vmatpush1.msra.mxu0 0.0
      %1196 = vmatprep.subr.mxu0 0.0
      %1197 = vmatpush1.msra.mxu0 0.0
      %1198 = vmatprep.subr.mxu0 0.0
      %1199 = vmatpush1.msra.mxu0 0.0
      %1200 = vmatprep.subr.mxu0 0.0
      %1201 = vmatpush1.msra.mxu0 0.0
      %1202 = vmatprep.subr.mxu0 0.0
      %1203 = vmatpush1.msra.mxu0 0.0
      %1204 = vmatprep.subr.mxu0 0.0
      %1205 = vmatpush1.msra.mxu0 0.0
      %1206 = vmatprep.subr.mxu0 0.0
      %1207 = vmatpush1.msra.mxu0 0.0
      %1208 = vmatprep.subr.mxu0 0.0
      %1209 = vmatpush1.msra.mxu0 %v1176
      %1210 = vmatprep.subr.mxu0 0.0
      %1211 = vmatpush2.msra.mxu0 0.0
      %1212 = vmatprep.subr.mxu0 0.0
      %1213 = vmatpush2.msra.mxu0 0.0
      %1214 = vmatprep.subr.mxu0 0.0
      %1215 = vmatpush2.msra.mxu0 0.0
      %1216 = vmatprep.subr.mxu0 0.0
      %1217 = vmatpush2.msra.mxu0 0.0
      %1218 = vmatprep.subr.mxu0 0.0
      %1219 = vmatpush2.msra.mxu0 0.0
      %1220 = vmatprep.subr.mxu0 0.0
      %1221 = vmatpush2.msra.mxu0 0.0
      %1222 = vmatprep.subr.mxu0 0.0
      %1223 = vmatpush2.msra.mxu0 0.0
      %1224 = vmatprep.subr.mxu0 0.0
      %1225 = vmatpush2.msra.mxu0 0.0
      %1226 = vmatprep.subr.mxu0 0.0
      %1227 = vmatpush2.msra.mxu0 0.0
      %1228 = vmatprep.subr.mxu0 0.0
      %1229 = vmatpush2.msra.mxu0 0.0
      %1230 = vmatprep.subr.mxu0 0.0
      %1231 = vmatpush2.msra.mxu0 0.0
      %1232 = vmatprep.subr.mxu0 0.0
      %1233 = vmatpush2.msra.mxu0 0.0
      %1234 = vmatprep.subr.mxu0 0.0
      %1235 = vmatpush2.msra.mxu0 0.0
      %1236 = vmatprep.subr.mxu0 0.0
      %1237 = vmatpush2.msra.mxu0 0.0
      %1238 = vmatprep.subr.mxu0 0.0
      %1239 = vmatpush2.msra.mxu0 0.0
      %1240 = vmatprep.subr.mxu0 0.0
      %1241 = vmatpush2.msra.mxu0 0.0
      %1242 = vmatprep.mubr.f32.mxu0 0.0
      %1243 = vmatmul.mubr.f32.gmra.mxu0 %v1152
      %v1244 = vpop.f32.mrf.mxu0
      %v1245 = vadd.f32 0.0, %v1244
      %v1246 = vpop.f32.mrf.mxu0
      %1247 = vmatprep.mubr.f32.mxu0 0.0
      %1248 = vmatmul.mubr.f32.gmra.mxu0 %v1155
      %v1249 = vpop.f32.mrf.mxu0
      %v1250 = vadd.f32 0.0, %v1249
      %v1251 = vpop.f32.mrf.mxu0
      %1252 = vmatprep.mubr.f32.mxu0 0.0
      %1253 = vmatmul.mubr.f32.gmra.mxu0 %v1158
      %v1254 = vpop.f32.mrf.mxu0
      %v1255 = vadd.f32 0.0, %v1254
      %v1256 = vpop.f32.mrf.mxu0
      %1257 = vmatprep.mubr.f32.mxu0 0.0
      %1258 = vmatmul.mubr.f32.gmra.mxu0 %v1161
      %v1259 = vpop.f32.mrf.mxu0
      %v1260 = vadd.f32 0.0, %v1259
      %v1261 = vpop.f32.mrf.mxu0
      %1262 = vmatprep.mubr.f32.mxu0 0.0
      %1263 = vmatmul.mubr.f32.gmra.mxu0 %v1164
      %v1264 = vpop.f32.mrf.mxu0
      %v1265 = vadd.f32 0.0, %v1264
      %v1266 = vpop.f32.mrf.mxu0
      %1267 = vmatprep.mubr.f32.mxu0 0.0
      %1268 = vmatmul.mubr.f32.gmra.mxu0 %v1167
      %v1269 = vpop.f32.mrf.mxu0
      %v1270 = vadd.f32 0.0, %v1269
      %v1271 = vpop.f32.mrf.mxu0
      %1272 = vmatprep.mubr.f32.mxu0 0.0
      %1273 = vmatmul.mubr.f32.gmra.mxu0 %v1170
      %v1274 = vpop.f32.mrf.mxu0
      %v1275 = vadd.f32 0.0, %v1274
      %v1276 = vpop.f32.mrf.mxu0
      %1277 = vmatprep.mubr.f32.mxu0 0.0
      %1278 = vmatmul.mubr.f32.gmra.mxu0 %v1173
      %v1279 = vpop.f32.mrf.mxu0
      %v1280 = vadd.f32 0.0, %v1279
      %v1281 = vpop.f32.mrf.mxu0
      %1282 = vdwg.mxu0
      %v1283 = vadd.f32 %v1132, %v1245
      %v1284 = vadd.f32 %v1133, %v1250
      %v1285 = vadd.f32 %v1134, %v1255
      %v1286 = vadd.f32 %v1135, %v1260
      %v1287 = vadd.f32 %v1136, %v1265
      %v1288 = vadd.f32 %v1137, %v1270
      %v1289 = vadd.f32 %v1138, %v1275
      %v1290 = vadd.f32 %v1139, %v1280
      %s1291 = scalar_lea.vmem %s246, 160
      %v1292 = vld [vmem:[%s1291] sm:$0xff]
      %v1293 = vld [vmem:[%s1291 + $0x10] sm:$0xff]
      %v1294 = vld [vmem:[%s1291 + $0x20] sm:$0xff]
      %v1295 = vld [vmem:[%s1291 + $0x30] sm:$0xff]
      %v1296 = vld [vmem:[%s1291 + $0x40] sm:$0xff]
      %v1297 = vld [vmem:[%s1291 + $0x50] sm:$0xff]
      %v1298 = vld [vmem:[%s1291 + $0x60] sm:$0xff]
      %v1299 = vld [vmem:[%s1291 + $0x70] sm:$0xff]
      %s1300 = scalar_lea.vmem %s1, 28
      %v1301 = vld [vmem:[%s1300] sm:$0xf]
      %v1303 = vsel %vm272, %v1292, 0
      %v1306 = vsel %vm272, %v1293, 0
      %v1309 = vsel %vm272, %v1294, 0
      %v1312 = vsel %vm272, %v1295, 0
      %v1315 = vsel %vm272, %v1296, 0
      %v1318 = vsel %vm272, %v1297, 0
      %v1321 = vsel %vm272, %v1298, 0
      %v1324 = vsel %vm272, %v1299, 0
      %v1327 = vsel %vm297, %v1301, 0
      %1329 = vmatprep.subr.mxu0 0.0
      %1330 = vmatpush1.msra.mxu0 0.0
      %1331 = vmatprep.subr.mxu0 0.0
      %1332 = vmatpush1.msra.mxu0 0.0
      %1333 = vmatprep.subr.mxu0 0.0
      %1334 = vmatpush1.msra.mxu0 0.0
      %1335 = vmatprep.subr.mxu0 0.0
      %1336 = vmatpush1.msra.mxu0 0.0
      %1337 = vmatprep.subr.mxu0 0.0
      %1338 = vmatpush1.msra.mxu0 0.0
      %1339 = vmatprep.subr.mxu0 0.0
      %1340 = vmatpush1.msra.mxu0 0.0
      %1341 = vmatprep.subr.mxu0 0.0
      %1342 = vmatpush1.msra.mxu0 0.0
      %1343 = vmatprep.subr.mxu0 0.0
      %1344 = vmatpush1.msra.mxu0 0.0
      %1345 = vmatprep.subr.mxu0 0.0
      %1346 = vmatpush1.msra.mxu0 0.0
      %1347 = vmatprep.subr.mxu0 0.0
      %1348 = vmatpush1.msra.mxu0 0.0
      %1349 = vmatprep.subr.mxu0 0.0
      %1350 = vmatpush1.msra.mxu0 0.0
      %1351 = vmatprep.subr.mxu0 0.0
      %1352 = vmatpush1.msra.mxu0 0.0
      %1353 = vmatprep.subr.mxu0 0.0
      %1354 = vmatpush1.msra.mxu0 0.0
      %1355 = vmatprep.subr.mxu0 0.0
      %1356 = vmatpush1.msra.mxu0 0.0
      %1357 = vmatprep.subr.mxu0 0.0
      %1358 = vmatpush1.msra.mxu0 0.0
      %1359 = vmatprep.subr.mxu0 0.0
      %1360 = vmatpush1.msra.mxu0 %v1327
      %1361 = vmatprep.subr.mxu0 0.0
      %1362 = vmatpush2.msra.mxu0 0.0
      %1363 = vmatprep.subr.mxu0 0.0
      %1364 = vmatpush2.msra.mxu0 0.0
      %1365 = vmatprep.subr.mxu0 0.0
      %1366 = vmatpush2.msra.mxu0 0.0
      %1367 = vmatprep.subr.mxu0 0.0
      %1368 = vmatpush2.msra.mxu0 0.0
      %1369 = vmatprep.subr.mxu0 0.0
      %1370 = vmatpush2.msra.mxu0 0.0
      %1371 = vmatprep.subr.mxu0 0.0
      %1372 = vmatpush2.msra.mxu0 0.0
      %1373 = vmatprep.subr.mxu0 0.0
      %1374 = vmatpush2.msra.mxu0 0.0
      %1375 = vmatprep.subr.mxu0 0.0
      %1376 = vmatpush2.msra.mxu0 0.0
      %1377 = vmatprep.subr.mxu0 0.0
      %1378 = vmatpush2.msra.mxu0 0.0
      %1379 = vmatprep.subr.mxu0 0.0
      %1380 = vmatpush2.msra.mxu0 0.0
      %1381 = vmatprep.subr.mxu0 0.0
      %1382 = vmatpush2.msra.mxu0 0.0
      %1383 = vmatprep.subr.mxu0 0.0
      %1384 = vmatpush2.msra.mxu0 0.0
      %1385 = vmatprep.subr.mxu0 0.0
      %1386 = vmatpush2.msra.mxu0 0.0
      %1387 = vmatprep.subr.mxu0 0.0
      %1388 = vmatpush2.msra.mxu0 0.0
      %1389 = vmatprep.subr.mxu0 0.0
      %1390 = vmatpush2.msra.mxu0 0.0
      %1391 = vmatprep.subr.mxu0 0.0
      %1392 = vmatpush2.msra.mxu0 0.0
      %1393 = vmatprep.mubr.f32.mxu0 0.0
      %1394 = vmatmul.mubr.f32.gmra.mxu0 %v1303
      %v1395 = vpop.f32.mrf.mxu0
      %v1396 = vadd.f32 0.0, %v1395
      %v1397 = vpop.f32.mrf.mxu0
      %1398 = vmatprep.mubr.f32.mxu0 0.0
      %1399 = vmatmul.mubr.f32.gmra.mxu0 %v1306
      %v1400 = vpop.f32.mrf.mxu0
      %v1401 = vadd.f32 0.0, %v1400
      %v1402 = vpop.f32.mrf.mxu0
      %1403 = vmatprep.mubr.f32.mxu0 0.0
      %1404 = vmatmul.mubr.f32.gmra.mxu0 %v1309
      %v1405 = vpop.f32.mrf.mxu0
      %v1406 = vadd.f32 0.0, %v1405
      %v1407 = vpop.f32.mrf.mxu0
      %1408 = vmatprep.mubr.f32.mxu0 0.0
      %1409 = vmatmul.mubr.f32.gmra.mxu0 %v1312
      %v1410 = vpop.f32.mrf.mxu0
      %v1411 = vadd.f32 0.0, %v1410
      %v1412 = vpop.f32.mrf.mxu0
      %1413 = vmatprep.mubr.f32.mxu0 0.0
      %1414 = vmatmul.mubr.f32.gmra.mxu0 %v1315
      %v1415 = vpop.f32.mrf.mxu0
      %v1416 = vadd.f32 0.0, %v1415
      %v1417 = vpop.f32.mrf.mxu0
      %1418 = vmatprep.mubr.f32.mxu0 0.0
      %1419 = vmatmul.mubr.f32.gmra.mxu0 %v1318
      %v1420 = vpop.f32.mrf.mxu0
      %v1421 = vadd.f32 0.0, %v1420
      %v1422 = vpop.f32.mrf.mxu0
      %1423 = vmatprep.mubr.f32.mxu0 0.0
      %1424 = vmatmul.mubr.f32.gmra.mxu0 %v1321
      %v1425 = vpop.f32.mrf.mxu0
      %v1426 = vadd.f32 0.0, %v1425
      %v1427 = vpop.f32.mrf.mxu0
      %1428 = vmatprep.mubr.f32.mxu0 0.0
      %1429 = vmatmul.mubr.f32.gmra.mxu0 %v1324
      %v1430 = vpop.f32.mrf.mxu0
      %v1431 = vadd.f32 0.0, %v1430
      %v1432 = vpop.f32.mrf.mxu0
      %1433 = vdwg.mxu0
      %v1434 = vadd.f32 %v1283, %v1396
      %v1435 = vadd.f32 %v1284, %v1401
      %v1436 = vadd.f32 %v1285, %v1406
      %v1437 = vadd.f32 %v1286, %v1411
      %v1438 = vadd.f32 %v1287, %v1416
      %v1439 = vadd.f32 %v1288, %v1421
      %v1440 = vadd.f32 %v1289, %v1426
      %v1441 = vadd.f32 %v1290, %v1431
      %v1442 = vld [vmem:[%s1140 + $0x1] sm:$0xff]
      %v1443 = vld [vmem:[%s1140 + $0x11] sm:$0xff]
      %v1444 = vld [vmem:[%s1140 + $0x21] sm:$0xff]
      %v1445 = vld [vmem:[%s1140 + $0x31] sm:$0xff]
      %v1446 = vld [vmem:[%s1140 + $0x41] sm:$0xff]
      %v1447 = vld [vmem:[%s1140 + $0x51] sm:$0xff]
      %v1448 = vld [vmem:[%s1140 + $0x61] sm:$0xff]
      %v1449 = vld [vmem:[%s1140 + $0x71] sm:$0xff]
      %s1450 = scalar_lea.vmem %s1, 32
      %v1451 = vld [vmem:[%s1450] sm:$0xf]
      %v1453 = vsel %vm272, %v1442, 0
      %v1456 = vsel %vm272, %v1443, 0
      %v1459 = vsel %vm272, %v1444, 0
      %v1462 = vsel %vm272, %v1445, 0
      %v1465 = vsel %vm272, %v1446, 0
      %v1468 = vsel %vm272, %v1447, 0
      %v1471 = vsel %vm272, %v1448, 0
      %v1474 = vsel %vm272, %v1449, 0
      %v1477 = vsel %vm297, %v1451, 0
      %1479 = vmatprep.subr.mxu0 0.0
      %1480 = vmatpush1.msra.mxu0 0.0
      %1481 = vmatprep.subr.mxu0 0.0
      %1482 = vmatpush1.msra.mxu0 0.0
      %1483 = vmatprep.subr.mxu0 0.0
      %1484 = vmatpush1.msra.mxu0 0.0
      %1485 = vmatprep.subr.mxu0 0.0
      %1486 = vmatpush1.msra.mxu0 0.0
      %1487 = vmatprep.subr.mxu0 0.0
      %1488 = vmatpush1.msra.mxu0 0.0
      %1489 = vmatprep.subr.mxu0 0.0
      %1490 = vmatpush1.msra.mxu0 0.0
      %1491 = vmatprep.subr.mxu0 0.0
      %1492 = vmatpush1.msra.mxu0 0.0
      %1493 = vmatprep.subr.mxu0 0.0
      %1494 = vmatpush1.msra.mxu0 0.0
      %1495 = vmatprep.subr.mxu0 0.0
      %1496 = vmatpush1.msra.mxu0 0.0
      %1497 = vmatprep.subr.mxu0 0.0
      %1498 = vmatpush1.msra.mxu0 0.0
      %1499 = vmatprep.subr.mxu0 0.0
      %1500 = vmatpush1.msra.mxu0 0.0
      %1501 = vmatprep.subr.mxu0 0.0
      %1502 = vmatpush1.msra.mxu0 0.0
      %1503 = vmatprep.subr.mxu0 0.0
      %1504 = vmatpush1.msra.mxu0 0.0
      %1505 = vmatprep.subr.mxu0 0.0
      %1506 = vmatpush1.msra.mxu0 0.0
      %1507 = vmatprep.subr.mxu0 0.0
      %1508 = vmatpush1.msra.mxu0 0.0
      %1509 = vmatprep.subr.mxu0 0.0
      %1510 = vmatpush1.msra.mxu0 %v1477
      %1511 = vmatprep.subr.mxu0 0.0
      %1512 = vmatpush2.msra.mxu0 0.0
      %1513 = vmatprep.subr.mxu0 0.0
      %1514 = vmatpush2.msra.mxu0 0.0
      %1515 = vmatprep.subr.mxu0 0.0
      %1516 = vmatpush2.msra.mxu0 0.0
      %1517 = vmatprep.subr.mxu0 0.0
      %1518 = vmatpush2.msra.mxu0 0.0
      %1519 = vmatprep.subr.mxu0 0.0
      %1520 = vmatpush2.msra.mxu0 0.0
      %1521 = vmatprep.subr.mxu0 0.0
      %1522 = vmatpush2.msra.mxu0 0.0
      %1523 = vmatprep.subr.mxu0 0.0
      %1524 = vmatpush2.msra.mxu0 0.0
      %1525 = vmatprep.subr.mxu0 0.0
      %1526 = vmatpush2.msra.mxu0 0.0
      %1527 = vmatprep.subr.mxu0 0.0
      %1528 = vmatpush2.msra.mxu0 0.0
      %1529 = vmatprep.subr.mxu0 0.0
      %1530 = vmatpush2.msra.mxu0 0.0
      %1531 = vmatprep.subr.mxu0 0.0
      %1532 = vmatpush2.msra.mxu0 0.0
      %1533 = vmatprep.subr.mxu0 0.0
      %1534 = vmatpush2.msra.mxu0 0.0
      %1535 = vmatprep.subr.mxu0 0.0
      %1536 = vmatpush2.msra.mxu0 0.0
      %1537 = vmatprep.subr.mxu0 0.0
      %1538 = vmatpush2.msra.mxu0 0.0
      %1539 = vmatprep.subr.mxu0 0.0
      %1540 = vmatpush2.msra.mxu0 0.0
      %1541 = vmatprep.subr.mxu0 0.0
      %1542 = vmatpush2.msra.mxu0 0.0
      %1543 = vmatprep.mubr.f32.mxu0 0.0
      %1544 = vmatmul.mubr.f32.gmra.mxu0 %v1453
      %v1545 = vpop.f32.mrf.mxu0
      %v1546 = vadd.f32 0.0, %v1545
      %v1547 = vpop.f32.mrf.mxu0
      %1548 = vmatprep.mubr.f32.mxu0 0.0
      %1549 = vmatmul.mubr.f32.gmra.mxu0 %v1456
      %v1550 = vpop.f32.mrf.mxu0
      %v1551 = vadd.f32 0.0, %v1550
      %v1552 = vpop.f32.mrf.mxu0
      %1553 = vmatprep.mubr.f32.mxu0 0.0
      %1554 = vmatmul.mubr.f32.gmra.mxu0 %v1459
      %v1555 = vpop.f32.mrf.mxu0
      %v1556 = vadd.f32 0.0, %v1555
      %v1557 = vpop.f32.mrf.mxu0
      %1558 = vmatprep.mubr.f32.mxu0 0.0
      %1559 = vmatmul.mubr.f32.gmra.mxu0 %v1462
      %v1560 = vpop.f32.mrf.mxu0
      %v1561 = vadd.f32 0.0, %v1560
      %v1562 = vpop.f32.mrf.mxu0
      %1563 = vmatprep.mubr.f32.mxu0 0.0
      %1564 = vmatmul.mubr.f32.gmra.mxu0 %v1465
      %v1565 = vpop.f32.mrf.mxu0
      %v1566 = vadd.f32 0.0, %v1565
      %v1567 = vpop.f32.mrf.mxu0
      %1568 = vmatprep.mubr.f32.mxu0 0.0
      %1569 = vmatmul.mubr.f32.gmra.mxu0 %v1468
      %v1570 = vpop.f32.mrf.mxu0
      %v1571 = vadd.f32 0.0, %v1570
      %v1572 = vpop.f32.mrf.mxu0
      %1573 = vmatprep.mubr.f32.mxu0 0.0
      %1574 = vmatmul.mubr.f32.gmra.mxu0 %v1471
      %v1575 = vpop.f32.mrf.mxu0
      %v1576 = vadd.f32 0.0, %v1575
      %v1577 = vpop.f32.mrf.mxu0
      %1578 = vmatprep.mubr.f32.mxu0 0.0
      %1579 = vmatmul.mubr.f32.gmra.mxu0 %v1474
      %v1580 = vpop.f32.mrf.mxu0
      %v1581 = vadd.f32 0.0, %v1580
      %v1582 = vpop.f32.mrf.mxu0
      %1583 = vdwg.mxu0
      %v1584 = vadd.f32 %v1434, %v1546
      %v1585 = vadd.f32 %v1435, %v1551
      %v1586 = vadd.f32 %v1436, %v1556
      %v1587 = vadd.f32 %v1437, %v1561
      %v1588 = vadd.f32 %v1438, %v1566
      %v1589 = vadd.f32 %v1439, %v1571
      %v1590 = vadd.f32 %v1440, %v1576
      %v1591 = vadd.f32 %v1441, %v1581
      %v1592 = vld [vmem:[%s2] sm:$0x1]
      %v1594 = vlaneseq
      %v1595 = vshrl.u32 %v1594, 7
      %v1596 = vsub.s32 0, %v1595
      %v1597 = vrot.slane %v1592, %v1596
      %v1599 = vadd.f32 %v1584, %v1597
      %v1600 = vadd.f32 %v1585, %v1597
      %v1601 = vadd.f32 %v1586, %v1597
      %v1602 = vadd.f32 %v1587, %v1597
      %v1603 = vadd.f32 %v1588, %v1597
      %v1604 = vadd.f32 %v1589, %v1597
      %v1605 = vadd.f32 %v1590, %v1597
      %v1606 = vadd.f32 %v1591, %v1597
      %v1607 = vmax.f32 %v1599, 0.0
      %v1608 = vmax.f32 %v1600, 0.0
      %v1609 = vmax.f32 %v1601, 0.0
      %v1610 = vmax.f32 %v1602, 0.0
      %v1611 = vmax.f32 %v1603, 0.0
      %v1612 = vmax.f32 %v1604, 0.0
      %v1613 = vmax.f32 %v1605, 0.0
      %v1614 = vmax.f32 %v1606, 0.0
      %vm1615 = vcmask 64512
      %1616 = vst.msk [vmem:[#allocation2] sm:$0xff] %vm1615, 0.0
      %1617 = vst.msk [vmem:[#allocation2 + $0x8] sm:$0xff] %vm1615, 0.0
      %1618 = vst.msk [vmem:[#allocation2 + $0x10] sm:$0xff] %vm1615, 0.0
      %1619 = vst.msk [vmem:[#allocation2 + $0x18] sm:$0xff] %vm1615, 0.0
      %1620 = vst.msk [vmem:[#allocation2 + $0x20] sm:$0xff] %vm1615, 0.0
      %1621 = vst.msk [vmem:[#allocation2 + $0x28] sm:$0xff] %vm1615, 0.0
      %1622 = vst.msk [vmem:[#allocation2 + $0x30] sm:$0xff] %vm1615, 0.0
      %1623 = vst.msk [vmem:[#allocation2 + $0x38] sm:$0xff] %vm1615, 0.0
      %1624 = vst.msk [vmem:[#allocation2 + $0x40] sm:$0xff] %vm1615, 0.0
      %1625 = vst.msk [vmem:[#allocation2 + $0x48] sm:$0xff] %vm1615, 0.0
      %1626 = vst.msk [vmem:[#allocation2 + $0x50] sm:$0xff] %vm1615, 0.0
      %1627 = vst.msk [vmem:[#allocation2 + $0x58] sm:$0xff] %vm1615, 0.0
      %1628 = vst.msk [vmem:[#allocation2 + $0x60] sm:$0xff] %vm1615, 0.0
      %1629 = vst.msk [vmem:[#allocation2 + $0x68] sm:$0xff] %vm1615, 0.0
      %1630 = vst.msk [vmem:[#allocation2 + $0x70] sm:$0xff] %vm1615, 0.0
      %1631 = vst.msk [vmem:[#allocation2 + $0x78] sm:$0xff] %vm1615, 0.0
      %1632 = vst.msk [vmem:[#allocation2 + $0x80] sm:$0xff] %vm1615, 0.0
      %1633 = vst.msk [vmem:[#allocation2 + $0x88] sm:$0xff] %vm1615, 0.0
      %1634 = vst.msk [vmem:[#allocation2 + $0x90] sm:$0xff] %vm1615, 0.0
      %1635 = vst.msk [vmem:[#allocation2 + $0x98] sm:$0xff] %vm1615, 0.0
      %1636 = vst.msk [vmem:[#allocation2 + $0xa0] sm:$0xff] %vm1615, 0.0
      %1637 = vst.msk [vmem:[#allocation2 + $0xa8] sm:$0xff] %vm1615, 0.0
      %1638 = vst.msk [vmem:[#allocation2 + $0xb0] sm:$0xff] %vm1615, 0.0
      %1639 = vst.msk [vmem:[#allocation2 + $0xb8] sm:$0xff] %vm1615, 0.0
      %1640 = vst.msk [vmem:[#allocation2 + $0xc0] sm:$0xff] %vm1615, 0.0
      %1641 = vst.msk [vmem:[#allocation2 + $0xc8] sm:$0xff] %vm1615, 0.0
      %1642 = vst.msk [vmem:[#allocation2 + $0xd0] sm:$0xff] %vm1615, 0.0
      %1643 = vst.msk [vmem:[#allocation2 + $0xd8] sm:$0xff] %vm1615, 0.0
      %1644 = vst.msk [vmem:[#allocation2 + $0xe0] sm:$0xff] %vm1615, 0.0
      %1645 = vst.msk [vmem:[#allocation2 + $0xe8] sm:$0xff] %vm1615, 0.0
      %s1646 = scalar_lea.vmem [#allocation2], 24
      %1647 = vst.msk [vmem:[%s1646 + $0x8] sm:$0xff] %vm1615, %v1607
      %1648 = vst.msk [vmem:[%s1646 + $0x20] sm:$0xff] %vm1615, %v1608
      %1649 = vst.msk [vmem:[%s1646 + $0x38] sm:$0xff] %vm1615, %v1609
      %1650 = vst.msk [vmem:[%s1646 + $0x50] sm:$0xff] %vm1615, %v1610
      %1651 = vst.msk [vmem:[%s1646 + $0x68] sm:$0xff] %vm1615, %v1611
      %1652 = vst.msk [vmem:[%s1646 + $0x80] sm:$0xff] %vm1615, %v1612
      %1653 = vst.msk [vmem:[%s1646 + $0x98] sm:$0xff] %vm1615, %v1613
      %1654 = vst.msk [vmem:[%s1646 + $0xb0] sm:$0xff] %vm1615, %v1614
      %v1655 = vld [vmem:[#allocation2 + $0x7] sm:$0xff]
      %v1656 = vld [vmem:[#allocation2 + $0x1f] sm:$0xff]
      %v1657 = vld [vmem:[#allocation2 + $0x37] sm:$0xff]
      %v1658 = vld [vmem:[#allocation2 + $0x4f] sm:$0xff]
      %v1659 = vld [vmem:[#allocation2 + $0x67] sm:$0xff]
      %v1660 = vld [vmem:[#allocation2 + $0x7f] sm:$0xff]
      %v1661 = vld [vmem:[#allocation2 + $0x97] sm:$0xff]
      %v1662 = vld [vmem:[#allocation2 + $0xaf] sm:$0xff]
      %v1663 = vld [vmem:[%s3] sm:$0xff]
      %v1664 = vld [vmem:[#allocation2 + $0x8] sm:$0xff]
      %v1665 = vld [vmem:[#allocation2 + $0x20] sm:$0xff]
      %v1666 = vld [vmem:[#allocation2 + $0x38] sm:$0xff]
      %v1667 = vld [vmem:[#allocation2 + $0x50] sm:$0xff]
      %v1668 = vld [vmem:[#allocation2 + $0x68] sm:$0xff]
      %v1669 = vld [vmem:[#allocation2 + $0x80] sm:$0xff]
      %v1670 = vld [vmem:[#allocation2 + $0x98] sm:$0xff]
      %v1671 = vld [vmem:[#allocation2 + $0xb0] sm:$0xff]
      %s1672 = scalar_lea.vmem %s3, 8
      %v1673 = vld [vmem:[%s1672] sm:$0xff]
      %v1675 = vsel %vm1615, %v1664, 0
      %v1678 = vsel %vm1615, %v1665, 0
      %v1681 = vsel %vm1615, %v1666, 0
      %v1684 = vsel %vm1615, %v1667, 0
      %v1687 = vsel %vm1615, %v1668, 0
      %v1690 = vsel %vm1615, %v1669, 0
      %v1693 = vsel %vm1615, %v1670, 0
      %v1696 = vsel %vm1615, %v1671, 0
      %1698 = vmatprep.subr.mxu0 0.0
      %1699 = vmatpush1.msra.mxu0 0.0
      %1700 = vmatprep.subr.mxu0 0.0
      %1701 = vmatpush1.msra.mxu0 0.0
      %1702 = vmatprep.subr.mxu0 0.0
      %1703 = vmatpush1.msra.mxu0 0.0
      %1704 = vmatprep.subr.mxu0 0.0
      %1705 = vmatpush1.msra.mxu0 0.0
      %1706 = vmatprep.subr.mxu0 0.0
      %1707 = vmatpush1.msra.mxu0 0.0
      %1708 = vmatprep.subr.mxu0 0.0
      %1709 = vmatpush1.msra.mxu0 0.0
      %1710 = vmatprep.subr.mxu0 0.0
      %1711 = vmatpush1.msra.mxu0 0.0
      %1712 = vmatprep.subr.mxu0 0.0
      %1713 = vmatpush1.msra.mxu0 0.0
      %1714 = vmatprep.subr.mxu0 0.0
      %1715 = vmatpush1.msra.mxu0 0.0
      %1716 = vmatprep.subr.mxu0 0.0
      %1717 = vmatpush1.msra.mxu0 0.0
      %1718 = vmatprep.subr.mxu0 0.0
      %1719 = vmatpush1.msra.mxu0 0.0
      %1720 = vmatprep.subr.mxu0 0.0
      %1721 = vmatpush1.msra.mxu0 0.0
      %1722 = vmatprep.subr.mxu0 0.0
      %1723 = vmatpush1.msra.mxu0 0.0
      %1724 = vmatprep.subr.mxu0 0.0
      %1725 = vmatpush1.msra.mxu0 0.0
      %1726 = vmatprep.subr.mxu0 0.0
      %1727 = vmatpush1.msra.mxu0 0.0
      %1728 = vmatprep.subr.mxu0 0.0
      %1729 = vmatpush1.msra.mxu0 %v1673
      %1730 = vmatprep.subr.mxu0 0.0
      %1731 = vmatpush2.msra.mxu0 0.0
      %1732 = vmatprep.subr.mxu0 0.0
      %1733 = vmatpush2.msra.mxu0 0.0
      %1734 = vmatprep.subr.mxu0 0.0
      %1735 = vmatpush2.msra.mxu0 0.0
      %1736 = vmatprep.subr.mxu0 0.0
      %1737 = vmatpush2.msra.mxu0 0.0
      %1738 = vmatprep.subr.mxu0 0.0
      %1739 = vmatpush2.msra.mxu0 0.0
      %1740 = vmatprep.subr.mxu0 0.0
      %1741 = vmatpush2.msra.mxu0 0.0
      %1742 = vmatprep.subr.mxu0 0.0
      %1743 = vmatpush2.msra.mxu0 0.0
      %1744 = vmatprep.subr.mxu0 0.0
      %1745 = vmatpush2.msra.mxu0 0.0
      %1746 = vmatprep.subr.mxu0 0.0
      %1747 = vmatpush2.msra.mxu0 0.0
      %1748 = vmatprep.subr.mxu0 0.0
      %1749 = vmatpush2.msra.mxu0 0.0
      %1750 = vmatprep.subr.mxu0 0.0
      %1751 = vmatpush2.msra.mxu0 0.0
      %1752 = vmatprep.subr.mxu0 0.0
      %1753 = vmatpush2.msra.mxu0 0.0
      %1754 = vmatprep.subr.mxu0 0.0
      %1755 = vmatpush2.msra.mxu0 0.0
      %1756 = vmatprep.subr.mxu0 0.0
      %1757 = vmatpush2.msra.mxu0 0.0
      %1758 = vmatprep.subr.mxu0 0.0
      %1759 = vmatpush2.msra.mxu0 0.0
      %1760 = vmatprep.subr.mxu0 0.0
      %1761 = vmatpush2.msra.mxu0 0.0
      %1762 = vmatprep.mubr.f32.mxu0 0.0
      %1763 = vmatmul.mubr.f32.gmra.mxu0 %v1675
      %v1764 = vpop.f32.mrf.mxu0
      %v1765 = vadd.f32 0.0, %v1764
      %v1766 = vpop.f32.mrf.mxu0
      %1767 = vmatprep.mubr.f32.mxu0 0.0
      %1768 = vmatmul.mubr.f32.gmra.mxu0 %v1678
      %v1769 = vpop.f32.mrf.mxu0
      %v1770 = vadd.f32 0.0, %v1769
      %v1771 = vpop.f32.mrf.mxu0
      %1772 = vmatprep.mubr.f32.mxu0 0.0
      %1773 = vmatmul.mubr.f32.gmra.mxu0 %v1681
      %v1774 = vpop.f32.mrf.mxu0
      %v1775 = vadd.f32 0.0, %v1774
      %v1776 = vpop.f32.mrf.mxu0
      %1777 = vmatprep.mubr.f32.mxu0 0.0
      %1778 = vmatmul.mubr.f32.gmra.mxu0 %v1684
      %v1779 = vpop.f32.mrf.mxu0
      %v1780 = vadd.f32 0.0, %v1779
      %v1781 = vpop.f32.mrf.mxu0
      %1782 = vmatprep.mubr.f32.mxu0 0.0
      %1783 = vmatmul.mubr.f32.gmra.mxu0 %v1687
      %v1784 = vpop.f32.mrf.mxu0
      %v1785 = vadd.f32 0.0, %v1784
      %v1786 = vpop.f32.mrf.mxu0
      %1787 = vmatprep.mubr.f32.mxu0 0.0
      %1788 = vmatmul.mubr.f32.gmra.mxu0 %v1690
      %v1789 = vpop.f32.mrf.mxu0
      %v1790 = vadd.f32 0.0, %v1789
      %v1791 = vpop.f32.mrf.mxu0
      %1792 = vmatprep.mubr.f32.mxu0 0.0
      %1793 = vmatmul.mubr.f32.gmra.mxu0 %v1693
      %v1794 = vpop.f32.mrf.mxu0
      %v1795 = vadd.f32 0.0, %v1794
      %v1796 = vpop.f32.mrf.mxu0
      %1797 = vmatprep.mubr.f32.mxu0 0.0
      %1798 = vmatmul.mubr.f32.gmra.mxu0 %v1696
      %v1799 = vpop.f32.mrf.mxu0
      %v1800 = vadd.f32 0.0, %v1799
      %v1801 = vpop.f32.mrf.mxu0
      %1802 = vdwg.mxu0
      %v1804 = vsel %vm1615, %v1655, 0
      %v1807 = vsel %vm1615, %v1656, 0
      %v1810 = vsel %vm1615, %v1657, 0
      %v1813 = vsel %vm1615, %v1658, 0
      %v1816 = vsel %vm1615, %v1659, 0
      %v1819 = vsel %vm1615, %v1660, 0
      %v1822 = vsel %vm1615, %v1661, 0
      %v1825 = vsel %vm1615, %v1662, 0
      %1827 = vmatprep.subr.mxu0 0.0
      %1828 = vmatpush1.msra.mxu0 0.0
      %1829 = vmatprep.subr.mxu0 0.0
      %1830 = vmatpush1.msra.mxu0 0.0
      %1831 = vmatprep.subr.mxu0 0.0
      %1832 = vmatpush1.msra.mxu0 0.0
      %1833 = vmatprep.subr.mxu0 0.0
      %1834 = vmatpush1.msra.mxu0 0.0
      %1835 = vmatprep.subr.mxu0 0.0
      %1836 = vmatpush1.msra.mxu0 0.0
      %1837 = vmatprep.subr.mxu0 0.0
      %1838 = vmatpush1.msra.mxu0 0.0
      %1839 = vmatprep.subr.mxu0 0.0
      %1840 = vmatpush1.msra.mxu0 0.0
      %1841 = vmatprep.subr.mxu0 0.0
      %1842 = vmatpush1.msra.mxu0 0.0
      %1843 = vmatprep.subr.mxu0 0.0
      %1844 = vmatpush1.msra.mxu0 0.0
      %1845 = vmatprep.subr.mxu0 0.0
      %1846 = vmatpush1.msra.mxu0 0.0
      %1847 = vmatprep.subr.mxu0 0.0
      %1848 = vmatpush1.msra.mxu0 0.0
      %1849 = vmatprep.subr.mxu0 0.0
      %1850 = vmatpush1.msra.mxu0 0.0
      %1851 = vmatprep.subr.mxu0 0.0
      %1852 = vmatpush1.msra.mxu0 0.0
      %1853 = vmatprep.subr.mxu0 0.0
      %1854 = vmatpush1.msra.mxu0 0.0
      %1855 = vmatprep.subr.mxu0 0.0
      %1856 = vmatpush1.msra.mxu0 0.0
      %1857 = vmatprep.subr.mxu0 0.0
      %1858 = vmatpush1.msra.mxu0 %v1663
      %1859 = vmatprep.subr.mxu0 0.0
      %1860 = vmatpush2.msra.mxu0 0.0
      %1861 = vmatprep.subr.mxu0 0.0
      %1862 = vmatpush2.msra.mxu0 0.0
      %1863 = vmatprep.subr.mxu0 0.0
      %1864 = vmatpush2.msra.mxu0 0.0
      %1865 = vmatprep.subr.mxu0 0.0
      %1866 = vmatpush2.msra.mxu0 0.0
      %1867 = vmatprep.subr.mxu0 0.0
      %1868 = vmatpush2.msra.mxu0 0.0
      %1869 = vmatprep.subr.mxu0 0.0
      %1870 = vmatpush2.msra.mxu0 0.0
      %1871 = vmatprep.subr.mxu0 0.0
      %1872 = vmatpush2.msra.mxu0 0.0
      %1873 = vmatprep.subr.mxu0 0.0
      %1874 = vmatpush2.msra.mxu0 0.0
      %1875 = vmatprep.subr.mxu0 0.0
      %1876 = vmatpush2.msra.mxu0 0.0
      %1877 = vmatprep.subr.mxu0 0.0
      %1878 = vmatpush2.msra.mxu0 0.0
      %1879 = vmatprep.subr.mxu0 0.0
      %1880 = vmatpush2.msra.mxu0 0.0
      %1881 = vmatprep.subr.mxu0 0.0
      %1882 = vmatpush2.msra.mxu0 0.0
      %1883 = vmatprep.subr.mxu0 0.0
      %1884 = vmatpush2.msra.mxu0 0.0
      %1885 = vmatprep.subr.mxu0 0.0
      %1886 = vmatpush2.msra.mxu0 0.0
      %1887 = vmatprep.subr.mxu0 0.0
      %1888 = vmatpush2.msra.mxu0 0.0
      %1889 = vmatprep.subr.mxu0 0.0
      %1890 = vmatpush2.msra.mxu0 0.0
      %1891 = vmatprep.mubr.f32.mxu0 0.0
      %1892 = vmatmul.mubr.f32.gmra.mxu0 %v1804
      %v1893 = vpop.f32.mrf.mxu0
      %v1894 = vadd.f32 %v1765, %v1893
      %v1895 = vpop.f32.mrf.mxu0
      %1896 = vmatprep.mubr.f32.mxu0 0.0
      %1897 = vmatmul.mubr.f32.gmra.mxu0 %v1807
      %v1898 = vpop.f32.mrf.mxu0
      %v1899 = vadd.f32 %v1770, %v1898
      %v1900 = vpop.f32.mrf.mxu0
      %1901 = vmatprep.mubr.f32.mxu0 0.0
      %1902 = vmatmul.mubr.f32.gmra.mxu0 %v1810
      %v1903 = vpop.f32.mrf.mxu0
      %v1904 = vadd.f32 %v1775, %v1903
      %v1905 = vpop.f32.mrf.mxu0
      %1906 = vmatprep.mubr.f32.mxu0 0.0
      %1907 = vmatmul.mubr.f32.gmra.mxu0 %v1813
      %v1908 = vpop.f32.mrf.mxu0
      %v1909 = vadd.f32 %v1780, %v1908
      %v1910 = vpop.f32.mrf.mxu0
      %1911 = vmatprep.mubr.f32.mxu0 0.0
      %1912 = vmatmul.mubr.f32.gmra.mxu0 %v1816
      %v1913 = vpop.f32.mrf.mxu0
      %v1914 = vadd.f32 %v1785, %v1913
      %v1915 = vpop.f32.mrf.mxu0
      %1916 = vmatprep.mubr.f32.mxu0 0.0
      %1917 = vmatmul.mubr.f32.gmra.mxu0 %v1819
      %v1918 = vpop.f32.mrf.mxu0
      %v1919 = vadd.f32 %v1790, %v1918
      %v1920 = vpop.f32.mrf.mxu0
      %1921 = vmatprep.mubr.f32.mxu0 0.0
      %1922 = vmatmul.mubr.f32.gmra.mxu0 %v1822
      %v1923 = vpop.f32.mrf.mxu0
      %v1924 = vadd.f32 %v1795, %v1923
      %v1925 = vpop.f32.mrf.mxu0
      %1926 = vmatprep.mubr.f32.mxu0 0.0
      %1927 = vmatmul.mubr.f32.gmra.mxu0 %v1825
      %v1928 = vpop.f32.mrf.mxu0
      %v1929 = vadd.f32 %v1800, %v1928
      %v1930 = vpop.f32.mrf.mxu0
      %1931 = vdwg.mxu0
      %v1932 = vld [vmem:[#allocation2 + $0x9] sm:$0xff]
      %v1933 = vld [vmem:[#allocation2 + $0x21] sm:$0xff]
      %v1934 = vld [vmem:[#allocation2 + $0x39] sm:$0xff]
      %v1935 = vld [vmem:[#allocation2 + $0x51] sm:$0xff]
      %v1936 = vld [vmem:[#allocation2 + $0x69] sm:$0xff]
      %v1937 = vld [vmem:[#allocation2 + $0x81] sm:$0xff]
      %v1938 = vld [vmem:[#allocation2 + $0x99] sm:$0xff]
      %v1939 = vld [vmem:[#allocation2 + $0xb1] sm:$0xff]
      %s1940 = scalar_lea.vmem %s3, 16
      %v1941 = vld [vmem:[%s1940] sm:$0xff]
      %v1943 = vsel %vm1615, %v1932, 0
      %v1946 = vsel %vm1615, %v1933, 0
      %v1949 = vsel %vm1615, %v1934, 0
      %v1952 = vsel %vm1615, %v1935, 0
      %v1955 = vsel %vm1615, %v1936, 0
      %v1958 = vsel %vm1615, %v1937, 0
      %v1961 = vsel %vm1615, %v1938, 0
      %v1964 = vsel %vm1615, %v1939, 0
      %1966 = vmatprep.subr.mxu0 0.0
      %1967 = vmatpush1.msra.mxu0 0.0
      %1968 = vmatprep.subr.mxu0 0.0
      %1969 = vmatpush1.msra.mxu0 0.0
      %1970 = vmatprep.subr.mxu0 0.0
      %1971 = vmatpush1.msra.mxu0 0.0
      %1972 = vmatprep.subr.mxu0 0.0
      %1973 = vmatpush1.msra.mxu0 0.0
      %1974 = vmatprep.subr.mxu0 0.0
      %1975 = vmatpush1.msra.mxu0 0.0
      %1976 = vmatprep.subr.mxu0 0.0
      %1977 = vmatpush1.msra.mxu0 0.0
      %1978 = vmatprep.subr.mxu0 0.0
      %1979 = vmatpush1.msra.mxu0 0.0
      %1980 = vmatprep.subr.mxu0 0.0
      %1981 = vmatpush1.msra.mxu0 0.0
      %1982 = vmatprep.subr.mxu0 0.0
      %1983 = vmatpush1.msra.mxu0 0.0
      %1984 = vmatprep.subr.mxu0 0.0
      %1985 = vmatpush1.msra.mxu0 0.0
      %1986 = vmatprep.subr.mxu0 0.0
      %1987 = vmatpush1.msra.mxu0 0.0
      %1988 = vmatprep.subr.mxu0 0.0
      %1989 = vmatpush1.msra.mxu0 0.0
      %1990 = vmatprep.subr.mxu0 0.0
      %1991 = vmatpush1.msra.mxu0 0.0
      %1992 = vmatprep.subr.mxu0 0.0
      %1993 = vmatpush1.msra.mxu0 0.0
      %1994 = vmatprep.subr.mxu0 0.0
      %1995 = vmatpush1.msra.mxu0 0.0
      %1996 = vmatprep.subr.mxu0 0.0
      %1997 = vmatpush1.msra.mxu0 %v1941
      %1998 = vmatprep.subr.mxu0 0.0
      %1999 = vmatpush2.msra.mxu0 0.0
      %2000 = vmatprep.subr.mxu0 0.0
      %2001 = vmatpush2.msra.mxu0 0.0
      %2002 = vmatprep.subr.mxu0 0.0
      %2003 = vmatpush2.msra.mxu0 0.0
      %2004 = vmatprep.subr.mxu0 0.0
      %2005 = vmatpush2.msra.mxu0 0.0
      %2006 = vmatprep.subr.mxu0 0.0
      %2007 = vmatpush2.msra.mxu0 0.0
      %2008 = vmatprep.subr.mxu0 0.0
      %2009 = vmatpush2.msra.mxu0 0.0
      %2010 = vmatprep.subr.mxu0 0.0
      %2011 = vmatpush2.msra.mxu0 0.0
      %2012 = vmatprep.subr.mxu0 0.0
      %2013 = vmatpush2.msra.mxu0 0.0
      %2014 = vmatprep.subr.mxu0 0.0
      %2015 = vmatpush2.msra.mxu0 0.0
      %2016 = vmatprep.subr.mxu0 0.0
      %2017 = vmatpush2.msra.mxu0 0.0
      %2018 = vmatprep.subr.mxu0 0.0
      %2019 = vmatpush2.msra.mxu0 0.0
      %2020 = vmatprep.subr.mxu0 0.0
      %2021 = vmatpush2.msra.mxu0 0.0
      %2022 = vmatprep.subr.mxu0 0.0
      %2023 = vmatpush2.msra.mxu0 0.0
      %2024 = vmatprep.subr.mxu0 0.0
      %2025 = vmatpush2.msra.mxu0 0.0
      %2026 = vmatprep.subr.mxu0 0.0
      %2027 = vmatpush2.msra.mxu0 0.0
      %2028 = vmatprep.subr.mxu0 0.0
      %2029 = vmatpush2.msra.mxu0 0.0
      %2030 = vmatprep.mubr.f32.mxu0 0.0
      %2031 = vmatmul.mubr.f32.gmra.mxu0 %v1943
      %v2032 = vpop.f32.mrf.mxu0
      %v2033 = vadd.f32 0.0, %v2032
      %v2034 = vpop.f32.mrf.mxu0
      %2035 = vmatprep.mubr.f32.mxu0 0.0
      %2036 = vmatmul.mubr.f32.gmra.mxu0 %v1946
      %v2037 = vpop.f32.mrf.mxu0
      %v2038 = vadd.f32 0.0, %v2037
      %v2039 = vpop.f32.mrf.mxu0
      %2040 = vmatprep.mubr.f32.mxu0 0.0
      %2041 = vmatmul.mubr.f32.gmra.mxu0 %v1949
      %v2042 = vpop.f32.mrf.mxu0
      %v2043 = vadd.f32 0.0, %v2042
      %v2044 = vpop.f32.mrf.mxu0
      %2045 = vmatprep.mubr.f32.mxu0 0.0
      %2046 = vmatmul.mubr.f32.gmra.mxu0 %v1952
      %v2047 = vpop.f32.mrf.mxu0
      %v2048 = vadd.f32 0.0, %v2047
      %v2049 = vpop.f32.mrf.mxu0
      %2050 = vmatprep.mubr.f32.mxu0 0.0
      %2051 = vmatmul.mubr.f32.gmra.mxu0 %v1955
      %v2052 = vpop.f32.mrf.mxu0
      %v2053 = vadd.f32 0.0, %v2052
      %v2054 = vpop.f32.mrf.mxu0
      %2055 = vmatprep.mubr.f32.mxu0 0.0
      %2056 = vmatmul.mubr.f32.gmra.mxu0 %v1958
      %v2057 = vpop.f32.mrf.mxu0
      %v2058 = vadd.f32 0.0, %v2057
      %v2059 = vpop.f32.mrf.mxu0
      %2060 = vmatprep.mubr.f32.mxu0 0.0
      %2061 = vmatmul.mubr.f32.gmra.mxu0 %v1961
      %v2062 = vpop.f32.mrf.mxu0
      %v2063 = vadd.f32 0.0, %v2062
      %v2064 = vpop.f32.mrf.mxu0
      %2065 = vmatprep.mubr.f32.mxu0 0.0
      %2066 = vmatmul.mubr.f32.gmra.mxu0 %v1964
      %v2067 = vpop.f32.mrf.mxu0
      %v2068 = vadd.f32 0.0, %v2067
      %v2069 = vpop.f32.mrf.mxu0
      %2070 = vdwg.mxu0
      %v2071 = vadd.f32 %v1894, %v2033
      %v2072 = vadd.f32 %v1899, %v2038
      %v2073 = vadd.f32 %v1904, %v2043
      %v2074 = vadd.f32 %v1909, %v2048
      %v2075 = vadd.f32 %v1914, %v2053
      %v2076 = vadd.f32 %v1919, %v2058
      %v2077 = vadd.f32 %v1924, %v2063
      %v2078 = vadd.f32 %v1929, %v2068
      %v2079 = vld [vmem:[%s1646 + $0x7] sm:$0xff]
      %v2080 = vld [vmem:[%s1646 + $0x1f] sm:$0xff]
      %v2081 = vld [vmem:[%s1646 + $0x37] sm:$0xff]
      %v2082 = vld [vmem:[%s1646 + $0x4f] sm:$0xff]
      %v2083 = vld [vmem:[%s1646 + $0x67] sm:$0xff]
      %v2084 = vld [vmem:[%s1646 + $0x7f] sm:$0xff]
      %v2085 = vld [vmem:[%s1646 + $0x97] sm:$0xff]
      %v2086 = vld [vmem:[%s1646 + $0xaf] sm:$0xff]
      %s2087 = scalar_lea.vmem %s3, 24
      %v2088 = vld [vmem:[%s2087] sm:$0xff]
      %v2090 = vsel %vm1615, %v2079, 0
      %v2093 = vsel %vm1615, %v2080, 0
      %v2096 = vsel %vm1615, %v2081, 0
      %v2099 = vsel %vm1615, %v2082, 0
      %v2102 = vsel %vm1615, %v2083, 0
      %v2105 = vsel %vm1615, %v2084, 0
      %v2108 = vsel %vm1615, %v2085, 0
      %v2111 = vsel %vm1615, %v2086, 0
      %2113 = vmatprep.subr.mxu0 0.0
      %2114 = vmatpush1.msra.mxu0 0.0
      %2115 = vmatprep.subr.mxu0 0.0
      %2116 = vmatpush1.msra.mxu0 0.0
      %2117 = vmatprep.subr.mxu0 0.0
      %2118 = vmatpush1.msra.mxu0 0.0
      %2119 = vmatprep.subr.mxu0 0.0
      %2120 = vmatpush1.msra.mxu0 0.0
      %2121 = vmatprep.subr.mxu0 0.0
      %2122 = vmatpush1.msra.mxu0 0.0
      %2123 = vmatprep.subr.mxu0 0.0
      %2124 = vmatpush1.msra.mxu0 0.0
      %2125 = vmatprep.subr.mxu0 0.0
      %2126 = vmatpush1.msra.mxu0 0.0
      %2127 = vmatprep.subr.mxu0 0.0
      %2128 = vmatpush1.msra.mxu0 0.0
      %2129 = vmatprep.subr.mxu0 0.0
      %2130 = vmatpush1.msra.mxu0 0.0
      %2131 = vmatprep.subr.mxu0 0.0
      %2132 = vmatpush1.msra.mxu0 0.0
      %2133 = vmatprep.subr.mxu0 0.0
      %2134 = vmatpush1.msra.mxu0 0.0
      %2135 = vmatprep.subr.mxu0 0.0
      %2136 = vmatpush1.msra.mxu0 0.0
      %2137 = vmatprep.subr.mxu0 0.0
      %2138 = vmatpush1.msra.mxu0 0.0
      %2139 = vmatprep.subr.mxu0 0.0
      %2140 = vmatpush1.msra.mxu0 0.0
      %2141 = vmatprep.subr.mxu0 0.0
      %2142 = vmatpush1.msra.mxu0 0.0
      %2143 = vmatprep.subr.mxu0 0.0
      %2144 = vmatpush1.msra.mxu0 %v2088
      %2145 = vmatprep.subr.mxu0 0.0
      %2146 = vmatpush2.msra.mxu0 0.0
      %2147 = vmatprep.subr.mxu0 0.0
      %2148 = vmatpush2.msra.mxu0 0.0
      %2149 = vmatprep.subr.mxu0 0.0
      %2150 = vmatpush2.msra.mxu0 0.0
      %2151 = vmatprep.subr.mxu0 0.0
      %2152 = vmatpush2.msra.mxu0 0.0
      %2153 = vmatprep.subr.mxu0 0.0
      %2154 = vmatpush2.msra.mxu0 0.0
      %2155 = vmatprep.subr.mxu0 0.0
      %2156 = vmatpush2.msra.mxu0 0.0
      %2157 = vmatprep.subr.mxu0 0.0
      %2158 = vmatpush2.msra.mxu0 0.0
      %2159 = vmatprep.subr.mxu0 0.0
      %2160 = vmatpush2.msra.mxu0 0.0
      %2161 = vmatprep.subr.mxu0 0.0
      %2162 = vmatpush2.msra.mxu0 0.0
      %2163 = vmatprep.subr.mxu0 0.0
      %2164 = vmatpush2.msra.mxu0 0.0
      %2165 = vmatprep.subr.mxu0 0.0
      %2166 = vmatpush2.msra.mxu0 0.0
      %2167 = vmatprep.subr.mxu0 0.0
      %2168 = vmatpush2.msra.mxu0 0.0
      %2169 = vmatprep.subr.mxu0 0.0
      %2170 = vmatpush2.msra.mxu0 0.0
      %2171 = vmatprep.subr.mxu0 0.0
      %2172 = vmatpush2.msra.mxu0 0.0
      %2173 = vmatprep.subr.mxu0 0.0
      %2174 = vmatpush2.msra.mxu0 0.0
      %2175 = vmatprep.subr.mxu0 0.0
      %2176 = vmatpush2.msra.mxu0 0.0
      %2177 = vmatprep.mubr.f32.mxu0 0.0
      %2178 = vmatmul.mubr.f32.gmra.mxu0 %v2090
      %v2179 = vpop.f32.mrf.mxu0
      %v2180 = vadd.f32 0.0, %v2179
      %v2181 = vpop.f32.mrf.mxu0
      %2182 = vmatprep.mubr.f32.mxu0 0.0
      %2183 = vmatmul.mubr.f32.gmra.mxu0 %v2093
      %v2184 = vpop.f32.mrf.mxu0
      %v2185 = vadd.f32 0.0, %v2184
      %v2186 = vpop.f32.mrf.mxu0
      %2187 = vmatprep.mubr.f32.mxu0 0.0
      %2188 = vmatmul.mubr.f32.gmra.mxu0 %v2096
      %v2189 = vpop.f32.mrf.mxu0
      %v2190 = vadd.f32 0.0, %v2189
      %v2191 = vpop.f32.mrf.mxu0
      %2192 = vmatprep.mubr.f32.mxu0 0.0
      %2193 = vmatmul.mubr.f32.gmra.mxu0 %v2099
      %v2194 = vpop.f32.mrf.mxu0
      %v2195 = vadd.f32 0.0, %v2194
      %v2196 = vpop.f32.mrf.mxu0
      %2197 = vmatprep.mubr.f32.mxu0 0.0
      %2198 = vmatmul.mubr.f32.gmra.mxu0 %v2102
      %v2199 = vpop.f32.mrf.mxu0
      %v2200 = vadd.f32 0.0, %v2199
      %v2201 = vpop.f32.mrf.mxu0
      %2202 = vmatprep.mubr.f32.mxu0 0.0
      %2203 = vmatmul.mubr.f32.gmra.mxu0 %v2105
      %v2204 = vpop.f32.mrf.mxu0
      %v2205 = vadd.f32 0.0, %v2204
      %v2206 = vpop.f32.mrf.mxu0
      %2207 = vmatprep.mubr.f32.mxu0 0.0
      %2208 = vmatmul.mubr.f32.gmra.mxu0 %v2108
      %v2209 = vpop.f32.mrf.mxu0
      %v2210 = vadd.f32 0.0, %v2209
      %v2211 = vpop.f32.mrf.mxu0
      %2212 = vmatprep.mubr.f32.mxu0 0.0
      %2213 = vmatmul.mubr.f32.gmra.mxu0 %v2111
      %v2214 = vpop.f32.mrf.mxu0
      %v2215 = vadd.f32 0.0, %v2214
      %v2216 = vpop.f32.mrf.mxu0
      %2217 = vdwg.mxu0
      %v2218 = vadd.f32 %v2071, %v2180
      %v2219 = vadd.f32 %v2072, %v2185
      %v2220 = vadd.f32 %v2073, %v2190
      %v2221 = vadd.f32 %v2074, %v2195
      %v2222 = vadd.f32 %v2075, %v2200
      %v2223 = vadd.f32 %v2076, %v2205
      %v2224 = vadd.f32 %v2077, %v2210
      %v2225 = vadd.f32 %v2078, %v2215
      %v2226 = vld [vmem:[%s1646 + $0x8] sm:$0xff]
      %v2227 = vld [vmem:[%s1646 + $0x20] sm:$0xff]
      %v2228 = vld [vmem:[%s1646 + $0x38] sm:$0xff]
      %v2229 = vld [vmem:[%s1646 + $0x50] sm:$0xff]
      %v2230 = vld [vmem:[%s1646 + $0x68] sm:$0xff]
      %v2231 = vld [vmem:[%s1646 + $0x80] sm:$0xff]
      %v2232 = vld [vmem:[%s1646 + $0x98] sm:$0xff]
      %v2233 = vld [vmem:[%s1646 + $0xb0] sm:$0xff]
      %s2234 = scalar_lea.vmem %s3, 32
      %v2235 = vld [vmem:[%s2234] sm:$0xff]
      %v2237 = vsel %vm1615, %v2226, 0
      %v2240 = vsel %vm1615, %v2227, 0
      %v2243 = vsel %vm1615, %v2228, 0
      %v2246 = vsel %vm1615, %v2229, 0
      %v2249 = vsel %vm1615, %v2230, 0
      %v2252 = vsel %vm1615, %v2231, 0
      %v2255 = vsel %vm1615, %v2232, 0
      %v2258 = vsel %vm1615, %v2233, 0
      %2260 = vmatprep.subr.mxu0 0.0
      %2261 = vmatpush1.msra.mxu0 0.0
      %2262 = vmatprep.subr.mxu0 0.0
      %2263 = vmatpush1.msra.mxu0 0.0
      %2264 = vmatprep.subr.mxu0 0.0
      %2265 = vmatpush1.msra.mxu0 0.0
      %2266 = vmatprep.subr.mxu0 0.0
      %2267 = vmatpush1.msra.mxu0 0.0
      %2268 = vmatprep.subr.mxu0 0.0
      %2269 = vmatpush1.msra.mxu0 0.0
      %2270 = vmatprep.subr.mxu0 0.0
      %2271 = vmatpush1.msra.mxu0 0.0
      %2272 = vmatprep.subr.mxu0 0.0
      %2273 = vmatpush1.msra.mxu0 0.0
      %2274 = vmatprep.subr.mxu0 0.0
      %2275 = vmatpush1.msra.mxu0 0.0
      %2276 = vmatprep.subr.mxu0 0.0
      %2277 = vmatpush1.msra.mxu0 0.0
      %2278 = vmatprep.subr.mxu0 0.0
      %2279 = vmatpush1.msra.mxu0 0.0
      %2280 = vmatprep.subr.mxu0 0.0
      %2281 = vmatpush1.msra.mxu0 0.0
      %2282 = vmatprep.subr.mxu0 0.0
      %2283 = vmatpush1.msra.mxu0 0.0
      %2284 = vmatprep.subr.mxu0 0.0
      %2285 = vmatpush1.msra.mxu0 0.0
      %2286 = vmatprep.subr.mxu0 0.0
      %2287 = vmatpush1.msra.mxu0 0.0
      %2288 = vmatprep.subr.mxu0 0.0
      %2289 = vmatpush1.msra.mxu0 0.0
      %2290 = vmatprep.subr.mxu0 0.0
      %2291 = vmatpush1.msra.mxu0 %v2235
      %2292 = vmatprep.subr.mxu0 0.0
      %2293 = vmatpush2.msra.mxu0 0.0
      %2294 = vmatprep.subr.mxu0 0.0
      %2295 = vmatpush2.msra.mxu0 0.0
      %2296 = vmatprep.subr.mxu0 0.0
      %2297 = vmatpush2.msra.mxu0 0.0
      %2298 = vmatprep.subr.mxu0 0.0
      %2299 = vmatpush2.msra.mxu0 0.0
      %2300 = vmatprep.subr.mxu0 0.0
      %2301 = vmatpush2.msra.mxu0 0.0
      %2302 = vmatprep.subr.mxu0 0.0
      %2303 = vmatpush2.msra.mxu0 0.0
      %2304 = vmatprep.subr.mxu0 0.0
      %2305 = vmatpush2.msra.mxu0 0.0
      %2306 = vmatprep.subr.mxu0 0.0
      %2307 = vmatpush2.msra.mxu0 0.0
      %2308 = vmatprep.subr.mxu0 0.0
      %2309 = vmatpush2.msra.mxu0 0.0
      %2310 = vmatprep.subr.mxu0 0.0
      %2311 = vmatpush2.msra.mxu0 0.0
      %2312 = vmatprep.subr.mxu0 0.0
      %2313 = vmatpush2.msra.mxu0 0.0
      %2314 = vmatprep.subr.mxu0 0.0
      %2315 = vmatpush2.msra.mxu0 0.0
      %2316 = vmatprep.subr.mxu0 0.0
      %2317 = vmatpush2.msra.mxu0 0.0
      %2318 = vmatprep.subr.mxu0 0.0
      %2319 = vmatpush2.msra.mxu0 0.0
      %2320 = vmatprep.subr.mxu0 0.0
      %2321 = vmatpush2.msra.mxu0 0.0
      %2322 = vmatprep.subr.mxu0 0.0
      %2323 = vmatpush2.msra.mxu0 0.0
      %2324 = vmatprep.mubr.f32.mxu0 0.0
      %2325 = vmatmul.mubr.f32.gmra.mxu0 %v2237
      %v2326 = vpop.f32.mrf.mxu0
      %v2327 = vadd.f32 0.0, %v2326
      %v2328 = vpop.f32.mrf.mxu0
      %2329 = vmatprep.mubr.f32.mxu0 0.0
      %2330 = vmatmul.mubr.f32.gmra.mxu0 %v2240
      %v2331 = vpop.f32.mrf.mxu0
      %v2332 = vadd.f32 0.0, %v2331
      %v2333 = vpop.f32.mrf.mxu0
      %2334 = vmatprep.mubr.f32.mxu0 0.0
      %2335 = vmatmul.mubr.f32.gmra.mxu0 %v2243
      %v2336 = vpop.f32.mrf.mxu0
      %v2337 = vadd.f32 0.0, %v2336
      %v2338 = vpop.f32.mrf.mxu0
      %2339 = vmatprep.mubr.f32.mxu0 0.0
      %2340 = vmatmul.mubr.f32.gmra.mxu0 %v2246
      %v2341 = vpop.f32.mrf.mxu0
      %v2342 = vadd.f32 0.0, %v2341
      %v2343 = vpop.f32.mrf.mxu0
      %2344 = vmatprep.mubr.f32.mxu0 0.0
      %2345 = vmatmul.mubr.f32.gmra.mxu0 %v2249
      %v2346 = vpop.f32.mrf.mxu0
      %v2347 = vadd.f32 0.0, %v2346
      %v2348 = vpop.f32.mrf.mxu0
      %2349 = vmatprep.mubr.f32.mxu0 0.0
      %2350 = vmatmul.mubr.f32.gmra.mxu0 %v2252
      %v2351 = vpop.f32.mrf.mxu0
      %v2352 = vadd.f32 0.0, %v2351
      %v2353 = vpop.f32.mrf.mxu0
      %2354 = vmatprep.mubr.f32.mxu0 0.0
      %2355 = vmatmul.mubr.f32.gmra.mxu0 %v2255
      %v2356 = vpop.f32.mrf.mxu0
      %v2357 = vadd.f32 0.0, %v2356
      %v2358 = vpop.f32.mrf.mxu0
      %2359 = vmatprep.mubr.f32.mxu0 0.0
      %2360 = vmatmul.mubr.f32.gmra.mxu0 %v2258
      %v2361 = vpop.f32.mrf.mxu0
      %v2362 = vadd.f32 0.0, %v2361
      %v2363 = vpop.f32.mrf.mxu0
      %2364 = vdwg.mxu0
      %v2365 = vadd.f32 %v2218, %v2327
      %v2366 = vadd.f32 %v2219, %v2332
      %v2367 = vadd.f32 %v2220, %v2337
      %v2368 = vadd.f32 %v2221, %v2342
      %v2369 = vadd.f32 %v2222, %v2347
      %v2370 = vadd.f32 %v2223, %v2352
      %v2371 = vadd.f32 %v2224, %v2357
      %v2372 = vadd.f32 %v2225, %v2362
      %v2373 = vld [vmem:[%s1646 + $0x9] sm:$0xff]
      %v2374 = vld [vmem:[%s1646 + $0x21] sm:$0xff]
      %v2375 = vld [vmem:[%s1646 + $0x39] sm:$0xff]
      %v2376 = vld [vmem:[%s1646 + $0x51] sm:$0xff]
      %v2377 = vld [vmem:[%s1646 + $0x69] sm:$0xff]
      %v2378 = vld [vmem:[%s1646 + $0x81] sm:$0xff]
      %v2379 = vld [vmem:[%s1646 + $0x99] sm:$0xff]
      %v2380 = vld [vmem:[%s1646 + $0xb1] sm:$0xff]
      %s2381 = scalar_lea.vmem %s3, 40
      %v2382 = vld [vmem:[%s2381] sm:$0xff]
      %v2384 = vsel %vm1615, %v2373, 0
      %v2387 = vsel %vm1615, %v2374, 0
      %v2390 = vsel %vm1615, %v2375, 0
      %v2393 = vsel %vm1615, %v2376, 0
      %v2396 = vsel %vm1615, %v2377, 0
      %v2399 = vsel %vm1615, %v2378, 0
      %v2402 = vsel %vm1615, %v2379, 0
      %v2405 = vsel %vm1615, %v2380, 0
      %2407 = vmatprep.subr.mxu0 0.0
      %2408 = vmatpush1.msra.mxu0 0.0
      %2409 = vmatprep.subr.mxu0 0.0
      %2410 = vmatpush1.msra.mxu0 0.0
      %2411 = vmatprep.subr.mxu0 0.0
      %2412 = vmatpush1.msra.mxu0 0.0
      %2413 = vmatprep.subr.mxu0 0.0
      %2414 = vmatpush1.msra.mxu0 0.0
      %2415 = vmatprep.subr.mxu0 0.0
      %2416 = vmatpush1.msra.mxu0 0.0
      %2417 = vmatprep.subr.mxu0 0.0
      %2418 = vmatpush1.msra.mxu0 0.0
      %2419 = vmatprep.subr.mxu0 0.0
      %2420 = vmatpush1.msra.mxu0 0.0
      %2421 = vmatprep.subr.mxu0 0.0
      %2422 = vmatpush1.msra.mxu0 0.0
      %2423 = vmatprep.subr.mxu0 0.0
      %2424 = vmatpush1.msra.mxu0 0.0
      %2425 = vmatprep.subr.mxu0 0.0
      %2426 = vmatpush1.msra.mxu0 0.0
      %2427 = vmatprep.subr.mxu0 0.0
      %2428 = vmatpush1.msra.mxu0 0.0
      %2429 = vmatprep.subr.mxu0 0.0
      %2430 = vmatpush1.msra.mxu0 0.0
      %2431 = vmatprep.subr.mxu0 0.0
      %2432 = vmatpush1.msra.mxu0 0.0
      %2433 = vmatprep.subr.mxu0 0.0
      %2434 = vmatpush1.msra.mxu0 0.0
      %2435 = vmatprep.subr.mxu0 0.0
      %2436 = vmatpush1.msra.mxu0 0.0
      %2437 = vmatprep.subr.mxu0 0.0
      %2438 = vmatpush1.msra.mxu0 %v2382
      %2439 = vmatprep.subr.mxu0 0.0
      %2440 = vmatpush2.msra.mxu0 0.0
      %2441 = vmatprep.subr.mxu0 0.0
      %2442 = vmatpush2.msra.mxu0 0.0
      %2443 = vmatprep.subr.mxu0 0.0
      %2444 = vmatpush2.msra.mxu0 0.0
      %2445 = vmatprep.subr.mxu0 0.0
      %2446 = vmatpush2.msra.mxu0 0.0
      %2447 = vmatprep.subr.mxu0 0.0
      %2448 = vmatpush2.msra.mxu0 0.0
      %2449 = vmatprep.subr.mxu0 0.0
      %2450 = vmatpush2.msra.mxu0 0.0
      %2451 = vmatprep.subr.mxu0 0.0
      %2452 = vmatpush2.msra.mxu0 0.0
      %2453 = vmatprep.subr.mxu0 0.0
      %2454 = vmatpush2.msra.mxu0 0.0
      %2455 = vmatprep.subr.mxu0 0.0
      %2456 = vmatpush2.msra.mxu0 0.0
      %2457 = vmatprep.subr.mxu0 0.0
      %2458 = vmatpush2.msra.mxu0 0.0
      %2459 = vmatprep.subr.mxu0 0.0
      %2460 = vmatpush2.msra.mxu0 0.0
      %2461 = vmatprep.subr.mxu0 0.0
      %2462 = vmatpush2.msra.mxu0 0.0
      %2463 = vmatprep.subr.mxu0 0.0
      %2464 = vmatpush2.msra.mxu0 0.0
      %2465 = vmatprep.subr.mxu0 0.0
      %2466 = vmatpush2.msra.mxu0 0.0
      %2467 = vmatprep.subr.mxu0 0.0
      %2468 = vmatpush2.msra.mxu0 0.0
      %2469 = vmatprep.subr.mxu0 0.0
      %2470 = vmatpush2.msra.mxu0 0.0
      %2471 = vmatprep.mubr.f32.mxu0 0.0
      %2472 = vmatmul.mubr.f32.gmra.mxu0 %v2384
      %v2473 = vpop.f32.mrf.mxu0
      %v2474 = vadd.f32 0.0, %v2473
      %v2475 = vpop.f32.mrf.mxu0
      %2476 = vmatprep.mubr.f32.mxu0 0.0
      %2477 = vmatmul.mubr.f32.gmra.mxu0 %v2387
      %v2478 = vpop.f32.mrf.mxu0
      %v2479 = vadd.f32 0.0, %v2478
      %v2480 = vpop.f32.mrf.mxu0
      %2481 = vmatprep.mubr.f32.mxu0 0.0
      %2482 = vmatmul.mubr.f32.gmra.mxu0 %v2390
      %v2483 = vpop.f32.mrf.mxu0
      %v2484 = vadd.f32 0.0, %v2483
      %v2485 = vpop.f32.mrf.mxu0
      %2486 = vmatprep.mubr.f32.mxu0 0.0
      %2487 = vmatmul.mubr.f32.gmra.mxu0 %v2393
      %v2488 = vpop.f32.mrf.mxu0
      %v2489 = vadd.f32 0.0, %v2488
      %v2490 = vpop.f32.mrf.mxu0
      %2491 = vmatprep.mubr.f32.mxu0 0.0
      %2492 = vmatmul.mubr.f32.gmra.mxu0 %v2396
      %v2493 = vpop.f32.mrf.mxu0
      %v2494 = vadd.f32 0.0, %v2493
      %v2495 = vpop.f32.mrf.mxu0
      %2496 = vmatprep.mubr.f32.mxu0 0.0
      %2497 = vmatmul.mubr.f32.gmra.mxu0 %v2399
      %v2498 = vpop.f32.mrf.mxu0
      %v2499 = vadd.f32 0.0, %v2498
      %v2500 = vpop.f32.mrf.mxu0
      %2501 = vmatprep.mubr.f32.mxu0 0.0
      %2502 = vmatmul.mubr.f32.gmra.mxu0 %v2402
      %v2503 = vpop.f32.mrf.mxu0
      %v2504 = vadd.f32 0.0, %v2503
      %v2505 = vpop.f32.mrf.mxu0
      %2506 = vmatprep.mubr.f32.mxu0 0.0
      %2507 = vmatmul.mubr.f32.gmra.mxu0 %v2405
      %v2508 = vpop.f32.mrf.mxu0
      %v2509 = vadd.f32 0.0, %v2508
      %v2510 = vpop.f32.mrf.mxu0
      %2511 = vdwg.mxu0
      %v2512 = vadd.f32 %v2365, %v2474
      %v2513 = vadd.f32 %v2366, %v2479
      %v2514 = vadd.f32 %v2367, %v2484
      %v2515 = vadd.f32 %v2368, %v2489
      %v2516 = vadd.f32 %v2369, %v2494
      %v2517 = vadd.f32 %v2370, %v2499
      %v2518 = vadd.f32 %v2371, %v2504
      %v2519 = vadd.f32 %v2372, %v2509
      %s2520 = scalar_lea.vmem [#allocation2], 48
      %v2521 = vld [vmem:[%s2520 + $0x7] sm:$0xff]
      %v2522 = vld [vmem:[%s2520 + $0x1f] sm:$0xff]
      %v2523 = vld [vmem:[%s2520 + $0x37] sm:$0xff]
      %v2524 = vld [vmem:[%s2520 + $0x4f] sm:$0xff]
      %v2525 = vld [vmem:[%s2520 + $0x67] sm:$0xff]
      %v2526 = vld [vmem:[%s2520 + $0x7f] sm:$0xff]
      %v2527 = vld [vmem:[%s2520 + $0x97] sm:$0xff]
      %v2528 = vld [vmem:[%s2520 + $0xaf] sm:$0xff]
      %s2529 = scalar_lea.vmem %s3, 48
      %v2530 = vld [vmem:[%s2529] sm:$0xff]
      %v2532 = vsel %vm1615, %v2521, 0
      %v2535 = vsel %vm1615, %v2522, 0
      %v2538 = vsel %vm1615, %v2523, 0
      %v2541 = vsel %vm1615, %v2524, 0
      %v2544 = vsel %vm1615, %v2525, 0
      %v2547 = vsel %vm1615, %v2526, 0
      %v2550 = vsel %vm1615, %v2527, 0
      %v2553 = vsel %vm1615, %v2528, 0
      %2555 = vmatprep.subr.mxu0 0.0
      %2556 = vmatpush1.msra.mxu0 0.0
      %2557 = vmatprep.subr.mxu0 0.0
      %2558 = vmatpush1.msra.mxu0 0.0
      %2559 = vmatprep.subr.mxu0 0.0
      %2560 = vmatpush1.msra.mxu0 0.0
      %2561 = vmatprep.subr.mxu0 0.0
      %2562 = vmatpush1.msra.mxu0 0.0
      %2563 = vmatprep.subr.mxu0 0.0
      %2564 = vmatpush1.msra.mxu0 0.0
      %2565 = vmatprep.subr.mxu0 0.0
      %2566 = vmatpush1.msra.mxu0 0.0
      %2567 = vmatprep.subr.mxu0 0.0
      %2568 = vmatpush1.msra.mxu0 0.0
      %2569 = vmatprep.subr.mxu0 0.0
      %2570 = vmatpush1.msra.mxu0 0.0
      %2571 = vmatprep.subr.mxu0 0.0
      %2572 = vmatpush1.msra.mxu0 0.0
      %2573 = vmatprep.subr.mxu0 0.0
      %2574 = vmatpush1.msra.mxu0 0.0
      %2575 = vmatprep.subr.mxu0 0.0
      %2576 = vmatpush1.msra.mxu0 0.0
      %2577 = vmatprep.subr.mxu0 0.0
      %2578 = vmatpush1.msra.mxu0 0.0
      %2579 = vmatprep.subr.mxu0 0.0
      %2580 = vmatpush1.msra.mxu0 0.0
      %2581 = vmatprep.subr.mxu0 0.0
      %2582 = vmatpush1.msra.mxu0 0.0
      %2583 = vmatprep.subr.mxu0 0.0
      %2584 = vmatpush1.msra.mxu0 0.0
      %2585 = vmatprep.subr.mxu0 0.0
      %2586 = vmatpush1.msra.mxu0 %v2530
      %2587 = vmatprep.subr.mxu0 0.0
      %2588 = vmatpush2.msra.mxu0 0.0
      %2589 = vmatprep.subr.mxu0 0.0
      %2590 = vmatpush2.msra.mxu0 0.0
      %2591 = vmatprep.subr.mxu0 0.0
      %2592 = vmatpush2.msra.mxu0 0.0
      %2593 = vmatprep.subr.mxu0 0.0
      %2594 = vmatpush2.msra.mxu0 0.0
      %2595 = vmatprep.subr.mxu0 0.0
      %2596 = vmatpush2.msra.mxu0 0.0
      %2597 = vmatprep.subr.mxu0 0.0
      %2598 = vmatpush2.msra.mxu0 0.0
      %2599 = vmatprep.subr.mxu0 0.0
      %2600 = vmatpush2.msra.mxu0 0.0
      %2601 = vmatprep.subr.mxu0 0.0
      %2602 = vmatpush2.msra.mxu0 0.0
      %2603 = vmatprep.subr.mxu0 0.0
      %2604 = vmatpush2.msra.mxu0 0.0
      %2605 = vmatprep.subr.mxu0 0.0
      %2606 = vmatpush2.msra.mxu0 0.0
      %2607 = vmatprep.subr.mxu0 0.0
      %2608 = vmatpush2.msra.mxu0 0.0
      %2609 = vmatprep.subr.mxu0 0.0
      %2610 = vmatpush2.msra.mxu0 0.0
      %2611 = vmatprep.subr.mxu0 0.0
      %2612 = vmatpush2.msra.mxu0 0.0
      %2613 = vmatprep.subr.mxu0 0.0
      %2614 = vmatpush2.msra.mxu0 0.0
      %2615 = vmatprep.subr.mxu0 0.0
      %2616 = vmatpush2.msra.mxu0 0.0
      %2617 = vmatprep.subr.mxu0 0.0
      %2618 = vmatpush2.msra.mxu0 0.0
      %2619 = vmatprep.mubr.f32.mxu0 0.0
      %2620 = vmatmul.mubr.f32.gmra.mxu0 %v2532
      %v2621 = vpop.f32.mrf.mxu0
      %v2622 = vadd.f32 0.0, %v2621
      %v2623 = vpop.f32.mrf.mxu0
      %2624 = vmatprep.mubr.f32.mxu0 0.0
      %2625 = vmatmul.mubr.f32.gmra.mxu0 %v2535
      %v2626 = vpop.f32.mrf.mxu0
      %v2627 = vadd.f32 0.0, %v2626
      %v2628 = vpop.f32.mrf.mxu0
      %2629 = vmatprep.mubr.f32.mxu0 0.0
      %2630 = vmatmul.mubr.f32.gmra.mxu0 %v2538
      %v2631 = vpop.f32.mrf.mxu0
      %v2632 = vadd.f32 0.0, %v2631
      %v2633 = vpop.f32.mrf.mxu0
      %2634 = vmatprep.mubr.f32.mxu0 0.0
      %2635 = vmatmul.mubr.f32.gmra.mxu0 %v2541
      %v2636 = vpop.f32.mrf.mxu0
      %v2637 = vadd.f32 0.0, %v2636
      %v2638 = vpop.f32.mrf.mxu0
      %2639 = vmatprep.mubr.f32.mxu0 0.0
      %2640 = vmatmul.mubr.f32.gmra.mxu0 %v2544
      %v2641 = vpop.f32.mrf.mxu0
      %v2642 = vadd.f32 0.0, %v2641
      %v2643 = vpop.f32.mrf.mxu0
      %2644 = vmatprep.mubr.f32.mxu0 0.0
      %2645 = vmatmul.mubr.f32.gmra.mxu0 %v2547
      %v2646 = vpop.f32.mrf.mxu0
      %v2647 = vadd.f32 0.0, %v2646
      %v2648 = vpop.f32.mrf.mxu0
      %2649 = vmatprep.mubr.f32.mxu0 0.0
      %2650 = vmatmul.mubr.f32.gmra.mxu0 %v2550
      %v2651 = vpop.f32.mrf.mxu0
      %v2652 = vadd.f32 0.0, %v2651
      %v2653 = vpop.f32.mrf.mxu0
      %2654 = vmatprep.mubr.f32.mxu0 0.0
      %2655 = vmatmul.mubr.f32.gmra.mxu0 %v2553
      %v2656 = vpop.f32.mrf.mxu0
      %v2657 = vadd.f32 0.0, %v2656
      %v2658 = vpop.f32.mrf.mxu0
      %2659 = vdwg.mxu0
      %v2660 = vadd.f32 %v2512, %v2622
      %v2661 = vadd.f32 %v2513, %v2627
      %v2662 = vadd.f32 %v2514, %v2632
      %v2663 = vadd.f32 %v2515, %v2637
      %v2664 = vadd.f32 %v2516, %v2642
      %v2665 = vadd.f32 %v2517, %v2647
      %v2666 = vadd.f32 %v2518, %v2652
      %v2667 = vadd.f32 %v2519, %v2657
      %v2668 = vld [vmem:[%s2520 + $0x8] sm:$0xff]
      %v2669 = vld [vmem:[%s2520 + $0x20] sm:$0xff]
      %v2670 = vld [vmem:[%s2520 + $0x38] sm:$0xff]
      %v2671 = vld [vmem:[%s2520 + $0x50] sm:$0xff]
      %v2672 = vld [vmem:[%s2520 + $0x68] sm:$0xff]
      %v2673 = vld [vmem:[%s2520 + $0x80] sm:$0xff]
      %v2674 = vld [vmem:[%s2520 + $0x98] sm:$0xff]
      %v2675 = vld [vmem:[%s2520 + $0xb0] sm:$0xff]
      %s2676 = scalar_lea.vmem %s3, 56
      %v2677 = vld [vmem:[%s2676] sm:$0xff]
      %v2679 = vsel %vm1615, %v2668, 0
      %v2682 = vsel %vm1615, %v2669, 0
      %v2685 = vsel %vm1615, %v2670, 0
      %v2688 = vsel %vm1615, %v2671, 0
      %v2691 = vsel %vm1615, %v2672, 0
      %v2694 = vsel %vm1615, %v2673, 0
      %v2697 = vsel %vm1615, %v2674, 0
      %v2700 = vsel %vm1615, %v2675, 0
      %2702 = vmatprep.subr.mxu0 0.0
      %2703 = vmatpush1.msra.mxu0 0.0
      %2704 = vmatprep.subr.mxu0 0.0
      %2705 = vmatpush1.msra.mxu0 0.0
      %2706 = vmatprep.subr.mxu0 0.0
      %2707 = vmatpush1.msra.mxu0 0.0
      %2708 = vmatprep.subr.mxu0 0.0
      %2709 = vmatpush1.msra.mxu0 0.0
      %2710 = vmatprep.subr.mxu0 0.0
      %2711 = vmatpush1.msra.mxu0 0.0
      %2712 = vmatprep.subr.mxu0 0.0
      %2713 = vmatpush1.msra.mxu0 0.0
      %2714 = vmatprep.subr.mxu0 0.0
      %2715 = vmatpush1.msra.mxu0 0.0
      %2716 = vmatprep.subr.mxu0 0.0
      %2717 = vmatpush1.msra.mxu0 0.0
      %2718 = vmatprep.subr.mxu0 0.0
      %2719 = vmatpush1.msra.mxu0 0.0
      %2720 = vmatprep.subr.mxu0 0.0
      %2721 = vmatpush1.msra.mxu0 0.0
      %2722 = vmatprep.subr.mxu0 0.0
      %2723 = vmatpush1.msra.mxu0 0.0
      %2724 = vmatprep.subr.mxu0 0.0
      %2725 = vmatpush1.msra.mxu0 0.0
      %2726 = vmatprep.subr.mxu0 0.0
      %2727 = vmatpush1.msra.mxu0 0.0
      %2728 = vmatprep.subr.mxu0 0.0
      %2729 = vmatpush1.msra.mxu0 0.0
      %2730 = vmatprep.subr.mxu0 0.0
      %2731 = vmatpush1.msra.mxu0 0.0
      %2732 = vmatprep.subr.mxu0 0.0
      %2733 = vmatpush1.msra.mxu0 %v2677
      %2734 = vmatprep.subr.mxu0 0.0
      %2735 = vmatpush2.msra.mxu0 0.0
      %2736 = vmatprep.subr.mxu0 0.0
      %2737 = vmatpush2.msra.mxu0 0.0
      %2738 = vmatprep.subr.mxu0 0.0
      %2739 = vmatpush2.msra.mxu0 0.0
      %2740 = vmatprep.subr.mxu0 0.0
      %2741 = vmatpush2.msra.mxu0 0.0
      %2742 = vmatprep.subr.mxu0 0.0
      %2743 = vmatpush2.msra.mxu0 0.0
      %2744 = vmatprep.subr.mxu0 0.0
      %2745 = vmatpush2.msra.mxu0 0.0
      %2746 = vmatprep.subr.mxu0 0.0
      %2747 = vmatpush2.msra.mxu0 0.0
      %2748 = vmatprep.subr.mxu0 0.0
      %2749 = vmatpush2.msra.mxu0 0.0
      %2750 = vmatprep.subr.mxu0 0.0
      %2751 = vmatpush2.msra.mxu0 0.0
      %2752 = vmatprep.subr.mxu0 0.0
      %2753 = vmatpush2.msra.mxu0 0.0
      %2754 = vmatprep.subr.mxu0 0.0
      %2755 = vmatpush2.msra.mxu0 0.0
      %2756 = vmatprep.subr.mxu0 0.0
      %2757 = vmatpush2.msra.mxu0 0.0
      %2758 = vmatprep.subr.mxu0 0.0
      %2759 = vmatpush2.msra.mxu0 0.0
      %2760 = vmatprep.subr.mxu0 0.0
      %2761 = vmatpush2.msra.mxu0 0.0
      %2762 = vmatprep.subr.mxu0 0.0
      %2763 = vmatpush2.msra.mxu0 0.0
      %2764 = vmatprep.subr.mxu0 0.0
      %2765 = vmatpush2.msra.mxu0 0.0
      %2766 = vmatprep.mubr.f32.mxu0 0.0
      %2767 = vmatmul.mubr.f32.gmra.mxu0 %v2679
      %v2768 = vpop.f32.mrf.mxu0
      %v2769 = vadd.f32 0.0, %v2768
      %v2770 = vpop.f32.mrf.mxu0
      %2771 = vmatprep.mubr.f32.mxu0 0.0
      %2772 = vmatmul.mubr.f32.gmra.mxu0 %v2682
      %v2773 = vpop.f32.mrf.mxu0
      %v2774 = vadd.f32 0.0, %v2773
      %v2775 = vpop.f32.mrf.mxu0
      %2776 = vmatprep.mubr.f32.mxu0 0.0
      %2777 = vmatmul.mubr.f32.gmra.mxu0 %v2685
      %v2778 = vpop.f32.mrf.mxu0
      %v2779 = vadd.f32 0.0, %v2778
      %v2780 = vpop.f32.mrf.mxu0
      %2781 = vmatprep.mubr.f32.mxu0 0.0
      %2782 = vmatmul.mubr.f32.gmra.mxu0 %v2688
      %v2783 = vpop.f32.mrf.mxu0
      %v2784 = vadd.f32 0.0, %v2783
      %v2785 = vpop.f32.mrf.mxu0
      %2786 = vmatprep.mubr.f32.mxu0 0.0
      %2787 = vmatmul.mubr.f32.gmra.mxu0 %v2691
      %v2788 = vpop.f32.mrf.mxu0
      %v2789 = vadd.f32 0.0, %v2788
      %v2790 = vpop.f32.mrf.mxu0
      %2791 = vmatprep.mubr.f32.mxu0 0.0
      %2792 = vmatmul.mubr.f32.gmra.mxu0 %v2694
      %v2793 = vpop.f32.mrf.mxu0
      %v2794 = vadd.f32 0.0, %v2793
      %v2795 = vpop.f32.mrf.mxu0
      %2796 = vmatprep.mubr.f32.mxu0 0.0
      %2797 = vmatmul.mubr.f32.gmra.mxu0 %v2697
      %v2798 = vpop.f32.mrf.mxu0
      %v2799 = vadd.f32 0.0, %v2798
      %v2800 = vpop.f32.mrf.mxu0
      %2801 = vmatprep.mubr.f32.mxu0 0.0
      %2802 = vmatmul.mubr.f32.gmra.mxu0 %v2700
      %v2803 = vpop.f32.mrf.mxu0
      %v2804 = vadd.f32 0.0, %v2803
      %v2805 = vpop.f32.mrf.mxu0
      %2806 = vdwg.mxu0
      %v2807 = vadd.f32 %v2660, %v2769
      %v2808 = vadd.f32 %v2661, %v2774
      %v2809 = vadd.f32 %v2662, %v2779
      %v2810 = vadd.f32 %v2663, %v2784
      %v2811 = vadd.f32 %v2664, %v2789
      %v2812 = vadd.f32 %v2665, %v2794
      %v2813 = vadd.f32 %v2666, %v2799
      %v2814 = vadd.f32 %v2667, %v2804
      %v2815 = vld [vmem:[%s2520 + $0x9] sm:$0xff]
      %v2816 = vld [vmem:[%s2520 + $0x21] sm:$0xff]
      %v2817 = vld [vmem:[%s2520 + $0x39] sm:$0xff]
      %v2818 = vld [vmem:[%s2520 + $0x51] sm:$0xff]
      %v2819 = vld [vmem:[%s2520 + $0x69] sm:$0xff]
      %v2820 = vld [vmem:[%s2520 + $0x81] sm:$0xff]
      %v2821 = vld [vmem:[%s2520 + $0x99] sm:$0xff]
      %v2822 = vld [vmem:[%s2520 + $0xb1] sm:$0xff]
      %s2823 = scalar_lea.vmem %s3, 64
      %v2824 = vld [vmem:[%s2823] sm:$0xff]
      %v2826 = vsel %vm1615, %v2815, 0
      %v2829 = vsel %vm1615, %v2816, 0
      %v2832 = vsel %vm1615, %v2817, 0
      %v2835 = vsel %vm1615, %v2818, 0
      %v2838 = vsel %vm1615, %v2819, 0
      %v2841 = vsel %vm1615, %v2820, 0
      %v2844 = vsel %vm1615, %v2821, 0
      %v2847 = vsel %vm1615, %v2822, 0
      %2849 = vmatprep.subr.mxu0 0.0
      %2850 = vmatpush1.msra.mxu0 0.0
      %2851 = vmatprep.subr.mxu0 0.0
      %2852 = vmatpush1.msra.mxu0 0.0
      %2853 = vmatprep.subr.mxu0 0.0
      %2854 = vmatpush1.msra.mxu0 0.0
      %2855 = vmatprep.subr.mxu0 0.0
      %2856 = vmatpush1.msra.mxu0 0.0
      %2857 = vmatprep.subr.mxu0 0.0
      %2858 = vmatpush1.msra.mxu0 0.0
      %2859 = vmatprep.subr.mxu0 0.0
      %2860 = vmatpush1.msra.mxu0 0.0
      %2861 = vmatprep.subr.mxu0 0.0
      %2862 = vmatpush1.msra.mxu0 0.0
      %2863 = vmatprep.subr.mxu0 0.0
      %2864 = vmatpush1.msra.mxu0 0.0
      %2865 = vmatprep.subr.mxu0 0.0
      %2866 = vmatpush1.msra.mxu0 0.0
      %2867 = vmatprep.subr.mxu0 0.0
      %2868 = vmatpush1.msra.mxu0 0.0
      %2869 = vmatprep.subr.mxu0 0.0
      %2870 = vmatpush1.msra.mxu0 0.0
      %2871 = vmatprep.subr.mxu0 0.0
      %2872 = vmatpush1.msra.mxu0 0.0
      %2873 = vmatprep.subr.mxu0 0.0
      %2874 = vmatpush1.msra.mxu0 0.0
      %2875 = vmatprep.subr.mxu0 0.0
      %2876 = vmatpush1.msra.mxu0 0.0
      %2877 = vmatprep.subr.mxu0 0.0
      %2878 = vmatpush1.msra.mxu0 0.0
      %2879 = vmatprep.subr.mxu0 0.0
      %2880 = vmatpush1.msra.mxu0 %v2824
      %2881 = vmatprep.subr.mxu0 0.0
      %2882 = vmatpush2.msra.mxu0 0.0
      %2883 = vmatprep.subr.mxu0 0.0
      %2884 = vmatpush2.msra.mxu0 0.0
      %2885 = vmatprep.subr.mxu0 0.0
      %2886 = vmatpush2.msra.mxu0 0.0
      %2887 = vmatprep.subr.mxu0 0.0
      %2888 = vmatpush2.msra.mxu0 0.0
      %2889 = vmatprep.subr.mxu0 0.0
      %2890 = vmatpush2.msra.mxu0 0.0
      %2891 = vmatprep.subr.mxu0 0.0
      %2892 = vmatpush2.msra.mxu0 0.0
      %2893 = vmatprep.subr.mxu0 0.0
      %2894 = vmatpush2.msra.mxu0 0.0
      %2895 = vmatprep.subr.mxu0 0.0
      %2896 = vmatpush2.msra.mxu0 0.0
      %2897 = vmatprep.subr.mxu0 0.0
      %2898 = vmatpush2.msra.mxu0 0.0
      %2899 = vmatprep.subr.mxu0 0.0
      %2900 = vmatpush2.msra.mxu0 0.0
      %2901 = vmatprep.subr.mxu0 0.0
      %2902 = vmatpush2.msra.mxu0 0.0
      %2903 = vmatprep.subr.mxu0 0.0
      %2904 = vmatpush2.msra.mxu0 0.0
      %2905 = vmatprep.subr.mxu0 0.0
      %2906 = vmatpush2.msra.mxu0 0.0
      %2907 = vmatprep.subr.mxu0 0.0
      %2908 = vmatpush2.msra.mxu0 0.0
      %2909 = vmatprep.subr.mxu0 0.0
      %2910 = vmatpush2.msra.mxu0 0.0
      %2911 = vmatprep.subr.mxu0 0.0
      %2912 = vmatpush2.msra.mxu0 0.0
      %2913 = vmatprep.mubr.f32.mxu0 0.0
      %2914 = vmatmul.mubr.f32.gmra.mxu0 %v2826
      %v2915 = vpop.f32.mrf.mxu0
      %v2916 = vadd.f32 0.0, %v2915
      %v2917 = vpop.f32.mrf.mxu0
      %2918 = vmatprep.mubr.f32.mxu0 0.0
      %2919 = vmatmul.mubr.f32.gmra.mxu0 %v2829
      %v2920 = vpop.f32.mrf.mxu0
      %v2921 = vadd.f32 0.0, %v2920
      %v2922 = vpop.f32.mrf.mxu0
      %2923 = vmatprep.mubr.f32.mxu0 0.0
      %2924 = vmatmul.mubr.f32.gmra.mxu0 %v2832
      %v2925 = vpop.f32.mrf.mxu0
      %v2926 = vadd.f32 0.0, %v2925
      %v2927 = vpop.f32.mrf.mxu0
      %2928 = vmatprep.mubr.f32.mxu0 0.0
      %2929 = vmatmul.mubr.f32.gmra.mxu0 %v2835
      %v2930 = vpop.f32.mrf.mxu0
      %v2931 = vadd.f32 0.0, %v2930
      %v2932 = vpop.f32.mrf.mxu0
      %2933 = vmatprep.mubr.f32.mxu0 0.0
      %2934 = vmatmul.mubr.f32.gmra.mxu0 %v2838
      %v2935 = vpop.f32.mrf.mxu0
      %v2936 = vadd.f32 0.0, %v2935
      %v2937 = vpop.f32.mrf.mxu0
      %2938 = vmatprep.mubr.f32.mxu0 0.0
      %2939 = vmatmul.mubr.f32.gmra.mxu0 %v2841
      %v2940 = vpop.f32.mrf.mxu0
      %v2941 = vadd.f32 0.0, %v2940
      %v2942 = vpop.f32.mrf.mxu0
      %2943 = vmatprep.mubr.f32.mxu0 0.0
      %2944 = vmatmul.mubr.f32.gmra.mxu0 %v2844
      %v2945 = vpop.f32.mrf.mxu0
      %v2946 = vadd.f32 0.0, %v2945
      %v2947 = vpop.f32.mrf.mxu0
      %2948 = vmatprep.mubr.f32.mxu0 0.0
      %2949 = vmatmul.mubr.f32.gmra.mxu0 %v2847
      %v2950 = vpop.f32.mrf.mxu0
      %v2951 = vadd.f32 0.0, %v2950
      %v2952 = vpop.f32.mrf.mxu0
      %2953 = vdwg.mxu0
      %v2954 = vadd.f32 %v2807, %v2916
      %v2955 = vadd.f32 %v2808, %v2921
      %v2956 = vadd.f32 %v2809, %v2926
      %v2957 = vadd.f32 %v2810, %v2931
      %v2958 = vadd.f32 %v2811, %v2936
      %v2959 = vadd.f32 %v2812, %v2941
      %v2960 = vadd.f32 %v2813, %v2946
      %v2961 = vadd.f32 %v2814, %v2951
      %v2962 = vld [vmem:[%s839] sm:$0xff]
      %v2963 = vld [vmem:[%s839 + $0x10] sm:$0xff]
      %v2964 = vld [vmem:[%s839 + $0x20] sm:$0xff]
      %v2965 = vld [vmem:[%s839 + $0x30] sm:$0xff]
      %v2966 = vld [vmem:[%s839 + $0x40] sm:$0xff]
      %v2967 = vld [vmem:[%s839 + $0x50] sm:$0xff]
      %v2968 = vld [vmem:[%s839 + $0x60] sm:$0xff]
      %v2969 = vld [vmem:[%s839 + $0x70] sm:$0xff]
      %v2970 = vld [vmem:[%s5] sm:$0xf]
      %v2972 = vsel %vm272, %v2962, 0
      %v2975 = vsel %vm272, %v2963, 0
      %v2978 = vsel %vm272, %v2964, 0
      %v2981 = vsel %vm272, %v2965, 0
      %v2984 = vsel %vm272, %v2966, 0
      %v2987 = vsel %vm272, %v2967, 0
      %v2990 = vsel %vm272, %v2968, 0
      %v2993 = vsel %vm272, %v2969, 0
      %v2996 = vsel %vm297, %v2970, 0
      %2998 = vmatprep.subr.mxu0 0.0
      %2999 = vmatpush1.msra.mxu0 0.0
      %3000 = vmatprep.subr.mxu0 0.0
      %3001 = vmatpush1.msra.mxu0 0.0
      %3002 = vmatprep.subr.mxu0 0.0
      %3003 = vmatpush1.msra.mxu0 0.0
      %3004 = vmatprep.subr.mxu0 0.0
      %3005 = vmatpush1.msra.mxu0 0.0
      %3006 = vmatprep.subr.mxu0 0.0
      %3007 = vmatpush1.msra.mxu0 0.0
      %3008 = vmatprep.subr.mxu0 0.0
      %3009 = vmatpush1.msra.mxu0 0.0
      %3010 = vmatprep.subr.mxu0 0.0
      %3011 = vmatpush1.msra.mxu0 0.0
      %3012 = vmatprep.subr.mxu0 0.0
      %3013 = vmatpush1.msra.mxu0 0.0
      %3014 = vmatprep.subr.mxu0 0.0
      %3015 = vmatpush1.msra.mxu0 0.0
      %3016 = vmatprep.subr.mxu0 0.0
      %3017 = vmatpush1.msra.mxu0 0.0
      %3018 = vmatprep.subr.mxu0 0.0
      %3019 = vmatpush1.msra.mxu0 0.0
      %3020 = vmatprep.subr.mxu0 0.0
      %3021 = vmatpush1.msra.mxu0 0.0
      %3022 = vmatprep.subr.mxu0 0.0
      %3023 = vmatpush1.msra.mxu0 0.0
      %3024 = vmatprep.subr.mxu0 0.0
      %3025 = vmatpush1.msra.mxu0 0.0
      %3026 = vmatprep.subr.mxu0 0.0
      %3027 = vmatpush1.msra.mxu0 0.0
      %3028 = vmatprep.subr.mxu0 0.0
      %3029 = vmatpush1.msra.mxu0 %v2996
      %3030 = vmatprep.subr.mxu0 0.0
      %3031 = vmatpush2.msra.mxu0 0.0
      %3032 = vmatprep.subr.mxu0 0.0
      %3033 = vmatpush2.msra.mxu0 0.0
      %3034 = vmatprep.subr.mxu0 0.0
      %3035 = vmatpush2.msra.mxu0 0.0
      %3036 = vmatprep.subr.mxu0 0.0
      %3037 = vmatpush2.msra.mxu0 0.0
      %3038 = vmatprep.subr.mxu0 0.0
      %3039 = vmatpush2.msra.mxu0 0.0
      %3040 = vmatprep.subr.mxu0 0.0
      %3041 = vmatpush2.msra.mxu0 0.0
      %3042 = vmatprep.subr.mxu0 0.0
      %3043 = vmatpush2.msra.mxu0 0.0
      %3044 = vmatprep.subr.mxu0 0.0
      %3045 = vmatpush2.msra.mxu0 0.0
      %3046 = vmatprep.subr.mxu0 0.0
      %3047 = vmatpush2.msra.mxu0 0.0
      %3048 = vmatprep.subr.mxu0 0.0
      %3049 = vmatpush2.msra.mxu0 0.0
      %3050 = vmatprep.subr.mxu0 0.0
      %3051 = vmatpush2.msra.mxu0 0.0
      %3052 = vmatprep.subr.mxu0 0.0
      %3053 = vmatpush2.msra.mxu0 0.0
      %3054 = vmatprep.subr.mxu0 0.0
      %3055 = vmatpush2.msra.mxu0 0.0
      %3056 = vmatprep.subr.mxu0 0.0
      %3057 = vmatpush2.msra.mxu0 0.0
      %3058 = vmatprep.subr.mxu0 0.0
      %3059 = vmatpush2.msra.mxu0 0.0
      %3060 = vmatprep.subr.mxu0 0.0
      %3061 = vmatpush2.msra.mxu0 0.0
      %3062 = vmatprep.mubr.f32.mxu0 0.0
      %3063 = vmatmul.mubr.f32.gmra.mxu0 %v2972
      %v3064 = vpop.f32.mrf.mxu0
      %v3065 = vadd.f32 0.0, %v3064
      %v3066 = vpop.f32.mrf.mxu0
      %3067 = vmatprep.mubr.f32.mxu0 0.0
      %3068 = vmatmul.mubr.f32.gmra.mxu0 %v2975
      %v3069 = vpop.f32.mrf.mxu0
      %v3070 = vadd.f32 0.0, %v3069
      %v3071 = vpop.f32.mrf.mxu0
      %3072 = vmatprep.mubr.f32.mxu0 0.0
      %3073 = vmatmul.mubr.f32.gmra.mxu0 %v2978
      %v3074 = vpop.f32.mrf.mxu0
      %v3075 = vadd.f32 0.0, %v3074
      %v3076 = vpop.f32.mrf.mxu0
      %3077 = vmatprep.mubr.f32.mxu0 0.0
      %3078 = vmatmul.mubr.f32.gmra.mxu0 %v2981
      %v3079 = vpop.f32.mrf.mxu0
      %v3080 = vadd.f32 0.0, %v3079
      %v3081 = vpop.f32.mrf.mxu0
      %3082 = vmatprep.mubr.f32.mxu0 0.0
      %3083 = vmatmul.mubr.f32.gmra.mxu0 %v2984
      %v3084 = vpop.f32.mrf.mxu0
      %v3085 = vadd.f32 0.0, %v3084
      %v3086 = vpop.f32.mrf.mxu0
      %3087 = vmatprep.mubr.f32.mxu0 0.0
      %3088 = vmatmul.mubr.f32.gmra.mxu0 %v2987
      %v3089 = vpop.f32.mrf.mxu0
      %v3090 = vadd.f32 0.0, %v3089
      %v3091 = vpop.f32.mrf.mxu0
      %3092 = vmatprep.mubr.f32.mxu0 0.0
      %3093 = vmatmul.mubr.f32.gmra.mxu0 %v2990
      %v3094 = vpop.f32.mrf.mxu0
      %v3095 = vadd.f32 0.0, %v3094
      %v3096 = vpop.f32.mrf.mxu0
      %3097 = vmatprep.mubr.f32.mxu0 0.0
      %3098 = vmatmul.mubr.f32.gmra.mxu0 %v2993
      %v3099 = vpop.f32.mrf.mxu0
      %v3100 = vadd.f32 0.0, %v3099
      %v3101 = vpop.f32.mrf.mxu0
      %3102 = vdwg.mxu0
      %v3103 = vadd.f32 %v2954, %v3065
      %v3104 = vadd.f32 %v2955, %v3070
      %v3105 = vadd.f32 %v2956, %v3075
      %v3106 = vadd.f32 %v2957, %v3080
      %v3107 = vadd.f32 %v2958, %v3085
      %v3108 = vadd.f32 %v2959, %v3090
      %v3109 = vadd.f32 %v2960, %v3095
      %v3110 = vadd.f32 %v2961, %v3100
      %v3111 = vld [vmem:[%s4] sm:$0x1]
      %v3113 = vlaneseq
      %v3114 = vshrl.u32 %v3113, 7
      %v3115 = vsub.s32 0, %v3114
      %v3116 = vrot.slane %v3111, %v3115
      %v3118 = vadd.f32 %v3103, %v3116
      %v3119 = vadd.f32 %v3104, %v3116
      %v3120 = vadd.f32 %v3105, %v3116
      %v3121 = vadd.f32 %v3106, %v3116
      %v3122 = vadd.f32 %v3107, %v3116
      %v3123 = vadd.f32 %v3108, %v3116
      %v3124 = vadd.f32 %v3109, %v3116
      %v3125 = vadd.f32 %v3110, %v3116
      %v3126 = vmax.f32 %v3118, 0.0
      %v3127 = vmax.f32 %v3119, 0.0
      %v3128 = vmax.f32 %v3120, 0.0
      %v3129 = vmax.f32 %v3121, 0.0
      %v3130 = vmax.f32 %v3122, 0.0
      %v3131 = vmax.f32 %v3123, 0.0
      %v3132 = vmax.f32 %v3124, 0.0
      %v3133 = vmax.f32 %v3125, 0.0
      %3134 = vst.msk [vmem:[%s251] sm:$0xff] %vm1615, %v3126
      %3135 = vst.msk [vmem:[%s251 + $0x8] sm:$0xff] %vm1615, %v3127
      %3136 = vst.msk [vmem:[%s251 + $0x10] sm:$0xff] %vm1615, %v3128
      %3137 = vst.msk [vmem:[%s251 + $0x18] sm:$0xff] %vm1615, %v3129
      %3138 = vst.msk [vmem:[%s251 + $0x20] sm:$0xff] %vm1615, %v3130
      %3139 = vst.msk [vmem:[%s251 + $0x28] sm:$0xff] %vm1615, %v3131
      %3140 = vst.msk [vmem:[%s251 + $0x30] sm:$0xff] %vm1615, %v3132
      %3141 = vst.msk [vmem:[%s251 + $0x38] sm:$0xff] %vm1615, %v3133
      %p3142 = scmp.lt.s32.totalorder %s17, 1
      %s3143 = scalar_select %p3142, %s17, 1
      %s3144 = smul.addr %s3143, 8
      %s3145 = smul.addr %s3144, 8
      %s3146 = scalar_lea.vmem %s6, %s3145
      // Predicated region
      $region45: #{basic_block_forward.1} parent=43 // pred_check
        %p3147 = pneg %p166
      $region46: #{basic_block_forward.1} parent=43 // pred_check_branch
        %3149 = sbr.rel (%p3147) target = $region48
      $region47: #{basic_block_forward.1} parent=43 // pred_region
        _
      $region48: #{basic_block_forward.1} parent=43 // pred_fallthru
        _
    $region44: #{basic_block_forward.1} parent=5 // pred_fallthru
      _
    %p3150 = scmp.le.s32.totalorder 2, %s12
    // Predicated region
    $region49: #{basic_block_forward.1} parent=5 // pred_check
      %p3151 = pneg %p3150
    $region50: #{basic_block_forward.1} parent=5 // pred_check_branch
      %3153 = sbr.rel (%p3151) target = $region52
    $region51: #{basic_block_forward.1} parent=5 // pred_region
      %s3154 = ssub.s32 %s12, 2
      // Predicated region
      $region53: #{basic_block_forward.1} parent=51 // pred_check
        %p3155 = pneg %p172
      $region54: #{basic_block_forward.1} parent=51 // pred_check_branch
        %3157 = sbr.rel (%p3155) target = $region56
      $region55: #{basic_block_forward.1} parent=51 // pred_region
        %p3158 = scmp.lt.s32.totalorder %s18, 1
        %s3159 = scalar_select %p3158, %s18, 1
        %s3160 = smul.addr %s3159, 8
        %s3161 = smul.addr %s3160, 8
        %s3162 = scalar_lea.vmem %s6, %s3161
      $region56: #{basic_block_forward.1} parent=51 // pred_fallthru
        _
    $region52: #{basic_block_forward.1} parent=5 // pred_fallthru
      _
  $region6: #{basic_block_forward.1} parent=0 // loop_footer
    %s16 = sadd.s32 1, %s12
  $region7: #{basic_block_forward.1} parent=0 // loop_footer_branch
    %11 = sbr.rel target = $region3
  $region8: #{basic_block_forward.1} parent=0 // loop_exit
    _

</llo_original>
